<compile_context>
chip_gen: v6e
topology: v6e:2x2x1
jax: 0.10.0
libtpu: 0.0.40
codegen_flags: <defaults>
</compile_context>

<pallas_src>
import math
from functools import partial

import jax
import jax.numpy as jnp
from jax import lax
from jax.experimental import pallas as pl
from jax.experimental.pallas import tpu as pltpu

_VMEM_LIMIT = 32 * 1024 * 1024     # explicit scoped-VMEM limit (raises v5e's 16 MiB default,
                                   # stays well inside v7x's 64 MiB physical VMEM)
_NEG = -1e30                       # large-but-finite mask fill (no -inf -> no NaNs)


# ----------------------------- small helpers -----------------------------

def _round_up(x, m):
    return ((x + m - 1) // m) * m


def _pick_tile(dim, target, align):
    """Largest `align`-multiple divisor of `dim` that is <= target; falls back to the
    full dim (single block) otherwise.  Lane dims that matter for perf (Dff, vocab) are
    padded to 128-multiples at prep time, so the fallback only triggers at toy shapes."""
    if dim <= target or dim % align != 0:
        return dim
    t = (min(target, dim) // align) * align
    while t >= align:
        if dim % t == 0:
            return t
        t -= align
    return dim


def _attn_lane_cfg(D, n_head):
    """Return (lane_block, heads_per_block) for the attention grid.

    Prefers a 128-multiple lane block (packing heads when head_dim < 128) so stores are
    lane-dense and BlockSpec lane offsets are legal; falls back to the full model dim
    (all heads in one block) when D itself is not 128-aligned (toy shapes)."""
    hd = D // n_head
    if hd % 128 == 0:
        return hd, 1
    if D % 128 == 0 and 128 % hd == 0:
        return 128, 128 // hd
    return D, n_head


# ----------------------------- tiled linear (y = x @ w + b) -----------------------------

def _linear_kernel(x_ref, w_ref, b_ref, o_ref, acc_ref, *, activation):
    @pl.when(pl.program_id(2) == 0)
    def _():
        acc_ref[...] = jnp.zeros_like(acc_ref)

    acc_ref[...] += jnp.dot(x_ref[...].astype(jnp.bfloat16),      # bf16 MXU operands,
                            w_ref[...].astype(jnp.bfloat16),      # f32 accumulation
                            preferred_element_type=jnp.float32)

    @pl.when(pl.program_id(2) == pl.num_programs(2) - 1)
    def _():
        y = acc_ref[...] + b_ref[...]
        if activation == "relu":
            y = jnp.maximum(y, 0.0)
        o_ref[...] = y.astype(o_ref.dtype)


def linear(x, w, b, activation=None, out_dtype=jnp.float32, tm=512, tn=512, tk=512):
    """x: [M, K], w: [K, N] (bf16), b: [N] f32 -> [M, N] out_dtype."""
    M, K = x.shape
    N = w.shape[1]
    tm = _pick_tile(M, tm, 8)
    tn = _pick_tile(N, tn, 128)
    tk = _pick_tile(K, tk, 128)
    grid = (M // tm, N // tn, K // tk)
    return pl.pallas_call(
        partial(_linear_kernel, activation=activation),
        out_shape=jax.ShapeDtypeStruct((M, N), out_dtype),
        grid=grid,
        in_specs=[
            pl.BlockSpec((tm, tk), lambda i, j, k: (i, k)),
            pl.BlockSpec((tk, tn), lambda i, j, k: (k, j)),
            pl.BlockSpec((1, tn), lambda i, j, k: (0, j)),
        ],
        out_specs=pl.BlockSpec((tm, tn), lambda i, j, k: (i, j)),
        scratch_shapes=[pltpu.VMEM((tm, tn), jnp.float32)],
        compiler_params=pltpu.CompilerParams(
            dimension_semantics=("parallel", "parallel", "arbitrary"),
            vmem_limit_bytes=_VMEM_LIMIT),
    )(x, w, b.reshape(1, N))


# ----------------------------- fused FFN: relu(x @ w1 + b1) @ w2 + b2 -----------------------------

def _ffn_kernel(x_ref, w1_ref, b1_ref, w2_ref, b2_ref, o_ref, acc_ref):
    @pl.when(pl.program_id(1) == 0)
    def _():
        acc_ref[...] = jnp.zeros_like(acc_ref)

    h = jnp.dot(x_ref[...].astype(jnp.bfloat16), w1_ref[...].astype(jnp.bfloat16),
                preferred_element_type=jnp.float32) + b1_ref[...]
    h = jnp.maximum(h, 0.0).astype(jnp.bfloat16)                  # hidden tile stays in VMEM
    acc_ref[...] += jnp.dot(h, w2_ref[...].astype(jnp.bfloat16),
                            preferred_element_type=jnp.float32)

    @pl.when(pl.program_id(1) == pl.num_programs(1) - 1)
    def _():
        o_ref[...] = (acc_ref[...] + b2_ref[...]).astype(o_ref.dtype)


def feed_forward(x2d, p, out_dtype=jnp.bfloat16, tm=512, tf=512):
    """Fused w1 + ReLU + w2; accumulates over Dff tiles so the [M, Dff] hidden never hits HBM."""
    M, D = x2d.shape
    Dff = p["w1"].shape[1]
    tm = _pick_tile(M, tm, 8)
    tf = _pick_tile(Dff, tf, 128)
    grid = (M // tm, Dff // tf)
    return pl.pallas_call(
        _ffn_kernel,
        out_shape=jax.ShapeDtypeStruct((M, D), out_dtype),
        grid=grid,
        in_specs=[
            pl.BlockSpec((tm, D), lambda i, f: (i, 0)),
            pl.BlockSpec((D, tf), lambda i, f: (0, f)),
            pl.BlockSpec((1, tf), lambda i, f: (0, f)),
            pl.BlockSpec((tf, D), lambda i, f: (f, 0)),
            pl.BlockSpec((1, D), lambda i, f: (0, 0)),
        ],
        out_specs=pl.BlockSpec((tm, D), lambda i, f: (i, 0)),
        scratch_shapes=[pltpu.VMEM((tm, D), jnp.float32)],
        compiler_params=pltpu.CompilerParams(
            dimension_semantics=("parallel", "arbitrary"),
            vmem_limit_bytes=_VMEM_LIMIT),
    )(x2d, p["w1"], p["b1"].reshape(1, Dff), p["w2"], p["b2"].reshape(1, D))


# ----------------------------- fused residual-add + layer norm -----------------------------

def _add_ln_kernel(x_ref, r_ref, g_ref, b_ref, o_ref, *, eps):
    x = x_ref[...].astype(jnp.float32) + r_ref[...].astype(jnp.float32)
    mu = jnp.mean(x, axis=-1, keepdims=True)
    var = jnp.mean(jnp.square(x - mu), axis=-1, keepdims=True)
    y = (x - mu) * lax.rsqrt(var + eps)
    o_ref[...] = (y * g_ref[...] + b_ref[...]).astype(o_ref.dtype)


def add_layer_norm(x, resid, gamma, beta, eps=1e-5, tm=512):
    """LayerNorm(x + resid); x [M,D] f32 residual stream, resid [M,D] (bf16 branch ok)."""
    M, D = x.shape
    tm = _pick_tile(M, tm, 8)
    grid = (M // tm,)
    return pl.pallas_call(
        partial(_add_ln_kernel, eps=eps),
        out_shape=jax.ShapeDtypeStruct((M, D), jnp.float32),
        grid=grid,
        in_specs=[
            pl.BlockSpec((tm, D), lambda i: (i, 0)),
            pl.BlockSpec((tm, D), lambda i: (i, 0)),
            pl.BlockSpec((1, D), lambda i: (0, 0)),
            pl.BlockSpec((1, D), lambda i: (0, 0)),
        ],
        out_specs=pl.BlockSpec((tm, D), lambda i: (i, 0)),
        compiler_params=pltpu.CompilerParams(dimension_semantics=("parallel",),
                                             vmem_limit_bytes=_VMEM_LIMIT),
    )(x, resid, gamma.reshape(1, D), beta.reshape(1, D))


# ----------------------------- flash-style masked multi-head attention -----------------------------
# grid = (batch, head-group, Sq tile, Sk tile); online softmax over Sk tiles.
# Head split is done by the DMA via lane-offset BlockSpecs; 1/sqrt(hd) is folded into wq.

def _attn_kernel(bias_ref, q_ref, k_ref, v_ref, o_ref, m_sc, l_sc, acc_sc, *, hpb, hd, causal):
    j = pl.program_id(3)

    @pl.when(j == 0)
    def _():
        m_sc[...] = jnp.full_like(m_sc, _NEG)
        l_sc[...] = jnp.zeros_like(l_sc)
        acc_sc[...] = jnp.zeros_like(acc_sc)

    q = q_ref[0]                      # [tq, lb]  bf16 (scale pre-folded into wq)
    k = k_ref[0]                      # [tk, lb]  bf16
    v = v_ref[0]                      # [tk, lb]  bf16
    bias = bias_ref[0]                # [1,  tk]  f32 additive key-padding bias (0 / -1e30)
    tq, tk = q.shape[0], k.shape[0]

    if causal:
        q_ids = lax.broadcasted_iota(jnp.int32, (tq, tk), 0) + pl.program_id(2) * tq
        k_ids = lax.broadcasted_iota(jnp.int32, (tq, tk), 1) + j * tk
        keep = k_ids <= q_ids

    for h in range(hpb):              # heads packed into this lane block (1-4)
        sl = slice(h * hd, (h + 1) * hd)
        s = lax.dot_general(q[:, sl], k[:, sl], (((1,), (1,)), ((), ())),
                            preferred_element_type=jnp.float32)
        s = s + bias
        if causal:
            s = jnp.where(keep, s, _NEG)
        m_prev = m_sc[:, h:h + 1]
        m_new = jnp.maximum(m_prev, jnp.max(s, axis=-1, keepdims=True))
        alpha = jnp.exp(m_prev - m_new)
        p = jnp.exp(s - m_new)
        l_sc[:, h:h + 1] = alpha * l_sc[:, h:h + 1] + jnp.sum(p, axis=-1, keepdims=True)
        acc_sc[:, sl] = alpha * acc_sc[:, sl] + jnp.dot(
            p.astype(jnp.bfloat16), v[:, sl], preferred_element_type=jnp.float32)
        m_sc[:, h:h + 1] = m_new

    @pl.when(j == pl.num_programs(3) - 1)
    def _():
        for h in range(hpb):
            sl = slice(h * hd, (h + 1) * hd)
            acc_sc[:, sl] = acc_sc[:, sl] * pl.reciprocal(l_sc[:, h:h + 1], approx=True)
        o_ref[0] = acc_sc[...].astype(o_ref.dtype)   # single lane-dense store


def attention(q_src, k_src, v_src, key_bias, *, D, n_head, q_off, k_off, v_off, causal,
              out_dtype=jnp.bfloat16, tq=256, tk=512):
    """q_src/k_src/v_src may be fused activation buffers; *_off are lane offsets (elements)."""
    B, Sq, _ = q_src.shape
    Sk = k_src.shape[1]
    hd = D // n_head
    lb, hpb = _attn_lane_cfg(D, n_head)
    G = D // lb
    qb, kb, vb = q_off // lb, k_off // lb, v_off // lb
    tq = _pick_tile(Sq, tq, 8)
    tk = _pick_tile(Sk, tk, 128)
    grid = (B, G, Sq // tq, Sk // tk)
    return pl.pallas_call(
        partial(_attn_kernel, hpb=hpb, hd=hd, causal=causal),
        out_shape=jax.ShapeDtypeStruct((B, Sq, D), out_dtype),
        grid=grid,
        in_specs=[
            pl.BlockSpec((1, 1, tk), lambda b, g, i, j: (b, 0, j)),
            pl.BlockSpec((1, tq, lb), lambda b, g, i, j: (b, i, qb + g)),
            pl.BlockSpec((1, tk, lb), lambda b, g, i, j: (b, j, kb + g)),
            pl.BlockSpec((1, tk, lb), lambda b, g, i, j: (b, j, vb + g)),
        ],
        out_specs=pl.BlockSpec((1, tq, lb), lambda b, g, i, j: (b, i, g)),
        scratch_shapes=[pltpu.VMEM((tq, hpb), jnp.float32),    # running max (per head)
                        pltpu.VMEM((tq, hpb), jnp.float32),    # running denom
                        pltpu.VMEM((tq, lb), jnp.float32)],    # running numerator
        compiler_params=pltpu.CompilerParams(
            dimension_semantics=("parallel", "parallel", "parallel", "arbitrary"),
            vmem_limit_bytes=_VMEM_LIMIT),
    )(key_bias, q_src, k_src, v_src)


# ----------------------------- model glue -----------------------------

def multi_head_attention(x_q, x_kv, p, key_bias, n_head, causal, self_attention):
    B, Sq, D = x_q.shape
    Sk = x_kv.shape[1]
    lb, _ = _attn_lane_cfg(D, n_head)
    fused_lanes_ok = (lb % 128 == 0)   # lane-offset BlockSpecs into the fused buffer need 128-aligned blocks

    if self_attention:
        qkv = linear(x_q.reshape(B * Sq, D), p["w_qkv"], p["b_qkv"],
                     out_dtype=jnp.bfloat16).reshape(B, Sq, 3 * D)
        if fused_lanes_ok:
            q_src = k_src = v_src = qkv
            q_off, k_off, v_off = 0, D, 2 * D
        else:  # toy shapes (D not 128-aligned): split once in XLA
            q_src, k_src, v_src = qkv[..., :D], qkv[..., D:2 * D], qkv[..., 2 * D:]
            q_off = k_off = v_off = 0
    else:
        q_src = linear(x_q.reshape(B * Sq, D), p["wq"], p["bq"],
                       out_dtype=jnp.bfloat16).reshape(B, Sq, D)
        kv = linear(x_kv.reshape(B * Sk, D), p["w_kv"], p["b_kv"],
                    out_dtype=jnp.bfloat16).reshape(B, Sk, 2 * D)
        q_off = 0
        if fused_lanes_ok:
            k_src = v_src = kv
            k_off, v_off = 0, D
        else:
            k_src, v_src = kv[..., :D], kv[..., D:]
            k_off = v_off = 0

    o = attention(q_src, k_src, v_src, key_bias, D=D, n_head=n_head,
                  q_off=q_off, k_off=k_off, v_off=v_off, causal=causal)
    return linear(o.reshape(B * Sq, D), p["wo"], p["bo"],
                  out_dtype=jnp.bfloat16).reshape(B, Sq, D)


def encoder_layer(x, p, src_key_bias, n_head):
    B, S, D = x.shape
    a = multi_head_attention(x, x, p["attn"], src_key_bias, n_head,
                             causal=False, self_attention=True)
    x2 = add_layer_norm(x.reshape(B * S, D), a.reshape(B * S, D), p["ln1_g"], p["ln1_b"])
    f = feed_forward(x2, p["ffn"])
    x3 = add_layer_norm(x2, f, p["ln2_g"], p["ln2_b"])
    return x3.reshape(B, S, D)


def decoder_layer(y, enc_out, p, trg_key_bias, src_key_bias, n_head):
    B, St, D = y.shape
    a = multi_head_attention(y, y, p["self_attn"], trg_key_bias, n_head,
                             causal=True, self_attention=True)
    y2 = add_layer_norm(y.reshape(B * St, D), a.reshape(B * St, D), p["ln1_g"], p["ln1_b"])
    c = multi_head_attention(y2.reshape(B, St, D), enc_out, p["cross_attn"], src_key_bias,
                             n_head, causal=False, self_attention=False)
    y3 = add_layer_norm(y2, c.reshape(B * St, D), p["ln2_g"], p["ln2_b"])
    f = feed_forward(y3, p["ffn"])
    y4 = add_layer_norm(y3, f, p["ln3_g"], p["ln3_b"])
    return y4.reshape(B, St, D)


def transformer_forward(params, src, trg, padding_idx, n_head, trg_vocab):
    B, Ss = src.shape
    _, St = trg.shape
    D = params["src_emb"].shape[1]

    # key-padding masks as additive biases [B,1,S] (no [B,1,Sq,Sk] broadcast in HBM);
    # the causal part of trg_mask is generated in-kernel.
    src_key_bias = jnp.where(src != padding_idx, 0.0, _NEG).astype(jnp.float32)[:, None, :]
    trg_key_bias = jnp.where(trg != padding_idx, 0.0, _NEG).astype(jnp.float32)[:, None, :]

    pe = params["pe"]
    src_e = jnp.take(params["src_emb"], src, axis=0) + pe[:Ss][None]   # sqrt(D) folded into table
    trg_e = jnp.take(params["trg_emb"], trg, axis=0) + pe[:St][None]
    # TODO(synk): dropout layers are treated as identity (inference-mode / p effectively 0).

    x = src_e
    for lp in params["enc_layers"]:
        x = encoder_layer(x, lp, src_key_bias, n_head)
    enc_out = x

    y = trg_e
    for lp in params["dec_layers"]:
        y = decoder_layer(y, enc_out, lp, trg_key_bias, src_key_bias, n_head)

    out = linear(y.reshape(B * St, D), params["fc_w"], params["fc_b"],
                 out_dtype=jnp.float32)            # vocab padded to 128-multiple lanes
    if out.shape[1] != trg_vocab:
        out = out[:, :trg_vocab]
    return out.reshape(B, St, trg_vocab)


# ----------------------------- parameter init + device prep -----------------------------

def _dense(key, din, dout, scale=0.02):
    w = jax.random.normal(key, (din, dout), dtype=jnp.float32) * scale
    b = jnp.zeros((dout,), dtype=jnp.float32)
    return w, b


def _mha_params(key, D):
    ks = jax.random.split(key, 4)
    wq, bq = _dense(ks[0], D, D)
    wk, bk = _dense(ks[1], D, D)
    wv, bv = _dense(ks[2], D, D)
    wo, bo = _dense(ks[3], D, D)
    return dict(wq=wq, bq=bq, wk=wk, bk=bk, wv=wv, bv=bv, wo=wo, bo=bo)


def _ffn_params(key, D, Dff):
    k1, k2 = jax.random.split(key)
    w1, b1 = _dense(k1, D, Dff)
    w2, b2 = _dense(k2, Dff, D)
    return dict(w1=w1, b1=b1, w2=w2, b2=b2)


def _enc_layer_params(key, D, Dff):
    k1, k2 = jax.random.split(key)
    return dict(attn=_mha_params(k1, D), ffn=_ffn_params(k2, D, Dff),
                ln1_g=jnp.ones((D,), jnp.float32), ln1_b=jnp.zeros((D,), jnp.float32),
                ln2_g=jnp.ones((D,), jnp.float32), ln2_b=jnp.zeros((D,), jnp.float32))


def _dec_layer_params(key, D, Dff):
    k1, k2, k3 = jax.random.split(key, 3)
    return dict(self_attn=_mha_params(k1, D), cross_attn=_mha_params(k2, D),
                ffn=_ffn_params(k3, D, Dff),
                ln1_g=jnp.ones((D,), jnp.float32), ln1_b=jnp.zeros((D,), jnp.float32),
                ln2_g=jnp.ones((D,), jnp.float32), ln2_b=jnp.zeros((D,), jnp.float32),
                ln3_g=jnp.ones((D,), jnp.float32), ln3_b=jnp.zeros((D,), jnp.float32))


def _positional_encoding(max_len, D):
    pos = jnp.arange(max_len, dtype=jnp.float32)[:, None]
    i = jnp.arange(0, D, 2, dtype=jnp.float32)
    div = jnp.exp(-math.log(10000.0) * i / D)
    pe = jnp.zeros((max_len, D), dtype=jnp.float32)
    pe = pe.at[:, 0::2].set(jnp.sin(pos * div))
    pe = pe.at[:, 1::2].set(jnp.cos(pos * div))
    return pe


def init_params(key, src_vocab, trg_vocab, D, Dff, n_enc, n_dec, max_len):
    keys = jax.random.split(key, 4 + n_enc + n_dec)
    src_emb = jax.random.normal(keys[0], (src_vocab, D), dtype=jnp.float32) * 0.02
    trg_emb = jax.random.normal(keys[1], (trg_vocab, D), dtype=jnp.float32) * 0.02
    fc_w, fc_b = _dense(keys[2], D, trg_vocab)
    enc_layers = [_enc_layer_params(keys[4 + i], D, Dff) for i in range(n_enc)]
    dec_layers = [_dec_layer_params(keys[4 + n_enc + i], D, Dff) for i in range(n_dec)]
    return dict(src_emb=src_emb, trg_emb=trg_emb, pe=_positional_encoding(max_len, D),
                enc_layers=enc_layers, dec_layers=dec_layers, fc_w=fc_w, fc_b=fc_b)


def prepare_params(raw, n_head):
    """Fold scales, fuse QKV/KV weights, pad lane dims to 128 multiples, cast weights to bf16."""
    D = raw["src_emb"].shape[1]
    hd = D // n_head
    scale = 1.0 / math.sqrt(hd)

    def prep_self_mha(p):
        return dict(
            w_qkv=jnp.concatenate([p["wq"] * scale, p["wk"], p["wv"]], axis=1).astype(jnp.bfloat16),
            b_qkv=jnp.concatenate([p["bq"] * scale, p["bk"], p["bv"]]).astype(jnp.float32),
            wo=p["wo"].astype(jnp.bfloat16), bo=p["bo"].astype(jnp.float32))

    def prep_cross_mha(p):
        return dict(
            wq=(p["wq"] * scale).astype(jnp.bfloat16), bq=(p["bq"] * scale).astype(jnp.float32),
            w_kv=jnp.concatenate([p["wk"], p["wv"]], axis=1).astype(jnp.bfloat16),
            b_kv=jnp.concatenate([p["bk"], p["bv"]]).astype(jnp.float32),
            wo=p["wo"].astype(jnp.bfloat16), bo=p["bo"].astype(jnp.float32))

    def prep_ffn(p):
        Dff = p["w1"].shape[1]
        pad = _round_up(Dff, 128) - Dff        # zero-padded Dff -> semantics preserved
        return dict(
            w1=jnp.pad(p["w1"], ((0, 0), (0, pad))).astype(jnp.bfloat16),
            b1=jnp.pad(p["b1"], (0, pad)).astype(jnp.float32),
            w2=jnp.pad(p["w2"], ((0, pad), (0, 0))).astype(jnp.bfloat16),
            b2=p["b2"].astype(jnp.float32))

    def prep_enc(p):
        return dict(attn=prep_self_mha(p["attn"]), ffn=prep_ffn(p["ffn"]),
                    ln1_g=p["ln1_g"], ln1_b=p["ln1_b"], ln2_g=p["ln2_g"], ln2_b=p["ln2_b"])

    def prep_dec(p):
        return dict(self_attn=prep_self_mha(p["self_attn"]),
                    cross_attn=prep_cross_mha(p["cross_attn"]), ffn=prep_ffn(p["ffn"]),
                    ln1_g=p["ln1_g"], ln1_b=p["ln1_b"], ln2_g=p["ln2_g"], ln2_b=p["ln2_b"],
                    ln3_g=p["ln3_g"], ln3_b=p["ln3_b"])

    V = raw["fc_w"].shape[1]
    vpad = _round_up(V, 128) - V               # lane-dense vocab projection
    return dict(
        src_emb=raw["src_emb"] * math.sqrt(D),  # sqrt(D) folded into the table
        trg_emb=raw["trg_emb"] * math.sqrt(D),
        pe=raw["pe"],
        enc_layers=[prep_enc(p) for p in raw["enc_layers"]],
        dec_layers=[prep_dec(p) for p in raw["dec_layers"]],
        fc_w=jnp.pad(raw["fc_w"], ((0, 0), (0, vpad))).astype(jnp.bfloat16),
        fc_b=jnp.pad(raw["fc_b"], (0, vpad)).astype(jnp.float32))


# ----------------------------- main -----------------------------

if __name__ == "__main__":
    SRC_VOCAB, TRG_VOCAB = 32, 32
    EMB_DIM, N_HEAD = 32, 4
    N_ENC, N_DEC = 2, 2
    DIM_FF = 64
    MAX_LEN = 16
    B, SRC_LEN, TRG_LEN = 2, 8, 8
    PADDING_IDX = 0

    key = jax.random.PRNGKey(0)
    kp, ks, kt = jax.random.split(key, 3)
    raw = init_params(kp, SRC_VOCAB, TRG_VOCAB, EMB_DIM, DIM_FF, N_ENC, N_DEC, MAX_LEN)
    params = prepare_params(raw, N_HEAD)

    src = jax.random.randint(ks, (B, SRC_LEN), 1, SRC_VOCAB, dtype=jnp.int32)
    trg = jax.random.randint(kt, (B, TRG_LEN), 1, TRG_VOCAB, dtype=jnp.int32)
    # add some padding at the tail of batch element 1 to exercise the masks
    src = src.at[1, -2:].set(PADDING_IDX)
    trg = trg.at[1, -2:].set(PADDING_IDX)

    fwd = jax.jit(partial(transformer_forward, padding_idx=PADDING_IDX,
                          n_head=N_HEAD, trg_vocab=TRG_VOCAB))
    out = fwd(params, src, trg)
    out = jax.block_until_ready(out)
    assert out.shape == (B, TRG_LEN, TRG_VOCAB)
    assert bool(jnp.all(jnp.isfinite(out)))
    print("KERNEL_OK")
</pallas_src>

<mosaic_0001>
module attributes {stable_mosaic.version = 11 : i64} {
  func.func @_linear_kernel(%arg0: i32, %arg1: i32, %arg2: i32, %arg3: memref<16x32xf32, #tpu.memory_space<vmem>>, %arg4: memref<32x96xbf16, #tpu.memory_space<vmem>>, %arg5: memref<1x96xf32, #tpu.memory_space<vmem>>, %arg6: memref<16x96xbf16, #tpu.memory_space<vmem>>, %arg7: memref<16x96xf32, #tpu.memory_space<vmem>>) attributes {dimension_semantics = [#tpu.dimension_semantics<parallel>, #tpu.dimension_semantics<parallel>, #tpu.dimension_semantics<arbitrary>], iteration_bounds = array<i64: 1, 1, 1>, scalar_prefetch = 0 : i64, scratch_operands = 1 : i64, tpu.core_type = #tpu.core_type<tc>, window_params = [{transform_indices = @transform_0, window_bounds = array<i64: 16, 32>}, {transform_indices = @transform_1, window_bounds = array<i64: 32, 96>}, {transform_indices = @transform_2, window_bounds = array<i64: 1, 96>}, {transform_indices = @transform_3, window_bounds = array<i64: 16, 96>}]} {
    %c0_i32 = arith.constant 0 : i32
    %0 = arith.cmpi eq, %arg2, %c0_i32 : i32
    %1 = arith.extui %0 : i1 to i32
    %c0_i32_0 = arith.constant 0 : i32
    %2 = arith.cmpi ne, %1, %c0_i32_0 : i32
    scf.if %2 {
      %cst_10 = arith.constant 0.000000e+00 : f32
      %13 = vector.broadcast %cst_10 : f32 to vector<16x96xf32>
      %c0_11 = arith.constant 0 : index
      %c0_12 = arith.constant 0 : index
      %14 = vector.load %arg7[%c0_11, %c0_12] : memref<16x96xf32, #tpu.memory_space<vmem>>, vector<16x96xf32>
      tpu.vector_store %arg7[%c0_11, %c0_12], %13 {strides = array<i32>} : memref<16x96xf32, #tpu.memory_space<vmem>>, vector<16x96xf32>,
    } else {
    }
    %c0 = arith.constant 0 : index
    %c0_1 = arith.constant 0 : index
    %3 = vector.load %arg7[%c0, %c0_1] : memref<16x96xf32, #tpu.memory_space<vmem>>, vector<16x96xf32>
    %c0_2 = arith.constant 0 : index
    %c0_3 = arith.constant 0 : index
    %4 = vector.load %arg3[%c0_2, %c0_3] : memref<16x32xf32, #tpu.memory_space<vmem>>, vector<16x32xf32>
    %5 = arith.truncf %4 : vector<16x32xf32> to vector<16x32xbf16>
    %c0_4 = arith.constant 0 : index
    %c0_5 = arith.constant 0 : index
    %6 = vector.load %arg4[%c0_4, %c0_5] : memref<32x96xbf16, #tpu.memory_space<vmem>>, vector<32x96xbf16>
    %cst = arith.constant dense<0.000000e+00> : vector<16x96xf32>
    %7 = tpu.matmul %5, %6, %cst {dimension_numbers = #tpu.dot_dimension_numbers<[1], [0], [0], [1], [0, 0, 1, 1], [], []>} : vector<16x32xbf16>, vector<32x96xbf16>, vector<16x96xf32> -> vector<16x96xf32>
    %8 = arith.addf %3, %7 : vector<16x96xf32>
    %c0_6 = arith.constant 0 : index
    %c0_7 = arith.constant 0 : index
    %9 = vector.load %arg7[%c0_6, %c0_7] : memref<16x96xf32, #tpu.memory_space<vmem>>, vector<16x96xf32>
    tpu.vector_store %arg7[%c0_6, %c0_7], %8 {strides = array<i32>} : memref<16x96xf32, #tpu.memory_space<vmem>>, vector<16x96xf32>,
    %c0_i32_8 = arith.constant 0 : i32
    %10 = arith.cmpi eq, %arg2, %c0_i32_8 : i32
    %11 = arith.extui %10 : i1 to i32
    %c0_i32_9 = arith.constant 0 : i32
    %12 = arith.cmpi ne, %11, %c0_i32_9 : i32
    scf.if %12 {
      %c0_10 = arith.constant 0 : index
      %c0_11 = arith.constant 0 : index
      %13 = vector.load %arg7[%c0_10, %c0_11] : memref<16x96xf32, #tpu.memory_space<vmem>>, vector<16x96xf32>
      %c0_12 = arith.constant 0 : index
      %c0_13 = arith.constant 0 : index
      %14 = vector.load %arg5[%c0_12, %c0_13] : memref<1x96xf32, #tpu.memory_space<vmem>>, vector<1x96xf32>
      %15 = vector.broadcast %14 : vector<1x96xf32> to vector<16x96xf32>
      %16 = arith.addf %13, %15 : vector<16x96xf32>
      %17 = arith.truncf %16 : vector<16x96xf32> to vector<16x96xbf16>
      %c0_14 = arith.constant 0 : index
      %c0_15 = arith.constant 0 : index
      %18 = vector.load %arg6[%c0_14, %c0_15] : memref<16x96xbf16, #tpu.memory_space<vmem>>, vector<16x96xbf16>
      tpu.vector_store %arg6[%c0_14, %c0_15], %17 {strides = array<i32>} : memref<16x96xbf16, #tpu.memory_space<vmem>>, vector<16x96xbf16>,
    } else {
    }
    return
  }
  func.func @transform_0(%arg0: i32, %arg1: i32, %arg2: i32) -> (i32, i32) {
    %c0_i32 = arith.constant 0 : i32
    return %arg0, %arg2 : i32, i32
  }
  func.func @transform_1(%arg0: i32, %arg1: i32, %arg2: i32) -> (i32, i32) {
    %c0_i32 = arith.constant 0 : i32
    return %arg2, %arg1 : i32, i32
  }
  func.func @transform_2(%arg0: i32, %arg1: i32, %arg2: i32) -> (i32, i32) {
    %c0_i32 = arith.constant 0 : i32
    %c0_i32_0 = arith.constant 0 : i32
    return %c0_i32, %arg1 : i32, i32
  }
  func.func @transform_3(%arg0: i32, %arg1: i32, %arg2: i32) -> (i32, i32) {
    %c0_i32 = arith.constant 0 : i32
    return %arg0, %arg1 : i32, i32
  }
}

module attributes {stable_mosaic.version = 11 : i64} {
  func.func @_attn_kernel(%arg0: i32, %arg1: i32, %arg2: i32, %arg3: i32, %arg4: memref<1x1x8xf32, #tpu.memory_space<vmem>>, %arg5: memref<1x8x32xbf16, #tpu.memory_space<vmem>>, %arg6: memref<1x8x32xbf16, #tpu.memory_space<vmem>>, %arg7: memref<1x8x32xbf16, #tpu.memory_space<vmem>>, %arg8: memref<1x8x32xbf16, #tpu.memory_space<vmem>>, %arg9: memref<8x4xf32, #tpu.memory_space<vmem>>, %arg10: memref<8x4xf32, #tpu.memory_space<vmem>>, %arg11: memref<8x32xf32, #tpu.memory_space<vmem>>) attributes {dimension_semantics = [#tpu.dimension_semantics<parallel>, #tpu.dimension_semantics<parallel>, #tpu.dimension_semantics<parallel>, #tpu.dimension_semantics<arbitrary>], iteration_bounds = array<i64: 2, 1, 1, 1>, scalar_prefetch = 0 : i64, scratch_operands = 3 : i64, tpu.core_type = #tpu.core_type<tc>, window_params = [{transform_indices = @transform_0, window_bounds = array<i64: 1, 1, 8>}, {transform_indices = @transform_1, window_bounds = array<i64: 1, 8, 32>}, {transform_indices = @transform_2, window_bounds = array<i64: 1, 8, 32>}, {transform_indices = @transform_3, window_bounds = array<i64: 1, 8, 32>}, {transform_indices = @transform_4, window_bounds = array<i64: 1, 8, 32>}]} {
    %c0_i32 = arith.constant 0 : i32
    %0 = arith.cmpi eq, %arg3, %c0_i32 : i32
    %1 = arith.extui %0 : i1 to i32
    %c0_i32_0 = arith.constant 0 : i32
    %2 = arith.cmpi ne, %1, %c0_i32_0 : i32
    scf.if %2 {
      %cst_71 = arith.constant -1.000000e+30 : f32
      %130 = vector.broadcast %cst_71 : f32 to vector<8x4xf32>
      %c0_72 = arith.constant 0 : index
      %c0_73 = arith.constant 0 : index
      %131 = vector.load %arg9[%c0_72, %c0_73] : memref<8x4xf32, #tpu.memory_space<vmem>>, vector<8x4xf32>
      tpu.vector_store %arg9[%c0_72, %c0_73], %130 {strides = array<i32>} : memref<8x4xf32, #tpu.memory_space<vmem>>, vector<8x4xf32>,
      %cst_74 = arith.constant 0.000000e+00 : f32
      %132 = vector.broadcast %cst_74 : f32 to vector<8x4xf32>
      %c0_75 = arith.constant 0 : index
      %c0_76 = arith.constant 0 : index
      %133 = vector.load %arg10[%c0_75, %c0_76] : memref<8x4xf32, #tpu.memory_space<vmem>>, vector<8x4xf32>
      tpu.vector_store %arg10[%c0_75, %c0_76], %132 {strides = array<i32>} : memref<8x4xf32, #tpu.memory_space<vmem>>, vector<8x4xf32>,
      %cst_77 = arith.constant 0.000000e+00 : f32
      %134 = vector.broadcast %cst_77 : f32 to vector<8x32xf32>
      %c0_78 = arith.constant 0 : index
      %c0_79 = arith.constant 0 : index
      %135 = vector.load %arg11[%c0_78, %c0_79] : memref<8x32xf32, #tpu.memory_space<vmem>>, vector<8x32xf32>
      tpu.vector_store %arg11[%c0_78, %c0_79], %134 {strides = array<i32>} : memref<8x32xf32, #tpu.memory_space<vmem>>, vector<8x32xf32>,
    } else {
    }
    %c0 = arith.constant 0 : index
    %c0_1 = arith.constant 0 : index
    %c0_2 = arith.constant 0 : index
    %3 = vector.load %arg5[%c0, %c0_1, %c0_2] : memref<1x8x32xbf16, #tpu.memory_space<vmem>>, vector<1x8x32xbf16>
    %4 = vector.shape_cast %3 : vector<1x8x32xbf16> to vector<8x32xbf16>
    %c0_3 = arith.constant 0 : index
    %c0_4 = arith.constant 0 : index
    %c0_5 = arith.constant 0 : index
    %5 = vector.load %arg6[%c0_3, %c0_4, %c0_5] : memref<1x8x32xbf16, #tpu.memory_space<vmem>>, vector<1x8x32xbf16>
    %6 = vector.shape_cast %5 : vector<1x8x32xbf16> to vector<8x32xbf16>
    %c0_6 = arith.constant 0 : index
    %c0_7 = arith.constant 0 : index
    %c0_8 = arith.constant 0 : index
    %7 = vector.load %arg7[%c0_6, %c0_7, %c0_8] : memref<1x8x32xbf16, #tpu.memory_space<vmem>>, vector<1x8x32xbf16>
    %8 = vector.shape_cast %7 : vector<1x8x32xbf16> to vector<8x32xbf16>
    %c0_9 = arith.constant 0 : index
    %c0_10 = arith.constant 0 : index
    %c0_11 = arith.constant 0 : index
    %9 = vector.load %arg4[%c0_9, %c0_10, %c0_11] : memref<1x1x8xf32, #tpu.memory_space<vmem>>, vector<1x1x8xf32>
    %10 = vector.shape_cast %9 : vector<1x1x8xf32> to vector<1x8xf32>
    %11 = vector.extract_strided_slice %4 {offsets = [0, 0], sizes = [8, 8], strides = [1, 1]} : vector<8x32xbf16> to vector<8x8xbf16>
    %12 = vector.extract_strided_slice %6 {offsets = [0, 0], sizes = [8, 8], strides = [1, 1]} : vector<8x32xbf16> to vector<8x8xbf16>
    %cst = arith.constant dense<0.000000e+00> : vector<8x8xf32>
    %13 = tpu.matmul %11, %12, %cst {dimension_numbers = #tpu.dot_dimension_numbers<[1], [1], [0], [0], [0, 0, 1, 0], [], []>} : vector<8x8xbf16>, vector<8x8xbf16>, vector<8x8xf32> -> vector<8x8xf32>
    %14 = vector.broadcast %10 : vector<1x8xf32> to vector<8x8xf32>
    %15 = arith.addf %13, %14 : vector<8x8xf32>
    %c0_12 = arith.constant 0 : index
    %c0_13 = arith.constant 0 : index
    %16 = vector.load %arg9[%c0_12, %c0_13] : memref<8x4xf32, #tpu.memory_space<vmem>>, vector<8x1xf32>
    %cst_14 = arith.constant dense<0xFF800000> : vector<8xf32>
    %17 = vector.multi_reduction <maximumf>, %15, %cst_14 [1] : vector<8x8xf32> to vector<8xf32>
    %18 = vector.shape_cast %17 : vector<8xf32> to vector<8x1xf32>
    %19 = arith.maximumf %16, %18 : vector<8x1xf32>
    %20 = arith.subf %16, %19 : vector<8x1xf32>
    %21 = math.exp %20 : vector<8x1xf32>
    %22 = vector.broadcast %19 : vector<8x1xf32> to vector<8x8xf32>
    %23 = arith.subf %15, %22 : vector<8x8xf32>
    %24 = math.exp %23 : vector<8x8xf32>
    %c0_15 = arith.constant 0 : index
    %c0_16 = arith.constant 0 : index
    %25 = vector.load %arg10[%c0_15, %c0_16] : memref<8x4xf32, #tpu.memory_space<vmem>>, vector<8x1xf32>
    %26 = arith.mulf %21, %25 : vector<8x1xf32>
    %cst_17 = arith.constant dense<0.000000e+00> : vector<8xf32>
    %27 = vector.multi_reduction <add>, %24, %cst_17 [1] : vector<8x8xf32> to vector<8xf32>
    %28 = vector.shape_cast %27 : vector<8xf32> to vector<8x1xf32>
    %29 = arith.addf %26, %28 : vector<8x1xf32>
    %c0_18 = arith.constant 0 : index
    %c0_19 = arith.constant 0 : index
    %30 = vector.load %arg10[%c0_18, %c0_19] : memref<8x4xf32, #tpu.memory_space<vmem>>, vector<8x1xf32>
    tpu.vector_store %arg10[%c0_18, %c0_19], %29 {strides = array<i32>} : memref<8x4xf32, #tpu.memory_space<vmem>>, vector<8x1xf32>,
    %c0_20 = arith.constant 0 : index
    %c0_21 = arith.constant 0 : index
    %31 = vector.load %arg11[%c0_20, %c0_21] : memref<8x32xf32, #tpu.memory_space<vmem>>, vector<8x8xf32>
    %32 = vector.broadcast %21 : vector<8x1xf32> to vector<8x8xf32>
    %33 = arith.mulf %32, %31 : vector<8x8xf32>
    %34 = arith.truncf %24 : vector<8x8xf32> to vector<8x8xbf16>
    %35 = vector.extract_strided_slice %8 {offsets = [0, 0], sizes = [8, 8], strides = [1, 1]} : vector<8x32xbf16> to vector<8x8xbf16>
    %cst_22 = arith.constant dense<0.000000e+00> : vector<8x8xf32>
    %36 = tpu.matmul %34, %35, %cst_22 {dimension_numbers = #tpu.dot_dimension_numbers<[1], [0], [0], [1], [0, 0, 1, 1], [], []>} : vector<8x8xbf16>, vector<8x8xbf16>, vector<8x8xf32> -> vector<8x8xf32>
    %37 = arith.addf %33, %36 : vector<8x8xf32>
    %c0_23 = arith.constant 0 : index
    %c0_24 = arith.constant 0 : index
    %38 = vector.load %arg11[%c0_23, %c0_24] : memref<8x32xf32, #tpu.memory_space<vmem>>, vector<8x8xf32>
    tpu.vector_store %arg11[%c0_23, %c0_24], %37 {strides = array<i32>} : memref<8x32xf32, #tpu.memory_space<vmem>>, vector<8x8xf32>,
    %c0_25 = arith.constant 0 : index
    %c0_26 = arith.constant 0 : index
    %39 = vector.load %arg9[%c0_25, %c0_26] : memref<8x4xf32, #tpu.memory_space<vmem>>, vector<8x1xf32>
    tpu.vector_store %arg9[%c0_25, %c0_26], %19 {strides = array<i32>} : memref<8x4xf32, #tpu.memory_space<vmem>>, vector<8x1xf32>,
    %40 = vector.extract_strided_slice %4 {offsets = [0, 8], sizes = [8, 8], strides = [1, 1]} : vector<8x32xbf16> to vector<8x8xbf16>
    %41 = vector.extract_strided_slice %6 {offsets = [0, 8], sizes = [8, 8], strides = [1, 1]} : vector<8x32xbf16> to vector<8x8xbf16>
    %cst_27 = arith.constant dense<0.000000e+00> : vector<8x8xf32>
    %42 = tpu.matmul %40, %41, %cst_27 {dimension_numbers = #tpu.dot_dimension_numbers<[1], [1], [0], [0], [0, 0, 1, 0], [], []>} : vector<8x8xbf16>, vector<8x8xbf16>, vector<8x8xf32> -> vector<8x8xf32>
    %43 = vector.broadcast %10 : vector<1x8xf32> to vector<8x8xf32>
    %44 = arith.addf %42, %43 : vector<8x8xf32>
    %c0_28 = arith.constant 0 : index
    %c1 = arith.constant 1 : index
    %45 = vector.load %arg9[%c0_28, %c1] : memref<8x4xf32, #tpu.memory_space<vmem>>, vector<8x1xf32>
    %cst_29 = arith.constant dense<0xFF800000> : vector<8xf32>
    %46 = vector.multi_reduction <maximumf>, %44, %cst_29 [1] : vector<8x8xf32> to vector<8xf32>
    %47 = vector.shape_cast %46 : vector<8xf32> to vector<8x1xf32>
    %48 = arith.maximumf %45, %47 : vector<8x1xf32>
    %49 = arith.subf %45, %48 : vector<8x1xf32>
    %50 = math.exp %49 : vector<8x1xf32>
    %51 = vector.broadcast %48 : vector<8x1xf32> to vector<8x8xf32>
    %52 = arith.subf %44, %51 : vector<8x8xf32>
    %53 = math.exp %52 : vector<8x8xf32>
    %c0_30 = arith.constant 0 : index
    %c1_31 = arith.constant 1 : index
    %54 = vector.load %arg10[%c0_30, %c1_31] : memref<8x4xf32, #tpu.memory_space<vmem>>, vector<8x1xf32>
    %55 = arith.mulf %50, %54 : vector<8x1xf32>
    %cst_32 = arith.constant dense<0.000000e+00> : vector<8xf32>
    %56 = vector.multi_reduction <add>, %53, %cst_32 [1] : vector<8x8xf32> to vector<8xf32>
    %57 = vector.shape_cast %56 : vector<8xf32> to vector<8x1xf32>
    %58 = arith.addf %55, %57 : vector<8x1xf32>
    %c0_33 = arith.constant 0 : index
    %c1_34 = arith.constant 1 : index
    %59 = vector.load %arg10[%c0_33, %c1_34] : memref<8x4xf32, #tpu.memory_space<vmem>>, vector<8x1xf32>
    tpu.vector_store %arg10[%c0_33, %c1_34], %58 {strides = array<i32>} : memref<8x4xf32, #tpu.memory_space<vmem>>, vector<8x1xf32>,
    %c0_35 = arith.constant 0 : index
    %c8 = arith.constant 8 : index
    %60 = vector.load %arg11[%c0_35, %c8] : memref<8x32xf32, #tpu.memory_space<vmem>>, vector<8x8xf32>
    %61 = vector.broadcast %50 : vector<8x1xf32> to vector<8x8xf32>
    %62 = arith.mulf %61, %60 : vector<8x8xf32>
    %63 = arith.truncf %53 : vector<8x8xf32> to vector<8x8xbf16>
    %64 = vector.extract_strided_slice %8 {offsets = [0, 8], sizes = [8, 8], strides = [1, 1]} : vector<8x32xbf16> to vector<8x8xbf16>
    %cst_36 = arith.constant dense<0.000000e+00> : vector<8x8xf32>
    %65 = tpu.matmul %63, %64, %cst_36 {dimension_numbers = #tpu.dot_dimension_numbers<[1], [0], [0], [1], [0, 0, 1, 1], [], []>} : vector<8x8xbf16>, vector<8x8xbf16>, vector<8x8xf32> -> vector<8x8xf32>
    %66 = arith.addf %62, %65 : vector<8x8xf32>
    %c0_37 = arith.constant 0 : index
    %c8_38 = arith.constant 8 : index
    %67 = vector.load %arg11[%c0_37, %c8_38] : memref<8x32xf32, #tpu.memory_space<vmem>>, vector<8x8xf32>
    tpu.vector_store %arg11[%c0_37, %c8_38], %66 {strides = array<i32>} : memref<8x32xf32, #tpu.memory_space<vmem>>, vector<8x8xf32>,
    %c0_39 = arith.constant 0 : index
    %c1_40 = arith.constant 1 : index
    %68 = vector.load %arg9[%c0_39, %c1_40] : memref<8x4xf32, #tpu.memory_space<vmem>>, vector<8x1xf32>
    tpu.vector_store %arg9[%c0_39, %c1_40], %48 {strides = array<i32>} : memref<8x4xf32, #tpu.memory_space<vmem>>, vector<8x1xf32>,
    %69 = vector.extract_strided_slice %4 {offsets = [0, 16], sizes = [8, 8], strides = [1, 1]} : vector<8x32xbf16> to vector<8x8xbf16>
    %70 = vector.extract_strided_slice %6 {offsets = [0, 16], sizes = [8, 8], strides = [1, 1]} : vector<8x32xbf16> to vector<8x8xbf16>
    %cst_41 = arith.constant dense<0.000000e+00> : vector<8x8xf32>
    %71 = tpu.matmul %69, %70, %cst_41 {dimension_numbers = #tpu.dot_dimension_numbers<[1], [1], [0], [0], [0, 0, 1, 0], [], []>} : vector<8x8xbf16>, vector<8x8xbf16>, vector<8x8xf32> -> vector<8x8xf32>
    %72 = vector.broadcast %10 : vector<1x8xf32> to vector<8x8xf32>
    %73 = arith.addf %71, %72 : vector<8x8xf32>
    %c0_42 = arith.constant 0 : index
    %c2 = arith.constant 2 : index
    %74 = vector.load %arg9[%c0_42, %c2] : memref<8x4xf32, #tpu.memory_space<vmem>>, vector<8x1xf32>
    %cst_43 = arith.constant dense<0xFF800000> : vector<8xf32>
    %75 = vector.multi_reduction <maximumf>, %73, %cst_43 [1] : vector<8x8xf32> to vector<8xf32>
    %76 = vector.shape_cast %75 : vector<8xf32> to vector<8x1xf32>
    %77 = arith.maximumf %74, %76 : vector<8x1xf32>
    %78 = arith.subf %74, %77 : vector<8x1xf32>
    %79 = math.exp %78 : vector<8x1xf32>
    %80 = vector.broadcast %77 : vector<8x1xf32> to vector<8x8xf32>
    %81 = arith.subf %73, %80 : vector<8x8xf32>
    %82 = math.exp %81 : vector<8x8xf32>
    %c0_44 = arith.constant 0 : index
    %c2_45 = arith.constant 2 : index
    %83 = vector.load %arg10[%c0_44, %c2_45] : memref<8x4xf32, #tpu.memory_space<vmem>>, vector<8x1xf32>
    %84 = arith.mulf %79, %83 : vector<8x1xf32>
    %cst_46 = arith.constant dense<0.000000e+00> : vector<8xf32>
    %85 = vector.multi_reduction <add>, %82, %cst_46 [1] : vector<8x8xf32> to vector<8xf32>
    %86 = vector.shape_cast %85 : vector<8xf32> to vector<8x1xf32>
    %87 = arith.addf %84, %86 : vector<8x1xf32>
    %c0_47 = arith.constant 0 : index
    %c2_48 = arith.constant 2 : index
    %88 = vector.load %arg10[%c0_47, %c2_48] : memref<8x4xf32, #tpu.memory_space<vmem>>, vector<8x1xf32>
    tpu.vector_store %arg10[%c0_47, %c2_48], %87 {strides = array<i32>} : memref<8x4xf32, #tpu.memory_space<vmem>>, vector<8x1xf32>,
    %c0_49 = arith.constant 0 : index
    %c16 = arith.constant 16 : index
    %89 = vector.load %arg11[%c0_49, %c16] : memref<8x32xf32, #tpu.memory_space<vmem>>, vector<8x8xf32>
    %90 = vector.broadcast %79 : vector<8x1xf32> to vector<8x8xf32>
    %91 = arith.mulf %90, %89 : vector<8x8xf32>
    %92 = arith.truncf %82 : vector<8x8xf32> to vector<8x8xbf16>
    %93 = vector.extract_strided_slice %8 {offsets = [0, 16], sizes = [8, 8], strides = [1, 1]} : vector<8x32xbf16> to vector<8x8xbf16>
    %cst_50 = arith.constant dense<0.000000e+00> : vector<8x8xf32>
    %94 = tpu.matmul %92, %93, %cst_50 {dimension_numbers = #tpu.dot_dimension_numbers<[1], [0], [0], [1], [0, 0, 1, 1], [], []>} : vector<8x8xbf16>, vector<8x8xbf16>, vector<8x8xf32> -> vector<8x8xf32>
    %95 = arith.addf %91, %94 : vector<8x8xf32>
    %c0_51 = arith.constant 0 : index
    %c16_52 = arith.constant 16 : index
    %96 = vector.load %arg11[%c0_51, %c16_52] : memref<8x32xf32, #tpu.memory_space<vmem>>, vector<8x8xf32>
    tpu.vector_store %arg11[%c0_51, %c16_52], %95 {strides = array<i32>} : memref<8x32xf32, #tpu.memory_space<vmem>>, vector<8x8xf32>,
    %c0_53 = arith.constant 0 : index
    %c2_54 = arith.constant 2 : index
    %97 = vector.load %arg9[%c0_53, %c2_54] : memref<8x4xf32, #tpu.memory_space<vmem>>, vector<8x1xf32>
    tpu.vector_store %arg9[%c0_53, %c2_54], %77 {strides = array<i32>} : memref<8x4xf32, #tpu.memory_space<vmem>>, vector<8x1xf32>,
    %98 = vector.extract_strided_slice %4 {offsets = [0, 24], sizes = [8, 8], strides = [1, 1]} : vector<8x32xbf16> to vector<8x8xbf16>
    %99 = vector.extract_strided_slice %6 {offsets = [0, 24], sizes = [8, 8], strides = [1, 1]} : vector<8x32xbf16> to vector<8x8xbf16>
    %cst_55 = arith.constant dense<0.000000e+00> : vector<8x8xf32>
    %100 = tpu.matmul %98, %99, %cst_55 {dimension_numbers = #tpu.dot_dimension_numbers<[1], [1], [0], [0], [0, 0, 1, 0], [], []>} : vector<8x8xbf16>, vector<8x8xbf16>, vector<8x8xf32> -> vector<8x8xf32>
    %101 = vector.broadcast %10 : vector<1x8xf32> to vector<8x8xf32>
    %102 = arith.addf %100, %101 : vector<8x8xf32>
    %c0_56 = arith.constant 0 : index
    %c3 = arith.constant 3 : index
    %103 = vector.load %arg9[%c0_56, %c3] : memref<8x4xf32, #tpu.memory_space<vmem>>, vector<8x1xf32>
    %cst_57 = arith.constant dense<0xFF800000> : vector<8xf32>
    %104 = vector.multi_reduction <maximumf>, %102, %cst_57 [1] : vector<8x8xf32> to vector<8xf32>
    %105 = vector.shape_cast %104 : vector<8xf32> to vector<8x1xf32>
    %106 = arith.maximumf %103, %105 : vector<8x1xf32>
    %107 = arith.subf %103, %106 : vector<8x1xf32>
    %108 = math.exp %107 : vector<8x1xf32>
    %109 = vector.broadcast %106 : vector<8x1xf32> to vector<8x8xf32>
    %110 = arith.subf %102, %109 : vector<8x8xf32>
    %111 = math.exp %110 : vector<8x8xf32>
    %c0_58 = arith.constant 0 : index
    %c3_59 = arith.constant 3 : index
    %112 = vector.load %arg10[%c0_58, %c3_59] : memref<8x4xf32, #tpu.memory_space<vmem>>, vector<8x1xf32>
    %113 = arith.mulf %108, %112 : vector<8x1xf32>
    %cst_60 = arith.constant dense<0.000000e+00> : vector<8xf32>
    %114 = vector.multi_reduction <add>, %111, %cst_60 [1] : vector<8x8xf32> to vector<8xf32>
    %115 = vector.shape_cast %114 : vector<8xf32> to vector<8x1xf32>
    %116 = arith.addf %113, %115 : vector<8x1xf32>
    %c0_61 = arith.constant 0 : index
    %c3_62 = arith.constant 3 : index
    %117 = vector.load %arg10[%c0_61, %c3_62] : memref<8x4xf32, #tpu.memory_space<vmem>>, vector<8x1xf32>
    tpu.vector_store %arg10[%c0_61, %c3_62], %116 {strides = array<i32>} : memref<8x4xf32, #tpu.memory_space<vmem>>, vector<8x1xf32>,
    %c0_63 = arith.constant 0 : index
    %c24 = arith.constant 24 : index
    %118 = vector.load %arg11[%c0_63, %c24] : memref<8x32xf32, #tpu.memory_space<vmem>>, vector<8x8xf32>
    %119 = vector.broadcast %108 : vector<8x1xf32> to vector<8x8xf32>
    %120 = arith.mulf %119, %118 : vector<8x8xf32>
    %121 = arith.truncf %111 : vector<8x8xf32> to vector<8x8xbf16>
    %122 = vector.extract_strided_slice %8 {offsets = [0, 24], sizes = [8, 8], strides = [1, 1]} : vector<8x32xbf16> to vector<8x8xbf16>
    %cst_64 = arith.constant dense<0.000000e+00> : vector<8x8xf32>
    %123 = tpu.matmul %121, %122, %cst_64 {dimension_numbers = #tpu.dot_dimension_numbers<[1], [0], [0], [1], [0, 0, 1, 1], [], []>} : vector<8x8xbf16>, vector<8x8xbf16>, vector<8x8xf32> -> vector<8x8xf32>
    %124 = arith.addf %120, %123 : vector<8x8xf32>
    %c0_65 = arith.constant 0 : index
    %c24_66 = arith.constant 24 : index
    %125 = vector.load %arg11[%c0_65, %c24_66] : memref<8x32xf32, #tpu.memory_space<vmem>>, vector<8x8xf32>
    tpu.vector_store %arg11[%c0_65, %c24_66], %124 {strides = array<i32>} : memref<8x32xf32, #tpu.memory_space<vmem>>, vector<8x8xf32>,
    %c0_67 = arith.constant 0 : index
    %c3_68 = arith.constant 3 : index
    %126 = vector.load %arg9[%c0_67, %c3_68] : memref<8x4xf32, #tpu.memory_space<vmem>>, vector<8x1xf32>
    tpu.vector_store %arg9[%c0_67, %c3_68], %106 {strides = array<i32>} : memref<8x4xf32, #tpu.memory_space<vmem>>, vector<8x1xf32>,
    %c0_i32_69 = arith.constant 0 : i32
    %127 = arith.cmpi eq, %arg3, %c0_i32_69 : i32
    %128 = arith.extui %127 : i1 to i32
    %c0_i32_70 = arith.constant 0 : i32
    %129 = arith.cmpi ne, %128, %c0_i32_70 : i32
    scf.if %129 {
      %c0_71 = arith.constant 0 : index
      %c0_72 = arith.constant 0 : index
      %130 = vector.load %arg11[%c0_71, %c0_72] : memref<8x32xf32, #tpu.memory_space<vmem>>, vector<8x8xf32>
      %c0_73 = arith.constant 0 : index
      %c0_74 = arith.constant 0 : index
      %131 = vector.load %arg10[%c0_73, %c0_74] : memref<8x4xf32, #tpu.memory_space<vmem>>, vector<8x1xf32>
      %132 = tpu.reciprocal %131 {approx = true} : vector<8x1xf32> -> vector<8x1xf32>
      %133 = vector.broadcast %132 : vector<8x1xf32> to vector<8x8xf32>
      %134 = arith.mulf %130, %133 : vector<8x8xf32>
      %c0_75 = arith.constant 0 : index
      %c0_76 = arith.constant 0 : index
      %135 = vector.load %arg11[%c0_75, %c0_76] : memref<8x32xf32, #tpu.memory_space<vmem>>, vector<8x8xf32>
      tpu.vector_store %arg11[%c0_75, %c0_76], %134 {strides = array<i32>} : memref<8x32xf32, #tpu.memory_space<vmem>>, vector<8x8xf32>,
      %c0_77 = arith.constant 0 : index
      %c8_78 = arith.constant 8 : index
      %136 = vector.load %arg11[%c0_77, %c8_78] : memref<8x32xf32, #tpu.memory_space<vmem>>, vector<8x8xf32>
      %c0_79 = arith.constant 0 : index
      %c1_80 = arith.constant 1 : index
      %137 = vector.load %arg10[%c0_79, %c1_80] : memref<8x4xf32, #tpu.memory_space<vmem>>, vector<8x1xf32>
      %138 = tpu.reciprocal %137 {approx = true} : vector<8x1xf32> -> vector<8x1xf32>
      %139 = vector.broadcast %138 : vector<8x1xf32> to vector<8x8xf32>
      %140 = arith.mulf %136, %139 : vector<8x8xf32>
      %c0_81 = arith.constant 0 : index
      %c8_82 = arith.constant 8 : index
      %141 = vector.load %arg11[%c0_81, %c8_82] : memref<8x32xf32, #tpu.memory_space<vmem>>, vector<8x8xf32>
      tpu.vector_store %arg11[%c0_81, %c8_82], %140 {strides = array<i32>} : memref<8x32xf32, #tpu.memory_space<vmem>>, vector<8x8xf32>,
      %c0_83 = arith.constant 0 : index
      %c16_84 = arith.constant 16 : index
      %142 = vector.load %arg11[%c0_83, %c16_84] : memref<8x32xf32, #tpu.memory_space<vmem>>, vector<8x8xf32>
      %c0_85 = arith.constant 0 : index
      %c2_86 = arith.constant 2 : index
      %143 = vector.load %arg10[%c0_85, %c2_86] : memref<8x4xf32, #tpu.memory_space<vmem>>, vector<8x1xf32>
      %144 = tpu.reciprocal %143 {approx = true} : vector<8x1xf32> -> vector<8x1xf32>
      %145 = vector.broadcast %144 : vector<8x1xf32> to vector<8x8xf32>
      %146 = arith.mulf %142, %145 : vector<8x8xf32>
      %c0_87 = arith.constant 0 : index
      %c16_88 = arith.constant 16 : index
      %147 = vector.load %arg11[%c0_87, %c16_88] : memref<8x32xf32, #tpu.memory_space<vmem>>, vector<8x8xf32>
      tpu.vector_store %arg11[%c0_87, %c16_88], %146 {strides = array<i32>} : memref<8x32xf32, #tpu.memory_space<vmem>>, vector<8x8xf32>,
      %c0_89 = arith.constant 0 : index
      %c24_90 = arith.constant 24 : index
      %148 = vector.load %arg11[%c0_89, %c24_90] : memref<8x32xf32, #tpu.memory_space<vmem>>, vector<8x8xf32>
      %c0_91 = arith.constant 0 : index
      %c3_92 = arith.constant 3 : index
      %149 = vector.load %arg10[%c0_91, %c3_92] : memref<8x4xf32, #tpu.memory_space<vmem>>, vector<8x1xf32>
      %150 = tpu.reciprocal %149 {approx = true} : vector<8x1xf32> -> vector<8x1xf32>
      %151 = vector.broadcast %150 : vector<8x1xf32> to vector<8x8xf32>
      %152 = arith.mulf %148, %151 : vector<8x8xf32>
      %c0_93 = arith.constant 0 : index
      %c24_94 = arith.constant 24 : index
      %153 = vector.load %arg11[%c0_93, %c24_94] : memref<8x32xf32, #tpu.memory_space<vmem>>, vector<8x8xf32>
      tpu.vector_store %arg11[%c0_93, %c24_94], %152 {strides = array<i32>} : memref<8x32xf32, #tpu.memory_space<vmem>>, vector<8x8xf32>,
      %c0_95 = arith.constant 0 : index
      %c0_96 = arith.constant 0 : index
      %154 = vector.load %arg11[%c0_95, %c0_96] : memref<8x32xf32, #tpu.memory_space<vmem>>, vector<8x32xf32>
      %155 = arith.truncf %154 : vector<8x32xf32> to vector<8x32xbf16>
      %c0_97 = arith.constant 0 : index
      %c0_98 = arith.constant 0 : index
      %c0_99 = arith.constant 0 : index
      %156 = vector.load %arg8[%c0_97, %c0_98, %c0_99] : memref<1x8x32xbf16, #tpu.memory_space<vmem>>, vector<1x8x32xbf16>
      %157 = vector.shape_cast %156 : vector<1x8x32xbf16> to vector<8x32xbf16>
      %158 = vector.shape_cast %155 : vector<8x32xbf16> to vector<1x8x32xbf16>
      tpu.vector_store %arg8[%c0_97, %c0_98, %c0_99], %158 {strides = array<i32>} : memref<1x8x32xbf16, #tpu.memory_space<vmem>>, vector<1x8x32xbf16>,
    } else {
    }
    return
  }
  func.func @transform_0(%arg0: i32, %arg1: i32, %arg2: i32, %arg3: i32) -> (i32, i32, i32) {
    %c0_i32 = arith.constant 0 : i32
    %c0_i32_0 = arith.constant 0 : i32
    return %arg0, %c0_i32, %arg3 : i32, i32, i32
  }
  func.func @transform_1(%arg0: i32, %arg1: i32, %arg2: i32, %arg3: i32) -> (i32, i32, i32) {
    %c0_i32 = arith.constant 0 : i32
    %0 = arith.addi %c0_i32, %arg1 : i32
    %c0_i32_0 = arith.constant 0 : i32
    return %arg0, %arg2, %0 : i32, i32, i32
  }
  func.func @transform_2(%arg0: i32, %arg1: i32, %arg2: i32, %arg3: i32) -> (i32, i32, i32) {
    %c0_i32 = arith.constant 0 : i32
    %0 = arith.addi %c0_i32, %arg1 : i32
    %c0_i32_0 = arith.constant 0 : i32
    return %arg0, %arg3, %0 : i32, i32, i32
  }
  func.func @transform_3(%arg0: i32, %arg1: i32, %arg2: i32, %arg3: i32) -> (i32, i32, i32) {
    %c0_i32 = arith.constant 0 : i32
    %0 = arith.addi %c0_i32, %arg1 : i32
    %c0_i32_0 = arith.constant 0 : i32
    return %arg0, %arg3, %0 : i32, i32, i32
  }
  func.func @transform_4(%arg0: i32, %arg1: i32, %arg2: i32, %arg3: i32) -> (i32, i32, i32) {
    %c0_i32 = arith.constant 0 : i32
    return %arg0, %arg2, %arg1 : i32, i32, i32
  }
}

module attributes {stable_mosaic.version = 11 : i64} {
  func.func @_linear_kernel(%arg0: i32, %arg1: i32, %arg2: i32, %arg3: memref<16x32xbf16, #tpu.memory_space<vmem>>, %arg4: memref<32x32xbf16, #tpu.memory_space<vmem>>, %arg5: memref<1x32xf32, #tpu.memory_space<vmem>>, %arg6: memref<16x32xbf16, #tpu.memory_space<vmem>>, %arg7: memref<16x32xf32, #tpu.memory_space<vmem>>) attributes {dimension_semantics = [#tpu.dimension_semantics<parallel>, #tpu.dimension_semantics<parallel>, #tpu.dimension_semantics<arbitrary>], iteration_bounds = array<i64: 1, 1, 1>, scalar_prefetch = 0 : i64, scratch_operands = 1 : i64, tpu.core_type = #tpu.core_type<tc>, window_params = [{transform_indices = @transform_0, window_bounds = array<i64: 16, 32>}, {transform_indices = @transform_1, window_bounds = array<i64: 32, 32>}, {transform_indices = @transform_2, window_bounds = array<i64: 1, 32>}, {transform_indices = @transform_3, window_bounds = array<i64: 16, 32>}]} {
    %c0_i32 = arith.constant 0 : i32
    %0 = arith.cmpi eq, %arg2, %c0_i32 : i32
    %1 = arith.extui %0 : i1 to i32
    %c0_i32_0 = arith.constant 0 : i32
    %2 = arith.cmpi ne, %1, %c0_i32_0 : i32
    scf.if %2 {
      %cst_10 = arith.constant 0.000000e+00 : f32
      %12 = vector.broadcast %cst_10 : f32 to vector<16x32xf32>
      %c0_11 = arith.constant 0 : index
      %c0_12 = arith.constant 0 : index
      %13 = vector.load %arg7[%c0_11, %c0_12] : memref<16x32xf32, #tpu.memory_space<vmem>>, vector<16x32xf32>
      tpu.vector_store %arg7[%c0_11, %c0_12], %12 {strides = array<i32>} : memref<16x32xf32, #tpu.memory_space<vmem>>, vector<16x32xf32>,
    } else {
    }
    %c0 = arith.constant 0 : index
    %c0_1 = arith.constant 0 : index
    %3 = vector.load %arg7[%c0, %c0_1] : memref<16x32xf32, #tpu.memory_space<vmem>>, vector<16x32xf32>
    %c0_2 = arith.constant 0 : index
    %c0_3 = arith.constant 0 : index
    %4 = vector.load %arg3[%c0_2, %c0_3] : memref<16x32xbf16, #tpu.memory_space<vmem>>, vector<16x32xbf16>
    %c0_4 = arith.constant 0 : index
    %c0_5 = arith.constant 0 : index
    %5 = vector.load %arg4[%c0_4, %c0_5] : memref<32x32xbf16, #tpu.memory_space<vmem>>, vector<32x32xbf16>
    %cst = arith.constant dense<0.000000e+00> : vector<16x32xf32>
    %6 = tpu.matmul %4, %5, %cst {dimension_numbers = #tpu.dot_dimension_numbers<[1], [0], [0], [1], [0, 0, 1, 1], [], []>} : vector<16x32xbf16>, vector<32x32xbf16>, vector<16x32xf32> -> vector<16x32xf32>
    %7 = arith.addf %3, %6 : vector<16x32xf32>
    %c0_6 = arith.constant 0 : index
    %c0_7 = arith.constant 0 : index
    %8 = vector.load %arg7[%c0_6, %c0_7] : memref<16x32xf32, #tpu.memory_space<vmem>>, vector<16x32xf32>
    tpu.vector_store %arg7[%c0_6, %c0_7], %7 {strides = array<i32>} : memref<16x32xf32, #tpu.memory_space<vmem>>, vector<16x32xf32>,
    %c0_i32_8 = arith.constant 0 : i32
    %9 = arith.cmpi eq, %arg2, %c0_i32_8 : i32
    %10 = arith.extui %9 : i1 to i32
    %c0_i32_9 = arith.constant 0 : i32
    %11 = arith.cmpi ne, %10, %c0_i32_9 : i32
    scf.if %11 {
      %c0_10 = arith.constant 0 : index
      %c0_11 = arith.constant 0 : index
      %12 = vector.load %arg7[%c0_10, %c0_11] : memref<16x32xf32, #tpu.memory_space<vmem>>, vector<16x32xf32>
      %c0_12 = arith.constant 0 : index
      %c0_13 = arith.constant 0 : index
      %13 = vector.load %arg5[%c0_12, %c0_13] : memref<1x32xf32, #tpu.memory_space<vmem>>, vector<1x32xf32>
      %14 = vector.broadcast %13 : vector<1x32xf32> to vector<16x32xf32>
      %15 = arith.addf %12, %14 : vector<16x32xf32>
      %16 = arith.truncf %15 : vector<16x32xf32> to vector<16x32xbf16>
      %c0_14 = arith.constant 0 : index
      %c0_15 = arith.constant 0 : index
      %17 = vector.load %arg6[%c0_14, %c0_15] : memref<16x32xbf16, #tpu.memory_space<vmem>>, vector<16x32xbf16>
      tpu.vector_store %arg6[%c0_14, %c0_15], %16 {strides = array<i32>} : memref<16x32xbf16, #tpu.memory_space<vmem>>, vector<16x32xbf16>,
    } else {
    }
    return
  }
  func.func @transform_0(%arg0: i32, %arg1: i32, %arg2: i32) -> (i32, i32) {
    %c0_i32 = arith.constant 0 : i32
    return %arg0, %arg2 : i32, i32
  }
  func.func @transform_1(%arg0: i32, %arg1: i32, %arg2: i32) -> (i32, i32) {
    %c0_i32 = arith.constant 0 : i32
    return %arg2, %arg1 : i32, i32
  }
  func.func @transform_2(%arg0: i32, %arg1: i32, %arg2: i32) -> (i32, i32) {
    %c0_i32 = arith.constant 0 : i32
    %c0_i32_0 = arith.constant 0 : i32
    return %c0_i32, %arg1 : i32, i32
  }
  func.func @transform_3(%arg0: i32, %arg1: i32, %arg2: i32) -> (i32, i32) {
    %c0_i32 = arith.constant 0 : i32
    return %arg0, %arg1 : i32, i32
  }
}

module attributes {stable_mosaic.version = 11 : i64} {
  func.func @_add_ln_kernel(%arg0: i32, %arg1: memref<16x32xf32, #tpu.memory_space<vmem>>, %arg2: memref<16x32xbf16, #tpu.memory_space<vmem>>, %arg3: memref<1x32xf32, #tpu.memory_space<vmem>>, %arg4: memref<1x32xf32, #tpu.memory_space<vmem>>, %arg5: memref<16x32xf32, #tpu.memory_space<vmem>>) attributes {dimension_semantics = [#tpu.dimension_semantics<parallel>], iteration_bounds = array<i64: 1>, scalar_prefetch = 0 : i64, scratch_operands = 0 : i64, tpu.core_type = #tpu.core_type<tc>, window_params = [{transform_indices = @transform_0, window_bounds = array<i64: 16, 32>}, {transform_indices = @transform_1, window_bounds = array<i64: 16, 32>}, {pipeline_mode = #tpu.pipeline_mode<synchronous>, transform_indices = @transform_2, window_bounds = array<i64: 1, 32>}, {pipeline_mode = #tpu.pipeline_mode<synchronous>, transform_indices = @transform_3, window_bounds = array<i64: 1, 32>}, {transform_indices = @transform_4, window_bounds = array<i64: 16, 32>}]} {
    %c0 = arith.constant 0 : index
    %c0_0 = arith.constant 0 : index
    %0 = vector.load %arg1[%c0, %c0_0] : memref<16x32xf32, #tpu.memory_space<vmem>>, vector<16x32xf32>
    %c0_1 = arith.constant 0 : index
    %c0_2 = arith.constant 0 : index
    %1 = vector.load %arg2[%c0_1, %c0_2] : memref<16x32xbf16, #tpu.memory_space<vmem>>, vector<16x32xbf16>
    %2 = arith.extf %1 : vector<16x32xbf16> to vector<16x32xf32>
    %3 = arith.addf %0, %2 : vector<16x32xf32>
    %cst = arith.constant dense<0.000000e+00> : vector<16xf32>
    %4 = vector.multi_reduction <add>, %3, %cst [1] : vector<16x32xf32> to vector<16xf32>
    %5 = vector.shape_cast %4 : vector<16xf32> to vector<16x1xf32>
    %cst_3 = arith.constant 3.200000e+01 : f32
    %6 = vector.broadcast %cst_3 : f32 to vector<16x1xf32>
    %7 = arith.divf %5, %6 : vector<16x1xf32>
    %8 = vector.broadcast %7 : vector<16x1xf32> to vector<16x32xf32>
    %9 = arith.subf %3, %8 : vector<16x32xf32>
    %10 = arith.mulf %9, %9 : vector<16x32xf32>
    %cst_4 = arith.constant dense<0.000000e+00> : vector<16xf32>
    %11 = vector.multi_reduction <add>, %10, %cst_4 [1] : vector<16x32xf32> to vector<16xf32>
    %12 = vector.shape_cast %11 : vector<16xf32> to vector<16x1xf32>
    %cst_5 = arith.constant 3.200000e+01 : f32
    %13 = vector.broadcast %cst_5 : f32 to vector<16x1xf32>
    %14 = arith.divf %12, %13 : vector<16x1xf32>
    %15 = vector.broadcast %7 : vector<16x1xf32> to vector<16x32xf32>
    %16 = arith.subf %3, %15 : vector<16x32xf32>
    %cst_6 = arith.constant 9.99999974E-6 : f32
    %17 = vector.broadcast %cst_6 : f32 to vector<16x1xf32>
    %18 = arith.addf %14, %17 : vector<16x1xf32>
    %19 = math.rsqrt %18 : vector<16x1xf32>
    %20 = vector.broadcast %19 : vector<16x1xf32> to vector<16x32xf32>
    %21 = arith.mulf %16, %20 : vector<16x32xf32>
    %c0_7 = arith.constant 0 : index
    %c0_8 = arith.constant 0 : index
    %22 = vector.load %arg3[%c0_7, %c0_8] : memref<1x32xf32, #tpu.memory_space<vmem>>, vector<1x32xf32>
    %23 = vector.broadcast %22 : vector<1x32xf32> to vector<16x32xf32>
    %24 = arith.mulf %21, %23 : vector<16x32xf32>
    %c0_9 = arith.constant 0 : index
    %c0_10 = arith.constant 0 : index
    %25 = vector.load %arg4[%c0_9, %c0_10] : memref<1x32xf32, #tpu.memory_space<vmem>>, vector<1x32xf32>
    %26 = vector.broadcast %25 : vector<1x32xf32> to vector<16x32xf32>
    %27 = arith.addf %24, %26 : vector<16x32xf32>
    %c0_11 = arith.constant 0 : index
    %c0_12 = arith.constant 0 : index
    %28 = vector.load %arg5[%c0_11, %c0_12] : memref<16x32xf32, #tpu.memory_space<vmem>>, vector<16x32xf32>
    tpu.vector_store %arg5[%c0_11, %c0_12], %27 {strides = array<i32>} : memref<16x32xf32, #tpu.memory_space<vmem>>, vector<16x32xf32>,
    return
  }
  func.func @transform_0(%arg0: i32) -> (i32, i32) {
    %c0_i32 = arith.constant 0 : i32
    %c0_i32_0 = arith.constant 0 : i32
    return %arg0, %c0_i32 : i32, i32
  }
  func.func @transform_1(%arg0: i32) -> (i32, i32) {
    %c0_i32 = arith.constant 0 : i32
    %c0_i32_0 = arith.constant 0 : i32
    return %arg0, %c0_i32 : i32, i32
  }
  func.func @transform_2(%arg0: i32) -> (i32, i32) {
    %c0_i32 = arith.constant 0 : i32
    %c0_i32_0 = arith.constant 0 : i32
    %c0_i32_1 = arith.constant 0 : i32
    return %c0_i32, %c0_i32_0 : i32, i32
  }
  func.func @transform_3(%arg0: i32) -> (i32, i32) {
    %c0_i32 = arith.constant 0 : i32
    %c0_i32_0 = arith.constant 0 : i32
    %c0_i32_1 = arith.constant 0 : i32
    return %c0_i32, %c0_i32_0 : i32, i32
  }
  func.func @transform_4(%arg0: i32) -> (i32, i32) {
    %c0_i32 = arith.constant 0 : i32
    %c0_i32_0 = arith.constant 0 : i32
    return %arg0, %c0_i32 : i32, i32
  }
}

module attributes {stable_mosaic.version = 11 : i64} {
  func.func @_ffn_kernel(%arg0: i32, %arg1: i32, %arg2: memref<16x32xf32, #tpu.memory_space<vmem>>, %arg3: memref<32x128xbf16, #tpu.memory_space<vmem>>, %arg4: memref<1x128xf32, #tpu.memory_space<vmem>>, %arg5: memref<128x32xbf16, #tpu.memory_space<vmem>>, %arg6: memref<1x32xf32, #tpu.memory_space<vmem>>, %arg7: memref<16x32xbf16, #tpu.memory_space<vmem>>, %arg8: memref<16x32xf32, #tpu.memory_space<vmem>>) attributes {dimension_semantics = [#tpu.dimension_semantics<parallel>, #tpu.dimension_semantics<arbitrary>], iteration_bounds = array<i64: 1, 1>, scalar_prefetch = 0 : i64, scratch_operands = 1 : i64, tpu.core_type = #tpu.core_type<tc>, window_params = [{transform_indices = @transform_0, window_bounds = array<i64: 16, 32>}, {transform_indices = @transform_1, window_bounds = array<i64: 32, 128>}, {transform_indices = @transform_2, window_bounds = array<i64: 1, 128>}, {transform_indices = @transform_3, window_bounds = array<i64: 128, 32>}, {pipeline_mode = #tpu.pipeline_mode<synchronous>, transform_indices = @transform_4, window_bounds = array<i64: 1, 32>}, {transform_indices = @transform_5, window_bounds = array<i64: 16, 32>}]} {
    %c0_i32 = arith.constant 0 : i32
    %0 = arith.cmpi eq, %arg1, %c0_i32 : i32
    %1 = arith.extui %0 : i1 to i32
    %c0_i32_0 = arith.constant 0 : i32
    %2 = arith.cmpi ne, %1, %c0_i32_0 : i32
    scf.if %2 {
      %cst_16 = arith.constant 0.000000e+00 : f32
      %21 = vector.broadcast %cst_16 : f32 to vector<16x32xf32>
      %c0_17 = arith.constant 0 : index
      %c0_18 = arith.constant 0 : index
      %22 = vector.load %arg8[%c0_17, %c0_18] : memref<16x32xf32, #tpu.memory_space<vmem>>, vector<16x32xf32>
      tpu.vector_store %arg8[%c0_17, %c0_18], %21 {strides = array<i32>} : memref<16x32xf32, #tpu.memory_space<vmem>>, vector<16x32xf32>,
    } else {
    }
    %c0 = arith.constant 0 : index
    %c0_1 = arith.constant 0 : index
    %3 = vector.load %arg2[%c0, %c0_1] : memref<16x32xf32, #tpu.memory_space<vmem>>, vector<16x32xf32>
    %4 = arith.truncf %3 : vector<16x32xf32> to vector<16x32xbf16>
    %c0_2 = arith.constant 0 : index
    %c0_3 = arith.constant 0 : index
    %5 = vector.load %arg3[%c0_2, %c0_3] : memref<32x128xbf16, #tpu.memory_space<vmem>>, vector<32x128xbf16>
    %cst = arith.constant dense<0.000000e+00> : vector<16x128xf32>
    %6 = tpu.matmul %4, %5, %cst {dimension_numbers = #tpu.dot_dimension_numbers<[1], [0], [0], [1], [0, 0, 1, 1], [], []>} : vector<16x32xbf16>, vector<32x128xbf16>, vector<16x128xf32> -> vector<16x128xf32>
    %c0_4 = arith.constant 0 : index
    %c0_5 = arith.constant 0 : index
    %7 = vector.load %arg4[%c0_4, %c0_5] : memref<1x128xf32, #tpu.memory_space<vmem>>, vector<1x128xf32>
    %8 = vector.broadcast %7 : vector<1x128xf32> to vector<16x128xf32>
    %9 = arith.addf %6, %8 : vector<16x128xf32>
    %cst_6 = arith.constant 0.000000e+00 : f32
    %10 = vector.broadcast %cst_6 : f32 to vector<16x128xf32>
    %11 = arith.maximumf %9, %10 : vector<16x128xf32>
    %12 = arith.truncf %11 : vector<16x128xf32> to vector<16x128xbf16>
    %c0_7 = arith.constant 0 : index
    %c0_8 = arith.constant 0 : index
    %13 = vector.load %arg8[%c0_7, %c0_8] : memref<16x32xf32, #tpu.memory_space<vmem>>, vector<16x32xf32>
    %c0_9 = arith.constant 0 : index
    %c0_10 = arith.constant 0 : index
    %14 = vector.load %arg5[%c0_9, %c0_10] : memref<128x32xbf16, #tpu.memory_space<vmem>>, vector<128x32xbf16>
    %cst_11 = arith.constant dense<0.000000e+00> : vector<16x32xf32>
    %15 = tpu.matmul %12, %14, %cst_11 {dimension_numbers = #tpu.dot_dimension_numbers<[1], [0], [0], [1], [0, 0, 1, 1], [], []>} : vector<16x128xbf16>, vector<128x32xbf16>, vector<16x32xf32> -> vector<16x32xf32>
    %16 = arith.addf %13, %15 : vector<16x32xf32>
    %c0_12 = arith.constant 0 : index
    %c0_13 = arith.constant 0 : index
    %17 = vector.load %arg8[%c0_12, %c0_13] : memref<16x32xf32, #tpu.memory_space<vmem>>, vector<16x32xf32>
    tpu.vector_store %arg8[%c0_12, %c0_13], %16 {strides = array<i32>} : memref<16x32xf32, #tpu.memory_space<vmem>>, vector<16x32xf32>,
    %c0_i32_14 = arith.constant 0 : i32
    %18 = arith.cmpi eq, %arg1, %c0_i32_14 : i32
    %19 = arith.extui %18 : i1 to i32
    %c0_i32_15 = arith.constant 0 : i32
    %20 = arith.cmpi ne, %19, %c0_i32_15 : i32
    scf.if %20 {
      %c0_16 = arith.constant 0 : index
      %c0_17 = arith.constant 0 : index
      %21 = vector.load %arg8[%c0_16, %c0_17] : memref<16x32xf32, #tpu.memory_space<vmem>>, vector<16x32xf32>
      %c0_18 = arith.constant 0 : index
      %c0_19 = arith.constant 0 : index
      %22 = vector.load %arg6[%c0_18, %c0_19] : memref<1x32xf32, #tpu.memory_space<vmem>>, vector<1x32xf32>
      %23 = vector.broadcast %22 : vector<1x32xf32> to vector<16x32xf32>
      %24 = arith.addf %21, %23 : vector<16x32xf32>
      %25 = arith.truncf %24 : vector<16x32xf32> to vector<16x32xbf16>
      %c0_20 = arith.constant 0 : index
      %c0_21 = arith.constant 0 : index
      %26 = vector.load %arg7[%c0_20, %c0_21] : memref<16x32xbf16, #tpu.memory_space<vmem>>, vector<16x32xbf16>
      tpu.vector_store %arg7[%c0_20, %c0_21], %25 {strides = array<i32>} : memref<16x32xbf16, #tpu.memory_space<vmem>>, vector<16x32xbf16>,
    } else {
    }
    return
  }
  func.func @transform_0(%arg0: i32, %arg1: i32) -> (i32, i32) {
    %c0_i32 = arith.constant 0 : i32
    %c0_i32_0 = arith.constant 0 : i32
    return %arg0, %c0_i32 : i32, i32
  }
  func.func @transform_1(%arg0: i32, %arg1: i32) -> (i32, i32) {
    %c0_i32 = arith.constant 0 : i32
    %c0_i32_0 = arith.constant 0 : i32
    return %c0_i32, %arg1 : i32, i32
  }
  func.func @transform_2(%arg0: i32, %arg1: i32) -> (i32, i32) {
    %c0_i32 = arith.constant 0 : i32
    %c0_i32_0 = arith.constant 0 : i32
    return %c0_i32, %arg1 : i32, i32
  }
  func.func @transform_3(%arg0: i32, %arg1: i32) -> (i32, i32) {
    %c0_i32 = arith.constant 0 : i32
    %c0_i32_0 = arith.constant 0 : i32
    return %arg1, %c0_i32 : i32, i32
  }
  func.func @transform_4(%arg0: i32, %arg1: i32) -> (i32, i32) {
    %c0_i32 = arith.constant 0 : i32
    %c0_i32_0 = arith.constant 0 : i32
    %c0_i32_1 = arith.constant 0 : i32
    return %c0_i32, %c0_i32_0 : i32, i32
  }
  func.func @transform_5(%arg0: i32, %arg1: i32) -> (i32, i32) {
    %c0_i32 = arith.constant 0 : i32
    %c0_i32_0 = arith.constant 0 : i32
    return %arg0, %c0_i32 : i32, i32
  }
}

module attributes {stable_mosaic.version = 11 : i64} {
  func.func @_linear_kernel(%arg0: i32, %arg1: i32, %arg2: i32, %arg3: memref<16x32xf32, #tpu.memory_space<vmem>>, %arg4: memref<32x64xbf16, #tpu.memory_space<vmem>>, %arg5: memref<1x64xf32, #tpu.memory_space<vmem>>, %arg6: memref<16x64xbf16, #tpu.memory_space<vmem>>, %arg7: memref<16x64xf32, #tpu.memory_space<vmem>>) attributes {dimension_semantics = [#tpu.dimension_semantics<parallel>, #tpu.dimension_semantics<parallel>, #tpu.dimension_semantics<arbitrary>], iteration_bounds = array<i64: 1, 1, 1>, scalar_prefetch = 0 : i64, scratch_operands = 1 : i64, tpu.core_type = #tpu.core_type<tc>, window_params = [{transform_indices = @transform_0, window_bounds = array<i64: 16, 32>}, {transform_indices = @transform_1, window_bounds = array<i64: 32, 64>}, {transform_indices = @transform_2, window_bounds = array<i64: 1, 64>}, {transform_indices = @transform_3, window_bounds = array<i64: 16, 64>}]} {
    %c0_i32 = arith.constant 0 : i32
    %0 = arith.cmpi eq, %arg2, %c0_i32 : i32
    %1 = arith.extui %0 : i1 to i32
    %c0_i32_0 = arith.constant 0 : i32
    %2 = arith.cmpi ne, %1, %c0_i32_0 : i32
    scf.if %2 {
      %cst_10 = arith.constant 0.000000e+00 : f32
      %13 = vector.broadcast %cst_10 : f32 to vector<16x64xf32>
      %c0_11 = arith.constant 0 : index
      %c0_12 = arith.constant 0 : index
      %14 = vector.load %arg7[%c0_11, %c0_12] : memref<16x64xf32, #tpu.memory_space<vmem>>, vector<16x64xf32>
      tpu.vector_store %arg7[%c0_11, %c0_12], %13 {strides = array<i32>} : memref<16x64xf32, #tpu.memory_space<vmem>>, vector<16x64xf32>,
    } else {
    }
    %c0 = arith.constant 0 : index
    %c0_1 = arith.constant 0 : index
    %3 = vector.load %arg7[%c0, %c0_1] : memref<16x64xf32, #tpu.memory_space<vmem>>, vector<16x64xf32>
    %c0_2 = arith.constant 0 : index
    %c0_3 = arith.constant 0 : index
    %4 = vector.load %arg3[%c0_2, %c0_3] : memref<16x32xf32, #tpu.memory_space<vmem>>, vector<16x32xf32>
    %5 = arith.truncf %4 : vector<16x32xf32> to vector<16x32xbf16>
    %c0_4 = arith.constant 0 : index
    %c0_5 = arith.constant 0 : index
    %6 = vector.load %arg4[%c0_4, %c0_5] : memref<32x64xbf16, #tpu.memory_space<vmem>>, vector<32x64xbf16>
    %cst = arith.constant dense<0.000000e+00> : vector<16x64xf32>
    %7 = tpu.matmul %5, %6, %cst {dimension_numbers = #tpu.dot_dimension_numbers<[1], [0], [0], [1], [0, 0, 1, 1], [], []>} : vector<16x32xbf16>, vector<32x64xbf16>, vector<16x64xf32> -> vector<16x64xf32>
    %8 = arith.addf %3, %7 : vector<16x64xf32>
    %c0_6 = arith.constant 0 : index
    %c0_7 = arith.constant 0 : index
    %9 = vector.load %arg7[%c0_6, %c0_7] : memref<16x64xf32, #tpu.memory_space<vmem>>, vector<16x64xf32>
    tpu.vector_store %arg7[%c0_6, %c0_7], %8 {strides = array<i32>} : memref<16x64xf32, #tpu.memory_space<vmem>>, vector<16x64xf32>,
    %c0_i32_8 = arith.constant 0 : i32
    %10 = arith.cmpi eq, %arg2, %c0_i32_8 : i32
    %11 = arith.extui %10 : i1 to i32
    %c0_i32_9 = arith.constant 0 : i32
    %12 = arith.cmpi ne, %11, %c0_i32_9 : i32
    scf.if %12 {
      %c0_10 = arith.constant 0 : index
      %c0_11 = arith.constant 0 : index
      %13 = vector.load %arg7[%c0_10, %c0_11] : memref<16x64xf32, #tpu.memory_space<vmem>>, vector<16x64xf32>
      %c0_12 = arith.constant 0 : index
      %c0_13 = arith.constant 0 : index
      %14 = vector.load %arg5[%c0_12, %c0_13] : memref<1x64xf32, #tpu.memory_space<vmem>>, vector<1x64xf32>
      %15 = vector.broadcast %14 : vector<1x64xf32> to vector<16x64xf32>
      %16 = arith.addf %13, %15 : vector<16x64xf32>
      %17 = arith.truncf %16 : vector<16x64xf32> to vector<16x64xbf16>
      %c0_14 = arith.constant 0 : index
      %c0_15 = arith.constant 0 : index
      %18 = vector.load %arg6[%c0_14, %c0_15] : memref<16x64xbf16, #tpu.memory_space<vmem>>, vector<16x64xbf16>
      tpu.vector_store %arg6[%c0_14, %c0_15], %17 {strides = array<i32>} : memref<16x64xbf16, #tpu.memory_space<vmem>>, vector<16x64xbf16>,
    } else {
    }
    return
  }
  func.func @transform_0(%arg0: i32, %arg1: i32, %arg2: i32) -> (i32, i32) {
    %c0_i32 = arith.constant 0 : i32
    return %arg0, %arg2 : i32, i32
  }
  func.func @transform_1(%arg0: i32, %arg1: i32, %arg2: i32) -> (i32, i32) {
    %c0_i32 = arith.constant 0 : i32
    return %arg2, %arg1 : i32, i32
  }
  func.func @transform_2(%arg0: i32, %arg1: i32, %arg2: i32) -> (i32, i32) {
    %c0_i32 = arith.constant 0 : i32
    %c0_i32_0 = arith.constant 0 : i32
    return %c0_i32, %arg1 : i32, i32
  }
  func.func @transform_3(%arg0: i32, %arg1: i32, %arg2: i32) -> (i32, i32) {
    %c0_i32 = arith.constant 0 : i32
    return %arg0, %arg1 : i32, i32
  }
}

module attributes {stable_mosaic.version = 11 : i64} {
  func.func @_attn_kernel(%arg0: i32, %arg1: i32, %arg2: i32, %arg3: i32, %arg4: memref<1x1x8xf32, #tpu.memory_space<vmem>>, %arg5: memref<1x8x32xbf16, #tpu.memory_space<vmem>>, %arg6: memref<1x8x32xbf16, #tpu.memory_space<vmem>>, %arg7: memref<1x8x32xbf16, #tpu.memory_space<vmem>>, %arg8: memref<1x8x32xbf16, #tpu.memory_space<vmem>>, %arg9: memref<8x4xf32, #tpu.memory_space<vmem>>, %arg10: memref<8x4xf32, #tpu.memory_space<vmem>>, %arg11: memref<8x32xf32, #tpu.memory_space<vmem>>) attributes {dimension_semantics = [#tpu.dimension_semantics<parallel>, #tpu.dimension_semantics<parallel>, #tpu.dimension_semantics<parallel>, #tpu.dimension_semantics<arbitrary>], iteration_bounds = array<i64: 2, 1, 1, 1>, scalar_prefetch = 0 : i64, scratch_operands = 3 : i64, tpu.core_type = #tpu.core_type<tc>, window_params = [{transform_indices = @transform_0, window_bounds = array<i64: 1, 1, 8>}, {transform_indices = @transform_1, window_bounds = array<i64: 1, 8, 32>}, {transform_indices = @transform_2, window_bounds = array<i64: 1, 8, 32>}, {transform_indices = @transform_3, window_bounds = array<i64: 1, 8, 32>}, {transform_indices = @transform_4, window_bounds = array<i64: 1, 8, 32>}]} {
    %c0_i32 = arith.constant 0 : i32
    %0 = arith.cmpi eq, %arg3, %c0_i32 : i32
    %1 = arith.extui %0 : i1 to i32
    %c0_i32_0 = arith.constant 0 : i32
    %2 = arith.cmpi ne, %1, %c0_i32_0 : i32
    scf.if %2 {
      %cst_76 = arith.constant -1.000000e+30 : f32
      %147 = vector.broadcast %cst_76 : f32 to vector<8x4xf32>
      %c0_77 = arith.constant 0 : index
      %c0_78 = arith.constant 0 : index
      %148 = vector.load %arg9[%c0_77, %c0_78] : memref<8x4xf32, #tpu.memory_space<vmem>>, vector<8x4xf32>
      tpu.vector_store %arg9[%c0_77, %c0_78], %147 {strides = array<i32>} : memref<8x4xf32, #tpu.memory_space<vmem>>, vector<8x4xf32>,
      %cst_79 = arith.constant 0.000000e+00 : f32
      %149 = vector.broadcast %cst_79 : f32 to vector<8x4xf32>
      %c0_80 = arith.constant 0 : index
      %c0_81 = arith.constant 0 : index
      %150 = vector.load %arg10[%c0_80, %c0_81] : memref<8x4xf32, #tpu.memory_space<vmem>>, vector<8x4xf32>
      tpu.vector_store %arg10[%c0_80, %c0_81], %149 {strides = array<i32>} : memref<8x4xf32, #tpu.memory_space<vmem>>, vector<8x4xf32>,
      %cst_82 = arith.constant 0.000000e+00 : f32
      %151 = vector.broadcast %cst_82 : f32 to vector<8x32xf32>
      %c0_83 = arith.constant 0 : index
      %c0_84 = arith.constant 0 : index
      %152 = vector.load %arg11[%c0_83, %c0_84] : memref<8x32xf32, #tpu.memory_space<vmem>>, vector<8x32xf32>
      tpu.vector_store %arg11[%c0_83, %c0_84], %151 {strides = array<i32>} : memref<8x32xf32, #tpu.memory_space<vmem>>, vector<8x32xf32>,
    } else {
    }
    %c0 = arith.constant 0 : index
    %c0_1 = arith.constant 0 : index
    %c0_2 = arith.constant 0 : index
    %3 = vector.load %arg5[%c0, %c0_1, %c0_2] : memref<1x8x32xbf16, #tpu.memory_space<vmem>>, vector<1x8x32xbf16>
    %4 = vector.shape_cast %3 : vector<1x8x32xbf16> to vector<8x32xbf16>
    %c0_3 = arith.constant 0 : index
    %c0_4 = arith.constant 0 : index
    %c0_5 = arith.constant 0 : index
    %5 = vector.load %arg6[%c0_3, %c0_4, %c0_5] : memref<1x8x32xbf16, #tpu.memory_space<vmem>>, vector<1x8x32xbf16>
    %6 = vector.shape_cast %5 : vector<1x8x32xbf16> to vector<8x32xbf16>
    %c0_6 = arith.constant 0 : index
    %c0_7 = arith.constant 0 : index
    %c0_8 = arith.constant 0 : index
    %7 = vector.load %arg7[%c0_6, %c0_7, %c0_8] : memref<1x8x32xbf16, #tpu.memory_space<vmem>>, vector<1x8x32xbf16>
    %8 = vector.shape_cast %7 : vector<1x8x32xbf16> to vector<8x32xbf16>
    %c0_9 = arith.constant 0 : index
    %c0_10 = arith.constant 0 : index
    %c0_11 = arith.constant 0 : index
    %9 = vector.load %arg4[%c0_9, %c0_10, %c0_11] : memref<1x1x8xf32, #tpu.memory_space<vmem>>, vector<1x1x8xf32>
    %10 = vector.shape_cast %9 : vector<1x1x8xf32> to vector<1x8xf32>
    %11 = tpu.iota {dimensions = array<i32: 0>} : vector<8x8xi32>
    %c8_i32 = arith.constant 8 : i32
    %12 = arith.muli %arg2, %c8_i32 : i32
    %13 = vector.broadcast %12 : i32 to vector<8x8xi32>
    %14 = arith.addi %11, %13 : vector<8x8xi32>
    %15 = tpu.iota {dimensions = array<i32: 1>} : vector<8x8xi32>
    %c8_i32_12 = arith.constant 8 : i32
    %16 = arith.muli %arg3, %c8_i32_12 : i32
    %17 = vector.broadcast %16 : i32 to vector<8x8xi32>
    %18 = arith.addi %15, %17 : vector<8x8xi32>
    %19 = arith.cmpi sle, %18, %14 : vector<8x8xi32>
    %20 = vector.extract_strided_slice %4 {offsets = [0, 0], sizes = [8, 8], strides = [1, 1]} : vector<8x32xbf16> to vector<8x8xbf16>
    %21 = vector.extract_strided_slice %6 {offsets = [0, 0], sizes = [8, 8], strides = [1, 1]} : vector<8x32xbf16> to vector<8x8xbf16>
    %cst = arith.constant dense<0.000000e+00> : vector<8x8xf32>
    %22 = tpu.matmul %20, %21, %cst {dimension_numbers = #tpu.dot_dimension_numbers<[1], [1], [0], [0], [0, 0, 1, 0], [], []>} : vector<8x8xbf16>, vector<8x8xbf16>, vector<8x8xf32> -> vector<8x8xf32>
    %23 = vector.broadcast %10 : vector<1x8xf32> to vector<8x8xf32>
    %24 = arith.addf %22, %23 : vector<8x8xf32>
    %cst_13 = arith.constant -1.000000e+30 : f32
    %25 = vector.broadcast %cst_13 : f32 to vector<8x8xf32>
    %26 = arith.select %19, %24, %25 : vector<8x8xi1>, vector<8x8xf32>
    %c0_14 = arith.constant 0 : index
    %c0_15 = arith.constant 0 : index
    %27 = vector.load %arg9[%c0_14, %c0_15] : memref<8x4xf32, #tpu.memory_space<vmem>>, vector<8x1xf32>
    %cst_16 = arith.constant dense<0xFF800000> : vector<8xf32>
    %28 = vector.multi_reduction <maximumf>, %26, %cst_16 [1] : vector<8x8xf32> to vector<8xf32>
    %29 = vector.shape_cast %28 : vector<8xf32> to vector<8x1xf32>
    %30 = arith.maximumf %27, %29 : vector<8x1xf32>
    %31 = arith.subf %27, %30 : vector<8x1xf32>
    %32 = math.exp %31 : vector<8x1xf32>
    %33 = vector.broadcast %30 : vector<8x1xf32> to vector<8x8xf32>
    %34 = arith.subf %26, %33 : vector<8x8xf32>
    %35 = math.exp %34 : vector<8x8xf32>
    %c0_17 = arith.constant 0 : index
    %c0_18 = arith.constant 0 : index
    %36 = vector.load %arg10[%c0_17, %c0_18] : memref<8x4xf32, #tpu.memory_space<vmem>>, vector<8x1xf32>
    %37 = arith.mulf %32, %36 : vector<8x1xf32>
    %cst_19 = arith.constant dense<0.000000e+00> : vector<8xf32>
    %38 = vector.multi_reduction <add>, %35, %cst_19 [1] : vector<8x8xf32> to vector<8xf32>
    %39 = vector.shape_cast %38 : vector<8xf32> to vector<8x1xf32>
    %40 = arith.addf %37, %39 : vector<8x1xf32>
    %c0_20 = arith.constant 0 : index
    %c0_21 = arith.constant 0 : index
    %41 = vector.load %arg10[%c0_20, %c0_21] : memref<8x4xf32, #tpu.memory_space<vmem>>, vector<8x1xf32>
    tpu.vector_store %arg10[%c0_20, %c0_21], %40 {strides = array<i32>} : memref<8x4xf32, #tpu.memory_space<vmem>>, vector<8x1xf32>,
    %c0_22 = arith.constant 0 : index
    %c0_23 = arith.constant 0 : index
    %42 = vector.load %arg11[%c0_22, %c0_23] : memref<8x32xf32, #tpu.memory_space<vmem>>, vector<8x8xf32>
    %43 = vector.broadcast %32 : vector<8x1xf32> to vector<8x8xf32>
    %44 = arith.mulf %43, %42 : vector<8x8xf32>
    %45 = arith.truncf %35 : vector<8x8xf32> to vector<8x8xbf16>
    %46 = vector.extract_strided_slice %8 {offsets = [0, 0], sizes = [8, 8], strides = [1, 1]} : vector<8x32xbf16> to vector<8x8xbf16>
    %cst_24 = arith.constant dense<0.000000e+00> : vector<8x8xf32>
    %47 = tpu.matmul %45, %46, %cst_24 {dimension_numbers = #tpu.dot_dimension_numbers<[1], [0], [0], [1], [0, 0, 1, 1], [], []>} : vector<8x8xbf16>, vector<8x8xbf16>, vector<8x8xf32> -> vector<8x8xf32>
    %48 = arith.addf %44, %47 : vector<8x8xf32>
    %c0_25 = arith.constant 0 : index
    %c0_26 = arith.constant 0 : index
    %49 = vector.load %arg11[%c0_25, %c0_26] : memref<8x32xf32, #tpu.memory_space<vmem>>, vector<8x8xf32>
    tpu.vector_store %arg11[%c0_25, %c0_26], %48 {strides = array<i32>} : memref<8x32xf32, #tpu.memory_space<vmem>>, vector<8x8xf32>,
    %c0_27 = arith.constant 0 : index
    %c0_28 = arith.constant 0 : index
    %50 = vector.load %arg9[%c0_27, %c0_28] : memref<8x4xf32, #tpu.memory_space<vmem>>, vector<8x1xf32>
    tpu.vector_store %arg9[%c0_27, %c0_28], %30 {strides = array<i32>} : memref<8x4xf32, #tpu.memory_space<vmem>>, vector<8x1xf32>,
    %51 = vector.extract_strided_slice %4 {offsets = [0, 8], sizes = [8, 8], strides = [1, 1]} : vector<8x32xbf16> to vector<8x8xbf16>
    %52 = vector.extract_strided_slice %6 {offsets = [0, 8], sizes = [8, 8], strides = [1, 1]} : vector<8x32xbf16> to vector<8x8xbf16>
    %cst_29 = arith.constant dense<0.000000e+00> : vector<8x8xf32>
    %53 = tpu.matmul %51, %52, %cst_29 {dimension_numbers = #tpu.dot_dimension_numbers<[1], [1], [0], [0], [0, 0, 1, 0], [], []>} : vector<8x8xbf16>, vector<8x8xbf16>, vector<8x8xf32> -> vector<8x8xf32>
    %54 = vector.broadcast %10 : vector<1x8xf32> to vector<8x8xf32>
    %55 = arith.addf %53, %54 : vector<8x8xf32>
    %cst_30 = arith.constant -1.000000e+30 : f32
    %56 = vector.broadcast %cst_30 : f32 to vector<8x8xf32>
    %57 = arith.select %19, %55, %56 : vector<8x8xi1>, vector<8x8xf32>
    %c0_31 = arith.constant 0 : index
    %c1 = arith.constant 1 : index
    %58 = vector.load %arg9[%c0_31, %c1] : memref<8x4xf32, #tpu.memory_space<vmem>>, vector<8x1xf32>
    %cst_32 = arith.constant dense<0xFF800000> : vector<8xf32>
    %59 = vector.multi_reduction <maximumf>, %57, %cst_32 [1] : vector<8x8xf32> to vector<8xf32>
    %60 = vector.shape_cast %59 : vector<8xf32> to vector<8x1xf32>
    %61 = arith.maximumf %58, %60 : vector<8x1xf32>
    %62 = arith.subf %58, %61 : vector<8x1xf32>
    %63 = math.exp %62 : vector<8x1xf32>
    %64 = vector.broadcast %61 : vector<8x1xf32> to vector<8x8xf32>
    %65 = arith.subf %57, %64 : vector<8x8xf32>
    %66 = math.exp %65 : vector<8x8xf32>
    %c0_33 = arith.constant 0 : index
    %c1_34 = arith.constant 1 : index
    %67 = vector.load %arg10[%c0_33, %c1_34] : memref<8x4xf32, #tpu.memory_space<vmem>>, vector<8x1xf32>
    %68 = arith.mulf %63, %67 : vector<8x1xf32>
    %cst_35 = arith.constant dense<0.000000e+00> : vector<8xf32>
    %69 = vector.multi_reduction <add>, %66, %cst_35 [1] : vector<8x8xf32> to vector<8xf32>
    %70 = vector.shape_cast %69 : vector<8xf32> to vector<8x1xf32>
    %71 = arith.addf %68, %70 : vector<8x1xf32>
    %c0_36 = arith.constant 0 : index
    %c1_37 = arith.constant 1 : index
    %72 = vector.load %arg10[%c0_36, %c1_37] : memref<8x4xf32, #tpu.memory_space<vmem>>, vector<8x1xf32>
    tpu.vector_store %arg10[%c0_36, %c1_37], %71 {strides = array<i32>} : memref<8x4xf32, #tpu.memory_space<vmem>>, vector<8x1xf32>,
    %c0_38 = arith.constant 0 : index
    %c8 = arith.constant 8 : index
    %73 = vector.load %arg11[%c0_38, %c8] : memref<8x32xf32, #tpu.memory_space<vmem>>, vector<8x8xf32>
    %74 = vector.broadcast %63 : vector<8x1xf32> to vector<8x8xf32>
    %75 = arith.mulf %74, %73 : vector<8x8xf32>
    %76 = arith.truncf %66 : vector<8x8xf32> to vector<8x8xbf16>
    %77 = vector.extract_strided_slice %8 {offsets = [0, 8], sizes = [8, 8], strides = [1, 1]} : vector<8x32xbf16> to vector<8x8xbf16>
    %cst_39 = arith.constant dense<0.000000e+00> : vector<8x8xf32>
    %78 = tpu.matmul %76, %77, %cst_39 {dimension_numbers = #tpu.dot_dimension_numbers<[1], [0], [0], [1], [0, 0, 1, 1], [], []>} : vector<8x8xbf16>, vector<8x8xbf16>, vector<8x8xf32> -> vector<8x8xf32>
    %79 = arith.addf %75, %78 : vector<8x8xf32>
    %c0_40 = arith.constant 0 : index
    %c8_41 = arith.constant 8 : index
    %80 = vector.load %arg11[%c0_40, %c8_41] : memref<8x32xf32, #tpu.memory_space<vmem>>, vector<8x8xf32>
    tpu.vector_store %arg11[%c0_40, %c8_41], %79 {strides = array<i32>} : memref<8x32xf32, #tpu.memory_space<vmem>>, vector<8x8xf32>,
    %c0_42 = arith.constant 0 : index
    %c1_43 = arith.constant 1 : index
    %81 = vector.load %arg9[%c0_42, %c1_43] : memref<8x4xf32, #tpu.memory_space<vmem>>, vector<8x1xf32>
    tpu.vector_store %arg9[%c0_42, %c1_43], %61 {strides = array<i32>} : memref<8x4xf32, #tpu.memory_space<vmem>>, vector<8x1xf32>,
    %82 = vector.extract_strided_slice %4 {offsets = [0, 16], sizes = [8, 8], strides = [1, 1]} : vector<8x32xbf16> to vector<8x8xbf16>
    %83 = vector.extract_strided_slice %6 {offsets = [0, 16], sizes = [8, 8], strides = [1, 1]} : vector<8x32xbf16> to vector<8x8xbf16>
    %cst_44 = arith.constant dense<0.000000e+00> : vector<8x8xf32>
    %84 = tpu.matmul %82, %83, %cst_44 {dimension_numbers = #tpu.dot_dimension_numbers<[1], [1], [0], [0], [0, 0, 1, 0], [], []>} : vector<8x8xbf16>, vector<8x8xbf16>, vector<8x8xf32> -> vector<8x8xf32>
    %85 = vector.broadcast %10 : vector<1x8xf32> to vector<8x8xf32>
    %86 = arith.addf %84, %85 : vector<8x8xf32>
    %cst_45 = arith.constant -1.000000e+30 : f32
    %87 = vector.broadcast %cst_45 : f32 to vector<8x8xf32>
    %88 = arith.select %19, %86, %87 : vector<8x8xi1>, vector<8x8xf32>
    %c0_46 = arith.constant 0 : index
    %c2 = arith.constant 2 : index
    %89 = vector.load %arg9[%c0_46, %c2] : memref<8x4xf32, #tpu.memory_space<vmem>>, vector<8x1xf32>
    %cst_47 = arith.constant dense<0xFF800000> : vector<8xf32>
    %90 = vector.multi_reduction <maximumf>, %88, %cst_47 [1] : vector<8x8xf32> to vector<8xf32>
    %91 = vector.shape_cast %90 : vector<8xf32> to vector<8x1xf32>
    %92 = arith.maximumf %89, %91 : vector<8x1xf32>
    %93 = arith.subf %89, %92 : vector<8x1xf32>
    %94 = math.exp %93 : vector<8x1xf32>
    %95 = vector.broadcast %92 : vector<8x1xf32> to vector<8x8xf32>
    %96 = arith.subf %88, %95 : vector<8x8xf32>
    %97 = math.exp %96 : vector<8x8xf32>
    %c0_48 = arith.constant 0 : index
    %c2_49 = arith.constant 2 : index
    %98 = vector.load %arg10[%c0_48, %c2_49] : memref<8x4xf32, #tpu.memory_space<vmem>>, vector<8x1xf32>
    %99 = arith.mulf %94, %98 : vector<8x1xf32>
    %cst_50 = arith.constant dense<0.000000e+00> : vector<8xf32>
    %100 = vector.multi_reduction <add>, %97, %cst_50 [1] : vector<8x8xf32> to vector<8xf32>
    %101 = vector.shape_cast %100 : vector<8xf32> to vector<8x1xf32>
    %102 = arith.addf %99, %101 : vector<8x1xf32>
    %c0_51 = arith.constant 0 : index
    %c2_52 = arith.constant 2 : index
    %103 = vector.load %arg10[%c0_51, %c2_52] : memref<8x4xf32, #tpu.memory_space<vmem>>, vector<8x1xf32>
    tpu.vector_store %arg10[%c0_51, %c2_52], %102 {strides = array<i32>} : memref<8x4xf32, #tpu.memory_space<vmem>>, vector<8x1xf32>,
    %c0_53 = arith.constant 0 : index
    %c16 = arith.constant 16 : index
    %104 = vector.load %arg11[%c0_53, %c16] : memref<8x32xf32, #tpu.memory_space<vmem>>, vector<8x8xf32>
    %105 = vector.broadcast %94 : vector<8x1xf32> to vector<8x8xf32>
    %106 = arith.mulf %105, %104 : vector<8x8xf32>
    %107 = arith.truncf %97 : vector<8x8xf32> to vector<8x8xbf16>
    %108 = vector.extract_strided_slice %8 {offsets = [0, 16], sizes = [8, 8], strides = [1, 1]} : vector<8x32xbf16> to vector<8x8xbf16>
    %cst_54 = arith.constant dense<0.000000e+00> : vector<8x8xf32>
    %109 = tpu.matmul %107, %108, %cst_54 {dimension_numbers = #tpu.dot_dimension_numbers<[1], [0], [0], [1], [0, 0, 1, 1], [], []>} : vector<8x8xbf16>, vector<8x8xbf16>, vector<8x8xf32> -> vector<8x8xf32>
    %110 = arith.addf %106, %109 : vector<8x8xf32>
    %c0_55 = arith.constant 0 : index
    %c16_56 = arith.constant 16 : index
    %111 = vector.load %arg11[%c0_55, %c16_56] : memref<8x32xf32, #tpu.memory_space<vmem>>, vector<8x8xf32>
    tpu.vector_store %arg11[%c0_55, %c16_56], %110 {strides = array<i32>} : memref<8x32xf32, #tpu.memory_space<vmem>>, vector<8x8xf32>,
    %c0_57 = arith.constant 0 : index
    %c2_58 = arith.constant 2 : index
    %112 = vector.load %arg9[%c0_57, %c2_58] : memref<8x4xf32, #tpu.memory_space<vmem>>, vector<8x1xf32>
    tpu.vector_store %arg9[%c0_57, %c2_58], %92 {strides = array<i32>} : memref<8x4xf32, #tpu.memory_space<vmem>>, vector<8x1xf32>,
    %113 = vector.extract_strided_slice %4 {offsets = [0, 24], sizes = [8, 8], strides = [1, 1]} : vector<8x32xbf16> to vector<8x8xbf16>
    %114 = vector.extract_strided_slice %6 {offsets = [0, 24], sizes = [8, 8], strides = [1, 1]} : vector<8x32xbf16> to vector<8x8xbf16>
    %cst_59 = arith.constant dense<0.000000e+00> : vector<8x8xf32>
    %115 = tpu.matmul %113, %114, %cst_59 {dimension_numbers = #tpu.dot_dimension_numbers<[1], [1], [0], [0], [0, 0, 1, 0], [], []>} : vector<8x8xbf16>, vector<8x8xbf16>, vector<8x8xf32> -> vector<8x8xf32>
    %116 = vector.broadcast %10 : vector<1x8xf32> to vector<8x8xf32>
    %117 = arith.addf %115, %116 : vector<8x8xf32>
    %cst_60 = arith.constant -1.000000e+30 : f32
    %118 = vector.broadcast %cst_60 : f32 to vector<8x8xf32>
    %119 = arith.select %19, %117, %118 : vector<8x8xi1>, vector<8x8xf32>
    %c0_61 = arith.constant 0 : index
    %c3 = arith.constant 3 : index
    %120 = vector.load %arg9[%c0_61, %c3] : memref<8x4xf32, #tpu.memory_space<vmem>>, vector<8x1xf32>
    %cst_62 = arith.constant dense<0xFF800000> : vector<8xf32>
    %121 = vector.multi_reduction <maximumf>, %119, %cst_62 [1] : vector<8x8xf32> to vector<8xf32>
    %122 = vector.shape_cast %121 : vector<8xf32> to vector<8x1xf32>
    %123 = arith.maximumf %120, %122 : vector<8x1xf32>
    %124 = arith.subf %120, %123 : vector<8x1xf32>
    %125 = math.exp %124 : vector<8x1xf32>
    %126 = vector.broadcast %123 : vector<8x1xf32> to vector<8x8xf32>
    %127 = arith.subf %119, %126 : vector<8x8xf32>
    %128 = math.exp %127 : vector<8x8xf32>
    %c0_63 = arith.constant 0 : index
    %c3_64 = arith.constant 3 : index
    %129 = vector.load %arg10[%c0_63, %c3_64] : memref<8x4xf32, #tpu.memory_space<vmem>>, vector<8x1xf32>
    %130 = arith.mulf %125, %129 : vector<8x1xf32>
    %cst_65 = arith.constant dense<0.000000e+00> : vector<8xf32>
    %131 = vector.multi_reduction <add>, %128, %cst_65 [1] : vector<8x8xf32> to vector<8xf32>
    %132 = vector.shape_cast %131 : vector<8xf32> to vector<8x1xf32>
    %133 = arith.addf %130, %132 : vector<8x1xf32>
    %c0_66 = arith.constant 0 : index
    %c3_67 = arith.constant 3 : index
    %134 = vector.load %arg10[%c0_66, %c3_67] : memref<8x4xf32, #tpu.memory_space<vmem>>, vector<8x1xf32>
    tpu.vector_store %arg10[%c0_66, %c3_67], %133 {strides = array<i32>} : memref<8x4xf32, #tpu.memory_space<vmem>>, vector<8x1xf32>,
    %c0_68 = arith.constant 0 : index
    %c24 = arith.constant 24 : index
    %135 = vector.load %arg11[%c0_68, %c24] : memref<8x32xf32, #tpu.memory_space<vmem>>, vector<8x8xf32>
    %136 = vector.broadcast %125 : vector<8x1xf32> to vector<8x8xf32>
    %137 = arith.mulf %136, %135 : vector<8x8xf32>
    %138 = arith.truncf %128 : vector<8x8xf32> to vector<8x8xbf16>
    %139 = vector.extract_strided_slice %8 {offsets = [0, 24], sizes = [8, 8], strides = [1, 1]} : vector<8x32xbf16> to vector<8x8xbf16>
    %cst_69 = arith.constant dense<0.000000e+00> : vector<8x8xf32>
    %140 = tpu.matmul %138, %139, %cst_69 {dimension_numbers = #tpu.dot_dimension_numbers<[1], [0], [0], [1], [0, 0, 1, 1], [], []>} : vector<8x8xbf16>, vector<8x8xbf16>, vector<8x8xf32> -> vector<8x8xf32>
    %141 = arith.addf %137, %140 : vector<8x8xf32>
    %c0_70 = arith.constant 0 : index
    %c24_71 = arith.constant 24 : index
    %142 = vector.load %arg11[%c0_70, %c24_71] : memref<8x32xf32, #tpu.memory_space<vmem>>, vector<8x8xf32>
    tpu.vector_store %arg11[%c0_70, %c24_71], %141 {strides = array<i32>} : memref<8x32xf32, #tpu.memory_space<vmem>>, vector<8x8xf32>,
    %c0_72 = arith.constant 0 : index
    %c3_73 = arith.constant 3 : index
    %143 = vector.load %arg9[%c0_72, %c3_73] : memref<8x4xf32, #tpu.memory_space<vmem>>, vector<8x1xf32>
    tpu.vector_store %arg9[%c0_72, %c3_73], %123 {strides = array<i32>} : memref<8x4xf32, #tpu.memory_space<vmem>>, vector<8x1xf32>,
    %c0_i32_74 = arith.constant 0 : i32
    %144 = arith.cmpi eq, %arg3, %c0_i32_74 : i32
    %145 = arith.extui %144 : i1 to i32
    %c0_i32_75 = arith.constant 0 : i32
    %146 = arith.cmpi ne, %145, %c0_i32_75 : i32
    scf.if %146 {
      %c0_76 = arith.constant 0 : index
      %c0_77 = arith.constant 0 : index
      %147 = vector.load %arg11[%c0_76, %c0_77] : memref<8x32xf32, #tpu.memory_space<vmem>>, vector<8x8xf32>
      %c0_78 = arith.constant 0 : index
      %c0_79 = arith.constant 0 : index
      %148 = vector.load %arg10[%c0_78, %c0_79] : memref<8x4xf32, #tpu.memory_space<vmem>>, vector<8x1xf32>
      %149 = tpu.reciprocal %148 {approx = true} : vector<8x1xf32> -> vector<8x1xf32>
      %150 = vector.broadcast %149 : vector<8x1xf32> to vector<8x8xf32>
      %151 = arith.mulf %147, %150 : vector<8x8xf32>
      %c0_80 = arith.constant 0 : index
      %c0_81 = arith.constant 0 : index
      %152 = vector.load %arg11[%c0_80, %c0_81] : memref<8x32xf32, #tpu.memory_space<vmem>>, vector<8x8xf32>
      tpu.vector_store %arg11[%c0_80, %c0_81], %151 {strides = array<i32>} : memref<8x32xf32, #tpu.memory_space<vmem>>, vector<8x8xf32>,
      %c0_82 = arith.constant 0 : index
      %c8_83 = arith.constant 8 : index
      %153 = vector.load %arg11[%c0_82, %c8_83] : memref<8x32xf32, #tpu.memory_space<vmem>>, vector<8x8xf32>
      %c0_84 = arith.constant 0 : index
      %c1_85 = arith.constant 1 : index
      %154 = vector.load %arg10[%c0_84, %c1_85] : memref<8x4xf32, #tpu.memory_space<vmem>>, vector<8x1xf32>
      %155 = tpu.reciprocal %154 {approx = true} : vector<8x1xf32> -> vector<8x1xf32>
      %156 = vector.broadcast %155 : vector<8x1xf32> to vector<8x8xf32>
      %157 = arith.mulf %153, %156 : vector<8x8xf32>
      %c0_86 = arith.constant 0 : index
      %c8_87 = arith.constant 8 : index
      %158 = vector.load %arg11[%c0_86, %c8_87] : memref<8x32xf32, #tpu.memory_space<vmem>>, vector<8x8xf32>
      tpu.vector_store %arg11[%c0_86, %c8_87], %157 {strides = array<i32>} : memref<8x32xf32, #tpu.memory_space<vmem>>, vector<8x8xf32>,
      %c0_88 = arith.constant 0 : index
      %c16_89 = arith.constant 16 : index
      %159 = vector.load %arg11[%c0_88, %c16_89] : memref<8x32xf32, #tpu.memory_space<vmem>>, vector<8x8xf32>
      %c0_90 = arith.constant 0 : index
      %c2_91 = arith.constant 2 : index
      %160 = vector.load %arg10[%c0_90, %c2_91] : memref<8x4xf32, #tpu.memory_space<vmem>>, vector<8x1xf32>
      %161 = tpu.reciprocal %160 {approx = true} : vector<8x1xf32> -> vector<8x1xf32>
      %162 = vector.broadcast %161 : vector<8x1xf32> to vector<8x8xf32>
      %163 = arith.mulf %159, %162 : vector<8x8xf32>
      %c0_92 = arith.constant 0 : index
      %c16_93 = arith.constant 16 : index
      %164 = vector.load %arg11[%c0_92, %c16_93] : memref<8x32xf32, #tpu.memory_space<vmem>>, vector<8x8xf32>
      tpu.vector_store %arg11[%c0_92, %c16_93], %163 {strides = array<i32>} : memref<8x32xf32, #tpu.memory_space<vmem>>, vector<8x8xf32>,
      %c0_94 = arith.constant 0 : index
      %c24_95 = arith.constant 24 : index
      %165 = vector.load %arg11[%c0_94, %c24_95] : memref<8x32xf32, #tpu.memory_space<vmem>>, vector<8x8xf32>
      %c0_96 = arith.constant 0 : index
      %c3_97 = arith.constant 3 : index
      %166 = vector.load %arg10[%c0_96, %c3_97] : memref<8x4xf32, #tpu.memory_space<vmem>>, vector<8x1xf32>
      %167 = tpu.reciprocal %166 {approx = true} : vector<8x1xf32> -> vector<8x1xf32>
      %168 = vector.broadcast %167 : vector<8x1xf32> to vector<8x8xf32>
      %169 = arith.mulf %165, %168 : vector<8x8xf32>
      %c0_98 = arith.constant 0 : index
      %c24_99 = arith.constant 24 : index
      %170 = vector.load %arg11[%c0_98, %c24_99] : memref<8x32xf32, #tpu.memory_space<vmem>>, vector<8x8xf32>
      tpu.vector_store %arg11[%c0_98, %c24_99], %169 {strides = array<i32>} : memref<8x32xf32, #tpu.memory_space<vmem>>, vector<8x8xf32>,
      %c0_100 = arith.constant 0 : index
      %c0_101 = arith.constant 0 : index
      %171 = vector.load %arg11[%c0_100, %c0_101] : memref<8x32xf32, #tpu.memory_space<vmem>>, vector<8x32xf32>
      %172 = arith.truncf %171 : vector<8x32xf32> to vector<8x32xbf16>
      %c0_102 = arith.constant 0 : index
      %c0_103 = arith.constant 0 : index
      %c0_104 = arith.constant 0 : index
      %173 = vector.load %arg8[%c0_102, %c0_103, %c0_104] : memref<1x8x32xbf16, #tpu.memory_space<vmem>>, vector<1x8x32xbf16>
      %174 = vector.shape_cast %173 : vector<1x8x32xbf16> to vector<8x32xbf16>
      %175 = vector.shape_cast %172 : vector<8x32xbf16> to vector<1x8x32xbf16>
      tpu.vector_store %arg8[%c0_102, %c0_103, %c0_104], %175 {strides = array<i32>} : memref<1x8x32xbf16, #tpu.memory_space<vmem>>, vector<1x8x32xbf16>,
    } else {
    }
    return
  }
  func.func @transform_0(%arg0: i32, %arg1: i32, %arg2: i32, %arg3: i32) -> (i32, i32, i32) {
    %c0_i32 = arith.constant 0 : i32
    %c0_i32_0 = arith.constant 0 : i32
    return %arg0, %c0_i32, %arg3 : i32, i32, i32
  }
  func.func @transform_1(%arg0: i32, %arg1: i32, %arg2: i32, %arg3: i32) -> (i32, i32, i32) {
    %c0_i32 = arith.constant 0 : i32
    %0 = arith.addi %c0_i32, %arg1 : i32
    %c0_i32_0 = arith.constant 0 : i32
    return %arg0, %arg2, %0 : i32, i32, i32
  }
  func.func @transform_2(%arg0: i32, %arg1: i32, %arg2: i32, %arg3: i32) -> (i32, i32, i32) {
    %c0_i32 = arith.constant 0 : i32
    %0 = arith.addi %c0_i32, %arg1 : i32
    %c0_i32_0 = arith.constant 0 : i32
    return %arg0, %arg3, %0 : i32, i32, i32
  }
  func.func @transform_3(%arg0: i32, %arg1: i32, %arg2: i32, %arg3: i32) -> (i32, i32, i32) {
    %c0_i32 = arith.constant 0 : i32
    %0 = arith.addi %c0_i32, %arg1 : i32
    %c0_i32_0 = arith.constant 0 : i32
    return %arg0, %arg3, %0 : i32, i32, i32
  }
  func.func @transform_4(%arg0: i32, %arg1: i32, %arg2: i32, %arg3: i32) -> (i32, i32, i32) {
    %c0_i32 = arith.constant 0 : i32
    return %arg0, %arg2, %arg1 : i32, i32, i32
  }
}

module attributes {stable_mosaic.version = 11 : i64} {
  func.func @_linear_kernel(%arg0: i32, %arg1: i32, %arg2: i32, %arg3: memref<16x32xf32, #tpu.memory_space<vmem>>, %arg4: memref<32x32xbf16, #tpu.memory_space<vmem>>, %arg5: memref<1x32xf32, #tpu.memory_space<vmem>>, %arg6: memref<16x32xbf16, #tpu.memory_space<vmem>>, %arg7: memref<16x32xf32, #tpu.memory_space<vmem>>) attributes {dimension_semantics = [#tpu.dimension_semantics<parallel>, #tpu.dimension_semantics<parallel>, #tpu.dimension_semantics<arbitrary>], iteration_bounds = array<i64: 1, 1, 1>, scalar_prefetch = 0 : i64, scratch_operands = 1 : i64, tpu.core_type = #tpu.core_type<tc>, window_params = [{transform_indices = @transform_0, window_bounds = array<i64: 16, 32>}, {transform_indices = @transform_1, window_bounds = array<i64: 32, 32>}, {transform_indices = @transform_2, window_bounds = array<i64: 1, 32>}, {transform_indices = @transform_3, window_bounds = array<i64: 16, 32>}]} {
    %c0_i32 = arith.constant 0 : i32
    %0 = arith.cmpi eq, %arg2, %c0_i32 : i32
    %1 = arith.extui %0 : i1 to i32
    %c0_i32_0 = arith.constant 0 : i32
    %2 = arith.cmpi ne, %1, %c0_i32_0 : i32
    scf.if %2 {
      %cst_10 = arith.constant 0.000000e+00 : f32
      %13 = vector.broadcast %cst_10 : f32 to vector<16x32xf32>
      %c0_11 = arith.constant 0 : index
      %c0_12 = arith.constant 0 : index
      %14 = vector.load %arg7[%c0_11, %c0_12] : memref<16x32xf32, #tpu.memory_space<vmem>>, vector<16x32xf32>
      tpu.vector_store %arg7[%c0_11, %c0_12], %13 {strides = array<i32>} : memref<16x32xf32, #tpu.memory_space<vmem>>, vector<16x32xf32>,
    } else {
    }
    %c0 = arith.constant 0 : index
    %c0_1 = arith.constant 0 : index
    %3 = vector.load %arg7[%c0, %c0_1] : memref<16x32xf32, #tpu.memory_space<vmem>>, vector<16x32xf32>
    %c0_2 = arith.constant 0 : index
    %c0_3 = arith.constant 0 : index
    %4 = vector.load %arg3[%c0_2, %c0_3] : memref<16x32xf32, #tpu.memory_space<vmem>>, vector<16x32xf32>
    %5 = arith.truncf %4 : vector<16x32xf32> to vector<16x32xbf16>
    %c0_4 = arith.constant 0 : index
    %c0_5 = arith.constant 0 : index
    %6 = vector.load %arg4[%c0_4, %c0_5] : memref<32x32xbf16, #tpu.memory_space<vmem>>, vector<32x32xbf16>
    %cst = arith.constant dense<0.000000e+00> : vector<16x32xf32>
    %7 = tpu.matmul %5, %6, %cst {dimension_numbers = #tpu.dot_dimension_numbers<[1], [0], [0], [1], [0, 0, 1, 1], [], []>} : vector<16x32xbf16>, vector<32x32xbf16>, vector<16x32xf32> -> vector<16x32xf32>
    %8 = arith.addf %3, %7 : vector<16x32xf32>
    %c0_6 = arith.constant 0 : index
    %c0_7 = arith.constant 0 : index
    %9 = vector.load %arg7[%c0_6, %c0_7] : memref<16x32xf32, #tpu.memory_space<vmem>>, vector<16x32xf32>
    tpu.vector_store %arg7[%c0_6, %c0_7], %8 {strides = array<i32>} : memref<16x32xf32, #tpu.memory_space<vmem>>, vector<16x32xf32>,
    %c0_i32_8 = arith.constant 0 : i32
    %10 = arith.cmpi eq, %arg2, %c0_i32_8 : i32
    %11 = arith.extui %10 : i1 to i32
    %c0_i32_9 = arith.constant 0 : i32
    %12 = arith.cmpi ne, %11, %c0_i32_9 : i32
    scf.if %12 {
      %c0_10 = arith.constant 0 : index
      %c0_11 = arith.constant 0 : index
      %13 = vector.load %arg7[%c0_10, %c0_11] : memref<16x32xf32, #tpu.memory_space<vmem>>, vector<16x32xf32>
      %c0_12 = arith.constant 0 : index
      %c0_13 = arith.constant 0 : index
      %14 = vector.load %arg5[%c0_12, %c0_13] : memref<1x32xf32, #tpu.memory_space<vmem>>, vector<1x32xf32>
      %15 = vector.broadcast %14 : vector<1x32xf32> to vector<16x32xf32>
      %16 = arith.addf %13, %15 : vector<16x32xf32>
      %17 = arith.truncf %16 : vector<16x32xf32> to vector<16x32xbf16>
      %c0_14 = arith.constant 0 : index
      %c0_15 = arith.constant 0 : index
      %18 = vector.load %arg6[%c0_14, %c0_15] : memref<16x32xbf16, #tpu.memory_space<vmem>>, vector<16x32xbf16>
      tpu.vector_store %arg6[%c0_14, %c0_15], %17 {strides = array<i32>} : memref<16x32xbf16, #tpu.memory_space<vmem>>, vector<16x32xbf16>,
    } else {
    }
    return
  }
  func.func @transform_0(%arg0: i32, %arg1: i32, %arg2: i32) -> (i32, i32) {
    %c0_i32 = arith.constant 0 : i32
    return %arg0, %arg2 : i32, i32
  }
  func.func @transform_1(%arg0: i32, %arg1: i32, %arg2: i32) -> (i32, i32) {
    %c0_i32 = arith.constant 0 : i32
    return %arg2, %arg1 : i32, i32
  }
  func.func @transform_2(%arg0: i32, %arg1: i32, %arg2: i32) -> (i32, i32) {
    %c0_i32 = arith.constant 0 : i32
    %c0_i32_0 = arith.constant 0 : i32
    return %c0_i32, %arg1 : i32, i32
  }
  func.func @transform_3(%arg0: i32, %arg1: i32, %arg2: i32) -> (i32, i32) {
    %c0_i32 = arith.constant 0 : i32
    return %arg0, %arg1 : i32, i32
  }
}

module attributes {stable_mosaic.version = 11 : i64} {
  func.func @_linear_kernel(%arg0: i32, %arg1: i32, %arg2: i32, %arg3: memref<16x32xf32, #tpu.memory_space<vmem>>, %arg4: memref<32x128xbf16, #tpu.memory_space<vmem>>, %arg5: memref<1x128xf32, #tpu.memory_space<vmem>>, %arg6: memref<16x128xf32, #tpu.memory_space<vmem>>, %arg7: memref<16x128xf32, #tpu.memory_space<vmem>>) attributes {dimension_semantics = [#tpu.dimension_semantics<parallel>, #tpu.dimension_semantics<parallel>, #tpu.dimension_semantics<arbitrary>], iteration_bounds = array<i64: 1, 1, 1>, scalar_prefetch = 0 : i64, scratch_operands = 1 : i64, tpu.core_type = #tpu.core_type<tc>, window_params = [{transform_indices = @transform_0, window_bounds = array<i64: 16, 32>}, {transform_indices = @transform_1, window_bounds = array<i64: 32, 128>}, {transform_indices = @transform_2, window_bounds = array<i64: 1, 128>}, {transform_indices = @transform_3, window_bounds = array<i64: 16, 128>}]} {
    %c0_i32 = arith.constant 0 : i32
    %0 = arith.cmpi eq, %arg2, %c0_i32 : i32
    %1 = arith.extui %0 : i1 to i32
    %c0_i32_0 = arith.constant 0 : i32
    %2 = arith.cmpi ne, %1, %c0_i32_0 : i32
    scf.if %2 {
      %cst_10 = arith.constant 0.000000e+00 : f32
      %13 = vector.broadcast %cst_10 : f32 to vector<16x128xf32>
      %c0_11 = arith.constant 0 : index
      %c0_12 = arith.constant 0 : index
      %14 = vector.load %arg7[%c0_11, %c0_12] : memref<16x128xf32, #tpu.memory_space<vmem>>, vector<16x128xf32>
      tpu.vector_store %arg7[%c0_11, %c0_12], %13 {strides = array<i32>} : memref<16x128xf32, #tpu.memory_space<vmem>>, vector<16x128xf32>,
    } else {
    }
    %c0 = arith.constant 0 : index
    %c0_1 = arith.constant 0 : index
    %3 = vector.load %arg7[%c0, %c0_1] : memref<16x128xf32, #tpu.memory_space<vmem>>, vector<16x128xf32>
    %c0_2 = arith.constant 0 : index
    %c0_3 = arith.constant 0 : index
    %4 = vector.load %arg3[%c0_2, %c0_3] : memref<16x32xf32, #tpu.memory_space<vmem>>, vector<16x32xf32>
    %5 = arith.truncf %4 : vector<16x32xf32> to vector<16x32xbf16>
    %c0_4 = arith.constant 0 : index
    %c0_5 = arith.constant 0 : index
    %6 = vector.load %arg4[%c0_4, %c0_5] : memref<32x128xbf16, #tpu.memory_space<vmem>>, vector<32x128xbf16>
    %cst = arith.constant dense<0.000000e+00> : vector<16x128xf32>
    %7 = tpu.matmul %5, %6, %cst {dimension_numbers = #tpu.dot_dimension_numbers<[1], [0], [0], [1], [0, 0, 1, 1], [], []>} : vector<16x32xbf16>, vector<32x128xbf16>, vector<16x128xf32> -> vector<16x128xf32>
    %8 = arith.addf %3, %7 : vector<16x128xf32>
    %c0_6 = arith.constant 0 : index
    %c0_7 = arith.constant 0 : index
    %9 = vector.load %arg7[%c0_6, %c0_7] : memref<16x128xf32, #tpu.memory_space<vmem>>, vector<16x128xf32>
    tpu.vector_store %arg7[%c0_6, %c0_7], %8 {strides = array<i32>} : memref<16x128xf32, #tpu.memory_space<vmem>>, vector<16x128xf32>,
    %c0_i32_8 = arith.constant 0 : i32
    %10 = arith.cmpi eq, %arg2, %c0_i32_8 : i32
    %11 = arith.extui %10 : i1 to i32
    %c0_i32_9 = arith.constant 0 : i32
    %12 = arith.cmpi ne, %11, %c0_i32_9 : i32
    scf.if %12 {
      %c0_10 = arith.constant 0 : index
      %c0_11 = arith.constant 0 : index
      %13 = vector.load %arg7[%c0_10, %c0_11] : memref<16x128xf32, #tpu.memory_space<vmem>>, vector<16x128xf32>
      %c0_12 = arith.constant 0 : index
      %c0_13 = arith.constant 0 : index
      %14 = vector.load %arg5[%c0_12, %c0_13] : memref<1x128xf32, #tpu.memory_space<vmem>>, vector<1x128xf32>
      %15 = vector.broadcast %14 : vector<1x128xf32> to vector<16x128xf32>
      %16 = arith.addf %13, %15 : vector<16x128xf32>
      %c0_14 = arith.constant 0 : index
      %c0_15 = arith.constant 0 : index
      %17 = vector.load %arg6[%c0_14, %c0_15] : memref<16x128xf32, #tpu.memory_space<vmem>>, vector<16x128xf32>
      tpu.vector_store %arg6[%c0_14, %c0_15], %16 {strides = array<i32>} : memref<16x128xf32, #tpu.memory_space<vmem>>, vector<16x128xf32>,
    } else {
    }
    return
  }
  func.func @transform_0(%arg0: i32, %arg1: i32, %arg2: i32) -> (i32, i32) {
    %c0_i32 = arith.constant 0 : i32
    return %arg0, %arg2 : i32, i32
  }
  func.func @transform_1(%arg0: i32, %arg1: i32, %arg2: i32) -> (i32, i32) {
    %c0_i32 = arith.constant 0 : i32
    return %arg2, %arg1 : i32, i32
  }
  func.func @transform_2(%arg0: i32, %arg1: i32, %arg2: i32) -> (i32, i32) {
    %c0_i32 = arith.constant 0 : i32
    %c0_i32_0 = arith.constant 0 : i32
    return %c0_i32, %arg1 : i32, i32
  }
  func.func @transform_3(%arg0: i32, %arg1: i32, %arg2: i32) -> (i32, i32) {
    %c0_i32 = arith.constant 0 : i32
    return %arg0, %arg1 : i32, i32
  }
}

</mosaic_0001>

<llo_original>
// kernel: transformer_forward.37
$region0: #{transformer_forward.37}
  #allocation0 [shape = 'u32[]', space=smem, size = 0x4, offset = 0x4, fixed_abs, tag = 'smem constant byte address 0x4 - core index']
  #allocation1 [shape = 'u32[144,128]{1,0:T(1,128)}', space=vmem, size = 0x12000, scoped, tag = 'internal scratch']
  #allocation2 [shape = 'f32[16,32]{1,0:T(8,128)}', space=vmem, size = 0x2000, scoped, tag = 'scratch operand']
  %s0 = inlined_call_operand.vmem [shape: bf16[16,32], index: 0, kind: input, shape index: {}]
  %s1 = inlined_call_operand.vmem [shape: bf16[32,32], index: 1, kind: input, shape index: {}]
  %s2 = inlined_call_operand.vmem [shape: f32[1,32], index: 2, kind: input, shape index: {}]
  %s3 = inlined_call_operand.vmem [shape: bf16[16,32], index: 3, kind: output, shape index: {}]
  %s4 = sld [smem:[#allocation0]]
  $region30: #{transformer_forward.37} parent=0
    _
  %s6 = ssub.s32 1, %s4
  %s7 = scalar_select 0, %s6, %s4
  // Predicated region
  $region2: #{transformer_forward.37} parent=0 // pred_check
    _
  $region3: #{transformer_forward.37} parent=0 // pred_check_branch
    %9 = sbr.rel (0) target = $region5
  $region4: #{transformer_forward.37} parent=0 // pred_region
    _
  $region5: #{transformer_forward.37} parent=0 // pred_fallthru
    _
  // Predicated region
  $region6: #{transformer_forward.37} parent=0 // pred_check
    _
  $region7: #{transformer_forward.37} parent=0 // pred_check_branch
    %11 = sbr.rel (0) target = $region9
  $region8: #{transformer_forward.37} parent=0 // pred_region
    _
  $region9: #{transformer_forward.37} parent=0 // pred_fallthru
    _
  // Predicated region
  $region10: #{transformer_forward.37} parent=0 // pred_check
    _
  $region11: #{transformer_forward.37} parent=0 // pred_check_branch
    %13 = sbr.rel (0) target = $region13
  $region12: #{transformer_forward.37} parent=0 // pred_region
    _
  $region13: #{transformer_forward.37} parent=0 // pred_fallthru
    _
  %p15 = scmp.eq.s32.totalorder 0, 0
  // Predicated region
  $region14: #{transformer_forward.37} parent=0 // pred_check
    %p16 = pneg %p15
  $region15: #{transformer_forward.37} parent=0 // pred_check_branch
    %18 = sbr.rel (%p16) target = $region17
  $region16: #{transformer_forward.37} parent=0 // pred_region
    %vm19 = vcmask 261120
    %20 = vst.msk [vmem:[#allocation2] sm:$0xff] %vm19, 0.0
    %21 = vst.msk [vmem:[#allocation2 + $0x8] sm:$0xff] %vm19, 0.0
  $region17: #{transformer_forward.37} parent=0 // pred_fallthru
    _
  %v22 = vld [vmem:[#allocation2] sm:$0xff]
  %v23 = vld [vmem:[#allocation2 + $0x8] sm:$0xff]
  %v24 = vld [vmem:[%s0] sm:$0xf]
  %v25 = vld [vmem:[%s0 + $0x4] sm:$0xf]
  %v26 = vld [vmem:[%s1] sm:$0xf]
  %v27 = vld [vmem:[%s1 + $0x4] sm:$0xf]
  %v28 = vld [vmem:[%s1 + $0x8] sm:$0xf]
  %v29 = vld [vmem:[%s1 + $0xc] sm:$0xf]
  %v32 = vunpack.c.l.b16 %v24
  %v33 = vunpack.c.l.b16 %v25
  %v34 = vpack.c.b16 %v33, %v32
  %v39 = vunpack.c.l.b16 %v26
  %v40 = vunpack.c.l.b16 %v27
  %v41 = vunpack.c.l.b16 %v28
  %v42 = vunpack.c.l.b16 %v29
  %v43 = vpack.c.b16 %v40, %v39
  %v44 = vpack.c.b16 %v42, %v41
  %vm47 = vcmask 261120
  %v49 = vsel %vm47, %v34, 0
  %51 = vmatprep.subr.bf16.mxu0 0
  %52 = vmatpush1.bf16.msra.mxu0 0
  %53 = vmatprep.subr.bf16.mxu0 0
  %54 = vmatpush1.bf16.msra.mxu0 0
  %55 = vmatprep.subr.bf16.mxu0 0
  %56 = vmatpush1.bf16.msra.mxu0 0
  %57 = vmatprep.subr.bf16.mxu0 0
  %58 = vmatpush1.bf16.msra.mxu0 0
  %59 = vmatprep.subr.bf16.mxu0 0
  %60 = vmatpush1.bf16.msra.mxu0 0
  %61 = vmatprep.subr.bf16.mxu0 0
  %62 = vmatpush1.bf16.msra.mxu0 0
  %63 = vmatprep.subr.bf16.mxu0 0
  %64 = vmatpush1.bf16.msra.mxu0 %v44
  %65 = vmatprep.subr.bf16.mxu0 0
  %66 = vmatpush1.bf16.msra.mxu0 %v43
  %67 = vmatprep.subr.bf16.mxu0 0
  %68 = vmatpush2.bf16.msra.mxu0 0
  %69 = vmatprep.subr.bf16.mxu0 0
  %70 = vmatpush2.bf16.msra.mxu0 0
  %71 = vmatprep.subr.bf16.mxu0 0
  %72 = vmatpush2.bf16.msra.mxu0 0
  %73 = vmatprep.subr.bf16.mxu0 0
  %74 = vmatpush2.bf16.msra.mxu0 0
  %75 = vmatprep.subr.bf16.mxu0 0
  %76 = vmatpush2.bf16.msra.mxu0 0
  %77 = vmatprep.subr.bf16.mxu0 0
  %78 = vmatpush2.bf16.msra.mxu0 0
  %79 = vmatprep.subr.bf16.mxu0 0
  %80 = vmatpush2.bf16.msra.mxu0 0
  %81 = vmatprep.subr.bf16.mxu0 0
  %82 = vmatpush2.bf16.msra.mxu0 0
  %83 = vmatprep.mubr.bf16.mxu0 0
  %84 = vmatmul.mubr.bf16.gmra.mxu0 %v49
  %v85 = vpop.f32.mrf.mxu0
  %v86 = vadd.f32 0.0, %v85
  %v87 = vpop.f32.mrf.mxu0
  %v88 = vpop.f32.mrf.mxu0
  %v89 = vadd.f32 0.0, %v88
  %v90 = vpop.f32.mrf.mxu0
  %91 = vdwg.mxu0
  %v92 = vadd.f32 %v22, %v86
  %v93 = vadd.f32 %v23, %v89
  %94 = vst.msk [vmem:[#allocation2] sm:$0xff] %vm47, %v92
  %95 = vst.msk [vmem:[#allocation2 + $0x8] sm:$0xff] %vm47, %v93
  // Predicated region
  $region18: #{transformer_forward.37} parent=0 // pred_check
    %p96 = pneg %p15
  $region19: #{transformer_forward.37} parent=0 // pred_check_branch
    %98 = sbr.rel (%p96) target = $region21
  $region20: #{transformer_forward.37} parent=0 // pred_region
    %v99 = vld [vmem:[#allocation2] sm:$0xff]
    %v100 = vld [vmem:[#allocation2 + $0x8] sm:$0xff]
    %v101 = vld [vmem:[%s2] sm:$0x1]
    %v103 = vlaneseq
    %v104 = vshrl.u32 %v103, 7
    %v105 = vsub.s32 0, %v104
    %v106 = vrot.slane %v101, %v105
    %v108 = vadd.f32 %v99, %v106
    %v109 = vadd.f32 %v100, %v106
    %v110 = vpack.c.bf16 %v109, %v108
    %v112 = vunpack.c.l.b16 %v110
    %v113 = vunpack.c.h.b16 %v110
    %v114 = vpack.c.b16 %v112, %v112
    %v115 = vpack.c.b16 %v113, %v113
    %vm118 = vcmask 257024
    %119 = vst.msk [vmem:[%s3] sm:$0xf] %vm118, %v114
    %120 = vst.msk [vmem:[%s3 + $0x4] sm:$0xf] %vm118, %v115
  $region21: #{transformer_forward.37} parent=0 // pred_fallthru
    _
  // Predicated region
  $region22: #{transformer_forward.37} parent=0 // pred_check
    _
  $region23: #{transformer_forward.37} parent=0 // pred_check_branch
    %122 = sbr.rel (0) target = $region25
  $region24: #{transformer_forward.37} parent=0 // pred_region
    _
  $region25: #{transformer_forward.37} parent=0 // pred_fallthru
    _
  // Predicated region
  $region26: #{transformer_forward.37} parent=0 // pred_check
    _
  $region27: #{transformer_forward.37} parent=0 // pred_check_branch
    %124 = sbr.rel (0) target = $region29
  $region28: #{transformer_forward.37} parent=0 // pred_region
    _
  $region29: #{transformer_forward.37} parent=0 // pred_fallthru
    _

// kernel: transformer_forward.35
$region0: #{transformer_forward.35}
  #allocation0 [shape = 'u32[]', space=smem, size = 0x4, offset = 0x4, fixed_abs, tag = 'smem constant byte address 0x4 - core index']
  #allocation1 [shape = 'u32[144,128]{1,0:T(1,128)}', space=vmem, size = 0x12000, scoped, tag = 'internal scratch']
  #allocation2 [shape = 'f32[16,96]{1,0:T(8,128)}', space=vmem, size = 0x2000, scoped, tag = 'scratch operand']
  %s0 = inlined_call_operand.vmem [shape: f32[16,32], index: 0, kind: input, shape index: {}]
  %s1 = inlined_call_operand.vmem [shape: bf16[32,96], index: 1, kind: input, shape index: {}]
  %s2 = inlined_call_operand.vmem [shape: f32[1,96], index: 2, kind: input, shape index: {}]
  %s3 = inlined_call_operand.vmem [shape: bf16[16,96], index: 3, kind: output, shape index: {}]
  %s4 = sld [smem:[#allocation0]]
  $region30: #{transformer_forward.35} parent=0
    _
  %s6 = ssub.s32 1, %s4
  %s7 = scalar_select 0, %s6, %s4
  // Predicated region
  $region2: #{transformer_forward.35} parent=0 // pred_check
    _
  $region3: #{transformer_forward.35} parent=0 // pred_check_branch
    %9 = sbr.rel (0) target = $region5
  $region4: #{transformer_forward.35} parent=0 // pred_region
    _
  $region5: #{transformer_forward.35} parent=0 // pred_fallthru
    _
  // Predicated region
  $region6: #{transformer_forward.35} parent=0 // pred_check
    _
  $region7: #{transformer_forward.35} parent=0 // pred_check_branch
    %11 = sbr.rel (0) target = $region9
  $region8: #{transformer_forward.35} parent=0 // pred_region
    _
  $region9: #{transformer_forward.35} parent=0 // pred_fallthru
    _
  // Predicated region
  $region10: #{transformer_forward.35} parent=0 // pred_check
    _
  $region11: #{transformer_forward.35} parent=0 // pred_check_branch
    %13 = sbr.rel (0) target = $region13
  $region12: #{transformer_forward.35} parent=0 // pred_region
    _
  $region13: #{transformer_forward.35} parent=0 // pred_fallthru
    _
  %p15 = scmp.eq.s32.totalorder 0, 0
  // Predicated region
  $region14: #{transformer_forward.35} parent=0 // pred_check
    %p16 = pneg %p15
  $region15: #{transformer_forward.35} parent=0 // pred_check_branch
    %18 = sbr.rel (%p16) target = $region17
  $region16: #{transformer_forward.35} parent=0 // pred_region
    %vm19 = vcmask 785408
    %20 = vst.msk [vmem:[#allocation2] sm:$0xff] %vm19, 0.0
    %21 = vst.msk [vmem:[#allocation2 + $0x8] sm:$0xff] %vm19, 0.0
  $region17: #{transformer_forward.35} parent=0 // pred_fallthru
    _
  %v22 = vld [vmem:[#allocation2] sm:$0xff]
  %v23 = vld [vmem:[#allocation2 + $0x8] sm:$0xff]
  %v24 = vld [vmem:[%s0] sm:$0xff]
  %v25 = vld [vmem:[%s0 + $0x8] sm:$0xff]
  %v26 = vpack.c.bf16 %v25, %v24
  %v27 = vld [vmem:[%s1] sm:$0xf]
  %v28 = vld [vmem:[%s1 + $0x4] sm:$0xf]
  %v29 = vld [vmem:[%s1 + $0x8] sm:$0xf]
  %v30 = vld [vmem:[%s1 + $0xc] sm:$0xf]
  %v35 = vunpack.c.l.b16 %v27
  %v36 = vunpack.c.l.b16 %v28
  %v37 = vunpack.c.l.b16 %v29
  %v38 = vunpack.c.l.b16 %v30
  %v39 = vpack.c.b16 %v36, %v35
  %v40 = vpack.c.b16 %v38, %v37
  %vm43 = vcmask 261120
  %v45 = vsel %vm43, %v26, 0
  %47 = vmatprep.subr.bf16.mxu0 0
  %48 = vmatpush1.bf16.msra.mxu0 0
  %49 = vmatprep.subr.bf16.mxu0 0
  %50 = vmatpush1.bf16.msra.mxu0 0
  %51 = vmatprep.subr.bf16.mxu0 0
  %52 = vmatpush1.bf16.msra.mxu0 0
  %53 = vmatprep.subr.bf16.mxu0 0
  %54 = vmatpush1.bf16.msra.mxu0 0
  %55 = vmatprep.subr.bf16.mxu0 0
  %56 = vmatpush1.bf16.msra.mxu0 0
  %57 = vmatprep.subr.bf16.mxu0 0
  %58 = vmatpush1.bf16.msra.mxu0 0
  %59 = vmatprep.subr.bf16.mxu0 0
  %60 = vmatpush1.bf16.msra.mxu0 %v40
  %61 = vmatprep.subr.bf16.mxu0 0
  %62 = vmatpush1.bf16.msra.mxu0 %v39
  %63 = vmatprep.subr.bf16.mxu0 0
  %64 = vmatpush2.bf16.msra.mxu0 0
  %65 = vmatprep.subr.bf16.mxu0 0
  %66 = vmatpush2.bf16.msra.mxu0 0
  %67 = vmatprep.subr.bf16.mxu0 0
  %68 = vmatpush2.bf16.msra.mxu0 0
  %69 = vmatprep.subr.bf16.mxu0 0
  %70 = vmatpush2.bf16.msra.mxu0 0
  %71 = vmatprep.subr.bf16.mxu0 0
  %72 = vmatpush2.bf16.msra.mxu0 0
  %73 = vmatprep.subr.bf16.mxu0 0
  %74 = vmatpush2.bf16.msra.mxu0 0
  %75 = vmatprep.subr.bf16.mxu0 0
  %76 = vmatpush2.bf16.msra.mxu0 0
  %77 = vmatprep.subr.bf16.mxu0 0
  %78 = vmatpush2.bf16.msra.mxu0 0
  %79 = vmatprep.mubr.bf16.mxu0 0
  %80 = vmatmul.mubr.bf16.gmra.mxu0 %v45
  %v81 = vpop.f32.mrf.mxu0
  %v82 = vadd.f32 0.0, %v81
  %v83 = vpop.f32.mrf.mxu0
  %v84 = vpop.f32.mrf.mxu0
  %v85 = vadd.f32 0.0, %v84
  %v86 = vpop.f32.mrf.mxu0
  %87 = vdwg.mxu0
  %v88 = vadd.f32 %v22, %v82
  %v89 = vadd.f32 %v23, %v85
  %vm90 = vcmask 785408
  %91 = vst.msk [vmem:[#allocation2] sm:$0xff] %vm90, %v88
  %92 = vst.msk [vmem:[#allocation2 + $0x8] sm:$0xff] %vm90, %v89
  // Predicated region
  $region18: #{transformer_forward.35} parent=0 // pred_check
    %p93 = pneg %p15
  $region19: #{transformer_forward.35} parent=0 // pred_check_branch
    %95 = sbr.rel (%p93) target = $region21
  $region20: #{transformer_forward.35} parent=0 // pred_region
    %v96 = vld [vmem:[#allocation2] sm:$0xff]
    %v97 = vld [vmem:[#allocation2 + $0x8] sm:$0xff]
    %v98 = vld [vmem:[%s2] sm:$0x1]
    %v100 = vlaneseq
    %v101 = vshrl.u32 %v100, 7
    %v102 = vsub.s32 0, %v101
    %v103 = vrot.slane %v98, %v102
    %v105 = vadd.f32 %v96, %v103
    %v106 = vadd.f32 %v97, %v103
    %v107 = vpack.c.bf16 %v106, %v105
    %v109 = vunpack.c.l.b16 %v107
    %v110 = vunpack.c.h.b16 %v107
    %v111 = vpack.c.b16 %v109, %v109
    %v112 = vpack.c.b16 %v110, %v110
    %vm115 = vcmask 781312
    %116 = vst.msk [vmem:[%s3] sm:$0xf] %vm115, %v111
    %117 = vst.msk [vmem:[%s3 + $0x4] sm:$0xf] %vm115, %v112
  $region21: #{transformer_forward.35} parent=0 // pred_fallthru
    _
  // Predicated region
  $region22: #{transformer_forward.35} parent=0 // pred_check
    _
  $region23: #{transformer_forward.35} parent=0 // pred_check_branch
    %119 = sbr.rel (0) target = $region25
  $region24: #{transformer_forward.35} parent=0 // pred_region
    _
  $region25: #{transformer_forward.35} parent=0 // pred_fallthru
    _
  // Predicated region
  $region26: #{transformer_forward.35} parent=0 // pred_check
    _
  $region27: #{transformer_forward.35} parent=0 // pred_check_branch
    %121 = sbr.rel (0) target = $region29
  $region28: #{transformer_forward.35} parent=0 // pred_region
    _
  $region29: #{transformer_forward.35} parent=0 // pred_fallthru
    _

// kernel: transformer_forward.38
$region0: #{transformer_forward.38}
  #allocation0 [shape = 'u32[]', space=smem, size = 0x4, offset = 0x4, fixed_abs, tag = 'smem constant byte address 0x4 - core index']
  #allocation1 [shape = 'u32[144,128]{1,0:T(1,128)}', space=vmem, size = 0x12000, scoped, tag = 'internal scratch']
  %s0 = inlined_call_operand.vmem [shape: f32[16,32], index: 0, kind: input, shape index: {}]
  %s1 = inlined_call_operand.vmem [shape: bf16[16,32], index: 1, kind: input, shape index: {}]
  %s2 = inlined_call_operand.vmem [shape: f32[1,32], index: 2, kind: input, shape index: {}]
  %s3 = inlined_call_operand.vmem [shape: f32[1,32], index: 3, kind: input, shape index: {}]
  %s4 = inlined_call_operand.vmem [shape: f32[16,32], index: 4, kind: output, shape index: {}]
  %s5 = sld [smem:[#allocation0]]
  $region26: #{transformer_forward.38} parent=0
    _
  %s7 = ssub.s32 1, %s5
  %s8 = scalar_select 0, %s7, %s5
  // Predicated region
  $region2: #{transformer_forward.38} parent=0 // pred_check
    _
  $region3: #{transformer_forward.38} parent=0 // pred_check_branch
    %10 = sbr.rel (0) target = $region5
  $region4: #{transformer_forward.38} parent=0 // pred_region
    _
  $region5: #{transformer_forward.38} parent=0 // pred_fallthru
    _
  // Predicated region
  $region6: #{transformer_forward.38} parent=0 // pred_check
    _
  $region7: #{transformer_forward.38} parent=0 // pred_check_branch
    %12 = sbr.rel (0) target = $region9
  $region8: #{transformer_forward.38} parent=0 // pred_region
    _
  $region9: #{transformer_forward.38} parent=0 // pred_fallthru
    _
  // Predicated region
  $region10: #{transformer_forward.38} parent=0 // pred_check
    _
  $region11: #{transformer_forward.38} parent=0 // pred_check_branch
    %14 = sbr.rel (0) target = $region13
  $region12: #{transformer_forward.38} parent=0 // pred_region
    _
  $region13: #{transformer_forward.38} parent=0 // pred_fallthru
    _
  // Predicated region
  $region14: #{transformer_forward.38} parent=0 // pred_check
    _
  $region15: #{transformer_forward.38} parent=0 // pred_check_branch
    %16 = sbr.rel (0) target = $region17
  $region16: #{transformer_forward.38} parent=0 // pred_region
    _
  $region17: #{transformer_forward.38} parent=0 // pred_fallthru
    _
  %v17 = vld [vmem:[%s0] sm:$0xff]
  %v18 = vld [vmem:[%s0 + $0x8] sm:$0xff]
  %v19 = vld [vmem:[%s1] sm:$0xf]
  %v20 = vld [vmem:[%s1 + $0x4] sm:$0xf]
  %v21 = vunpack.c.l.bf16 %v19
  %v22 = vunpack.c.l.bf16 %v20
  %v23 = vadd.f32 %v17, %v21
  %v24 = vadd.f32 %v18, %v22
  %vm25 = vcmask 261120
  %v26 = vsel %vm25, %v23, 0.0
  %27 = vadd.xlane.f32.xlu0 %v26
  %v28 = vpop.xlane.xlu0 %27
  %v29 = vsel %vm25, %v24, 0.0
  %30 = vadd.xlane.f32.xlu0 %v29
  %v31 = vpop.xlane.xlu0 %30
  %v32 = vrcp.pop 32.0
  %v33 = vmul.f32 %v28, %v32
  %v34 = vmul.f32 %v31, %v32
  %v35 = vsub.f32 %v23, %v33
  %v36 = vsub.f32 %v24, %v34
  %v37 = vmul.f32 %v35, %v35
  %v38 = vmul.f32 %v36, %v36
  %v39 = vsel %vm25, %v37, 0.0
  %40 = vadd.xlane.f32.xlu0 %v39
  %v41 = vpop.xlane.xlu0 %40
  %v42 = vsel %vm25, %v38, 0.0
  %43 = vadd.xlane.f32.xlu0 %v42
  %v44 = vpop.xlane.xlu0 %43
  %v45 = vmul.f32 %v41, %v32
  %v46 = vmul.f32 %v44, %v32
  %v47 = vadd.f32 %v45, 1e-05
  %v48 = vadd.f32 %v46, 1e-05
  %v49 = vrsqrt.pop %v47
  %v50 = vrsqrt.pop %v48
  %v51 = vmul.f32 %v35, %v49
  %v52 = vmul.f32 %v36, %v50
  %v53 = vld [vmem:[%s2] sm:$0x1]
  %v55 = vlaneseq
  %v56 = vshrl.u32 %v55, 7
  %v57 = vsub.s32 0, %v56
  %v58 = vrot.slane %v53, %v57
  %v60 = vmul.f32 %v51, %v58
  %v61 = vmul.f32 %v52, %v58
  %v62 = vld [vmem:[%s3] sm:$0x1]
  %v64 = vlaneseq
  %v65 = vshrl.u32 %v64, 7
  %v66 = vsub.s32 0, %v65
  %v67 = vrot.slane %v62, %v66
  %v69 = vadd.f32 %v60, %v67
  %v70 = vadd.f32 %v61, %v67
  %71 = vst.msk [vmem:[%s4] sm:$0xff] %vm25, %v69
  %72 = vst.msk [vmem:[%s4 + $0x8] sm:$0xff] %vm25, %v70
  // Predicated region
  $region18: #{transformer_forward.38} parent=0 // pred_check
    _
  $region19: #{transformer_forward.38} parent=0 // pred_check_branch
    %74 = sbr.rel (0) target = $region21
  $region20: #{transformer_forward.38} parent=0 // pred_region
    _
  $region21: #{transformer_forward.38} parent=0 // pred_fallthru
    _
  // Predicated region
  $region22: #{transformer_forward.38} parent=0 // pred_check
    _
  $region23: #{transformer_forward.38} parent=0 // pred_check_branch
    %76 = sbr.rel (0) target = $region25
  $region24: #{transformer_forward.38} parent=0 // pred_region
    _
  $region25: #{transformer_forward.38} parent=0 // pred_fallthru
    _

// kernel: transformer_forward.36
$region0: #{transformer_forward.36}
  #allocation0 [shape = 'u32[]', space=smem, size = 0x4, offset = 0x4, fixed_abs, tag = 'smem constant byte address 0x4 - core index']
  #allocation1 [shape = 'u32[144,128]{1,0:T(1,128)}', space=vmem, size = 0x12000, scoped, tag = 'internal scratch']
  #allocation2 [shape = 'f32[8,4]{1,0:T(8,128)}', space=vmem, size = 0x1000, scoped, tag = 'scratch operand']
  #allocation3 [shape = 'f32[8,4]{1,0:T(8,128)}', space=vmem, size = 0x1000, scoped, tag = 'scratch operand']
  #allocation4 [shape = 'f32[8,32]{1,0:T(8,128)}', space=vmem, size = 0x1000, scoped, tag = 'scratch operand']
  %s0 = inlined_call_operand.vmem [shape: f32[2,1,8], index: 0, kind: input, shape index: {}]
  %s1 = inlined_call_operand.vmem [shape: bf16[2,8,32], index: 1, kind: input, shape index: {}]
  %s2 = inlined_call_operand.vmem [shape: bf16[2,8,32], index: 2, kind: input, shape index: {}]
  %s3 = inlined_call_operand.vmem [shape: bf16[2,8,32], index: 3, kind: input, shape index: {}]
  %s4 = inlined_call_operand.vmem [shape: bf16[2,8,32], index: 4, kind: output, shape index: {}]
  %s5 = sld [smem:[#allocation0]]
  $region57: #{transformer_forward.36} parent=0
    _
  %s7 = ssub.s32 1, %s5
  %s8 = scalar_select 0, %s7, %s5
  loop: start=0, step=1, limit=4
  $region2: #{transformer_forward.36} parent=0 // loop_pre_header
    _
  $region3: #{transformer_forward.36} parent=0 // loop_header
    %s10 = sphi 0, %s14
    %p11 = scmp.ge.s32.totalorder %s10, 4
    %s17 = sphi 0, %s43
    %s18 = sphi 0, %s39
    %s19 = sphi 0, %s35
    %s20 = sphi 0, %s31
    %s21 = sphi 0, %s17
    %s22 = sphi 0, %s18
    %s23 = sphi 0, %s19
    %s24 = sphi 0, %s20
    %s25 = sphi 0, %s21
    %s26 = sphi 0, %s22
    %s27 = sphi 0, %s23
    %s28 = sphi 0, %s24
    %s48 = sphi 0, %s50
    %s51 = sphi 0, %s48
    %s52 = sphi 0, %s51
    %s68 = sphi 0, %s52
    %s78 = sphi 0, %s80
    %s81 = sphi 0, %s78
    %s82 = sphi 0, %s81
    %s98 = sphi 0, %s82
    %s108 = sphi 0, %s110
    %s111 = sphi 0, %s108
    %s112 = sphi 0, %s111
    %s128 = sphi 0, %s112
    %s138 = sphi 0, %s140
    %s141 = sphi 0, %s138
    %s142 = sphi 0, %s141
    %s158 = sphi 0, %s142
    %s168 = sphi 0, %s170
    %s171 = sphi 0, %s168
    %s172 = sphi 0, %s171
    %s188 = sphi 0, %s172
  $region4: #{transformer_forward.36} parent=0 // loop_header_branch
    %13 = sbr.rel (%p11) target = $region8
  $region5: #{transformer_forward.36} parent=0 // loop_body
    %s15 = ssub.s32 %s10, 1
    %s16 = ssub.s32 %s10, 2
    %s29 = sadd.s32 1, %s20
    %p30 = scmp.ge.s32.totalorder %s29, 1
    %s31 = scalar_select %p30, 0, %s29
    %s32 = sadd.s32 1, %s19
    %s33 = scalar_select %p30, %s32, %s19
    %p34 = scmp.ge.s32.totalorder %s33, 1
    %s35 = scalar_select %p34, 0, %s33
    %s36 = sadd.s32 1, %s18
    %s37 = scalar_select %p34, %s36, %s18
    %p38 = scmp.ge.s32.totalorder %s37, 1
    %s39 = scalar_select %p38, 0, %s37
    %s40 = sadd.s32 1, %s17
    %s41 = scalar_select %p38, %s40, %s17
    %p42 = scmp.ge.s32.totalorder %s41, 2
    %s43 = scalar_select %p42, 0, %s41
    %s44 = ssub.s32 %s17, %s43
    %s45 = ssub.s32 %s20, %s31
    %s46 = sor.u32 %s44, %s45
    %p47 = scmp.eq.s32.totalorder %s46, 0
    %s49 = sadd.s32 %s48, 1
    %s50 = scalar_select %p47, %s48, %s49
    %p53 = pneg %p47
    %p54 = scmp.eq.s32.totalorder %s10, 1
    %p55 = por %p53, %p54
    %p56 = scmp.ne.s32.totalorder %s48, %s51
    %p57 = scmp.eq.s32.totalorder %s10, 0
    %p58 = por %p56, %p57
    %p59 = scmp.ne.s32.totalorder %s48, %s51
    %p60 = scmp.eq.s32.totalorder %s15, 1
    %p61 = por %p59, %p60
    %p62 = scmp.ne.s32.totalorder %s51, %s52
    %p63 = scmp.eq.s32.totalorder %s15, 0
    %p64 = por %p62, %p63
    %p65 = scmp.ne.s32.totalorder %s51, %s52
    %p66 = scmp.eq.s32.totalorder %s16, 1
    %p67 = por %p65, %p66
    %p69 = scmp.ne.s32.totalorder %s52, %s68
    %p70 = scmp.eq.s32.totalorder %s16, 0
    %p71 = por %p69, %p70
    %s72 = ssub.s32 %s17, %s43
    %s73 = ssub.s32 %s19, %s35
    %s74 = sor.u32 %s72, %s73
    %s75 = ssub.s32 %s18, %s39
    %s76 = sor.u32 %s74, %s75
    %p77 = scmp.eq.s32.totalorder %s76, 0
    %s79 = sadd.s32 %s78, 1
    %s80 = scalar_select %p77, %s78, %s79
    %p83 = pneg %p77
    %p84 = scmp.eq.s32.totalorder %s10, 1
    %p85 = por %p83, %p84
    %p86 = scmp.ne.s32.totalorder %s78, %s81
    %p87 = scmp.eq.s32.totalorder %s10, 0
    %p88 = por %p86, %p87
    %p89 = scmp.ne.s32.totalorder %s78, %s81
    %p90 = scmp.eq.s32.totalorder %s15, 1
    %p91 = por %p89, %p90
    %p92 = scmp.ne.s32.totalorder %s81, %s82
    %p93 = scmp.eq.s32.totalorder %s15, 0
    %p94 = por %p92, %p93
    %p95 = scmp.ne.s32.totalorder %s81, %s82
    %p96 = scmp.eq.s32.totalorder %s16, 1
    %p97 = por %p95, %p96
    %p99 = scmp.ne.s32.totalorder %s82, %s98
    %p100 = scmp.eq.s32.totalorder %s16, 0
    %p101 = por %p99, %p100
    %s102 = ssub.s32 %s17, %s43
    %s103 = ssub.s32 %s20, %s31
    %s104 = sor.u32 %s102, %s103
    %s105 = ssub.s32 %s18, %s39
    %s106 = sor.u32 %s104, %s105
    %p107 = scmp.eq.s32.totalorder %s106, 0
    %s109 = sadd.s32 %s108, 1
    %s110 = scalar_select %p107, %s108, %s109
    %p113 = pneg %p107
    %p114 = scmp.eq.s32.totalorder %s10, 1
    %p115 = por %p113, %p114
    %p116 = scmp.ne.s32.totalorder %s108, %s111
    %p117 = scmp.eq.s32.totalorder %s10, 0
    %p118 = por %p116, %p117
    %p119 = scmp.ne.s32.totalorder %s108, %s111
    %p120 = scmp.eq.s32.totalorder %s15, 1
    %p121 = por %p119, %p120
    %p122 = scmp.ne.s32.totalorder %s111, %s112
    %p123 = scmp.eq.s32.totalorder %s15, 0
    %p124 = por %p122, %p123
    %p125 = scmp.ne.s32.totalorder %s111, %s112
    %p126 = scmp.eq.s32.totalorder %s16, 1
    %p127 = por %p125, %p126
    %p129 = scmp.ne.s32.totalorder %s112, %s128
    %p130 = scmp.eq.s32.totalorder %s16, 0
    %p131 = por %p129, %p130
    %s132 = ssub.s32 %s17, %s43
    %s133 = ssub.s32 %s20, %s31
    %s134 = sor.u32 %s132, %s133
    %s135 = ssub.s32 %s18, %s39
    %s136 = sor.u32 %s134, %s135
    %p137 = scmp.eq.s32.totalorder %s136, 0
    %s139 = sadd.s32 %s138, 1
    %s140 = scalar_select %p137, %s138, %s139
    %p143 = pneg %p137
    %p144 = scmp.eq.s32.totalorder %s10, 1
    %p145 = por %p143, %p144
    %p146 = scmp.ne.s32.totalorder %s138, %s141
    %p147 = scmp.eq.s32.totalorder %s10, 0
    %p148 = por %p146, %p147
    %p149 = scmp.ne.s32.totalorder %s138, %s141
    %p150 = scmp.eq.s32.totalorder %s15, 1
    %p151 = por %p149, %p150
    %p152 = scmp.ne.s32.totalorder %s141, %s142
    %p153 = scmp.eq.s32.totalorder %s15, 0
    %p154 = por %p152, %p153
    %p155 = scmp.ne.s32.totalorder %s141, %s142
    %p156 = scmp.eq.s32.totalorder %s16, 1
    %p157 = por %p155, %p156
    %p159 = scmp.ne.s32.totalorder %s142, %s158
    %p160 = scmp.eq.s32.totalorder %s16, 0
    %p161 = por %p159, %p160
    %s162 = ssub.s32 %s17, %s43
    %s163 = ssub.s32 %s19, %s35
    %s164 = sor.u32 %s162, %s163
    %s165 = ssub.s32 %s18, %s39
    %s166 = sor.u32 %s164, %s165
    %p167 = scmp.eq.s32.totalorder %s166, 0
    %s169 = sadd.s32 %s168, 1
    %s170 = scalar_select %p167, %s168, %s169
    %p173 = pneg %p167
    %p174 = scmp.eq.s32.totalorder %s10, 1
    %p175 = por %p173, %p174
    %p176 = scmp.ne.s32.totalorder %s168, %s171
    %p177 = scmp.eq.s32.totalorder %s10, 0
    %p178 = por %p176, %p177
    %p179 = scmp.ne.s32.totalorder %s168, %s171
    %p180 = scmp.eq.s32.totalorder %s15, 1
    %p181 = por %p179, %p180
    %p182 = scmp.ne.s32.totalorder %s171, %s172
    %p183 = scmp.eq.s32.totalorder %s15, 0
    %p184 = por %p182, %p183
    %p185 = scmp.ne.s32.totalorder %s171, %s172
    %p186 = scmp.eq.s32.totalorder %s16, 1
    %p187 = por %p185, %p186
    %p189 = scmp.ne.s32.totalorder %s172, %s188
    %p190 = scmp.eq.s32.totalorder %s16, 0
    %p191 = por %p189, %p190
    %p192 = scmp.le.s32.totalorder 1, %s10
    %p193 = scmp.lt.s32.totalorder %s10, 3
    %p194 = pnand %p192, %p193
    %p195 = pneg %p194
    // Predicated region
    $region9: #{transformer_forward.36} parent=5 // pred_check
      _
    $region10: #{transformer_forward.36} parent=5 // pred_check_branch
      %197 = sbr.rel (%p194) target = $region12
    $region11: #{transformer_forward.36} parent=5 // pred_region
      %s198 = ssub.s32 %s10, 1
    $region12: #{transformer_forward.36} parent=5 // pred_fallthru
      _
    %p199 = scmp.lt.s32.totalorder %s10, 2
    // Predicated region
    $region13: #{transformer_forward.36} parent=5 // pred_check
      %p200 = pneg %p199
    $region14: #{transformer_forward.36} parent=5 // pred_check_branch
      %202 = sbr.rel (%p200) target = $region16
    $region15: #{transformer_forward.36} parent=5 // pred_region
      // Predicated region
      $region17: #{transformer_forward.36} parent=15 // pred_check
        %p203 = pneg %p58
      $region18: #{transformer_forward.36} parent=15 // pred_check_branch
        %205 = sbr.rel (%p203) target = $region20
      $region19: #{transformer_forward.36} parent=15 // pred_region
        %p206 = scmp.lt.s32.totalorder %s17, 1
        %s207 = scalar_select %p206, %s17, 1
        %p208 = scmp.lt.s32.totalorder %s20, 0
        %s209 = scalar_select %p208, %s20, 0
        %s210 = sadd.s32 %s209, %s207
        %s211 = scalar_lea.vmem %s0, %s210
      $region20: #{transformer_forward.36} parent=15 // pred_fallthru
        _
      // Predicated region
      $region21: #{transformer_forward.36} parent=15 // pred_check
        %p212 = pneg %p88
      $region22: #{transformer_forward.36} parent=15 // pred_check_branch
        %214 = sbr.rel (%p212) target = $region24
      $region23: #{transformer_forward.36} parent=15 // pred_region
        %p215 = scmp.lt.s32.totalorder %s17, 1
        %s216 = scalar_select %p215, %s17, 1
        %p217 = scmp.lt.s32.totalorder %s19, 0
        %s218 = scalar_select %p217, %s19, 0
        %p219 = scmp.lt.s32.totalorder %s18, 0
        %s220 = scalar_select %p219, %s18, 0
        %s221 = sadd.s32 %s220, %s218
        %s222 = sadd.s32 %s221, %s216
        %s223 = smul.addr %s222, 4
        %s224 = scalar_lea.vmem %s1, %s223
      $region24: #{transformer_forward.36} parent=15 // pred_fallthru
        _
      // Predicated region
      $region25: #{transformer_forward.36} parent=15 // pred_check
        %p225 = pneg %p118
      $region26: #{transformer_forward.36} parent=15 // pred_check_branch
        %227 = sbr.rel (%p225) target = $region28
      $region27: #{transformer_forward.36} parent=15 // pred_region
        %p228 = scmp.lt.s32.totalorder %s17, 1
        %s229 = scalar_select %p228, %s17, 1
        %p230 = scmp.lt.s32.totalorder %s20, 0
        %s231 = scalar_select %p230, %s20, 0
        %p232 = scmp.lt.s32.totalorder %s18, 0
        %s233 = scalar_select %p232, %s18, 0
        %s234 = sadd.s32 %s233, %s231
        %s235 = sadd.s32 %s234, %s229
        %s236 = smul.addr %s235, 4
        %s237 = scalar_lea.vmem %s2, %s236
      $region28: #{transformer_forward.36} parent=15 // pred_fallthru
        _
      // Predicated region
      $region29: #{transformer_forward.36} parent=15 // pred_check
        %p238 = pneg %p148
      $region30: #{transformer_forward.36} parent=15 // pred_check_branch
        %240 = sbr.rel (%p238) target = $region32
      $region31: #{transformer_forward.36} parent=15 // pred_region
        %p241 = scmp.lt.s32.totalorder %s17, 1
        %s242 = scalar_select %p241, %s17, 1
        %p243 = scmp.lt.s32.totalorder %s20, 0
        %s244 = scalar_select %p243, %s20, 0
        %p245 = scmp.lt.s32.totalorder %s18, 0
        %s246 = scalar_select %p245, %s18, 0
        %s247 = sadd.s32 %s246, %s244
        %s248 = sadd.s32 %s247, %s242
        %s249 = smul.addr %s248, 4
        %s250 = scalar_lea.vmem %s3, %s249
      $region32: #{transformer_forward.36} parent=15 // pred_fallthru
        _
    $region16: #{transformer_forward.36} parent=5 // pred_fallthru
      _
    %p251 = scmp.le.s32.totalorder 1, %s10
    %p252 = scmp.lt.s32.totalorder %s10, 3
    %p253 = pnand %p251, %p252
    %p254 = pneg %p253
    // Predicated region
    $region33: #{transformer_forward.36} parent=5 // pred_check
      _
    $region34: #{transformer_forward.36} parent=5 // pred_check_branch
      %256 = sbr.rel (%p253) target = $region36
    $region35: #{transformer_forward.36} parent=5 // pred_region
      %s257 = ssub.s32 %s10, 1
      %p258 = scmp.lt.s32.totalorder %s21, 1
      %s259 = scalar_select %p258, %s21, 1
      %p260 = scmp.lt.s32.totalorder %s24, 0
      %s261 = scalar_select %p260, %s24, 0
      %s262 = sadd.s32 %s261, %s259
      %s263 = scalar_lea.vmem %s0, %s262
      %p264 = pneg %p64
      %p265 = pneg %p61
      %p266 = scmp.lt.s32.totalorder %s21, 1
      %s267 = scalar_select %p266, %s21, 1
      %p268 = scmp.lt.s32.totalorder %s23, 0
      %s269 = scalar_select %p268, %s23, 0
      %p270 = scmp.lt.s32.totalorder %s22, 0
      %s271 = scalar_select %p270, %s22, 0
      %s272 = sadd.s32 %s271, %s269
      %s273 = sadd.s32 %s272, %s267
      %s274 = smul.addr %s273, 4
      %s275 = scalar_lea.vmem %s1, %s274
      %p276 = pneg %p94
      %p277 = pneg %p91
      %p278 = scmp.lt.s32.totalorder %s21, 1
      %s279 = scalar_select %p278, %s21, 1
      %p280 = scmp.lt.s32.totalorder %s24, 0
      %s281 = scalar_select %p280, %s24, 0
      %p282 = scmp.lt.s32.totalorder %s22, 0
      %s283 = scalar_select %p282, %s22, 0
      %s284 = sadd.s32 %s283, %s281
      %s285 = sadd.s32 %s284, %s279
      %s286 = smul.addr %s285, 4
      %s287 = scalar_lea.vmem %s2, %s286
      %p288 = pneg %p124
      %p289 = pneg %p121
      %p290 = scmp.lt.s32.totalorder %s21, 1
      %s291 = scalar_select %p290, %s21, 1
      %p292 = scmp.lt.s32.totalorder %s24, 0
      %s293 = scalar_select %p292, %s24, 0
      %p294 = scmp.lt.s32.totalorder %s22, 0
      %s295 = scalar_select %p294, %s22, 0
      %s296 = sadd.s32 %s295, %s293
      %s297 = sadd.s32 %s296, %s291
      %s298 = smul.addr %s297, 4
      %s299 = scalar_lea.vmem %s3, %s298
      %p300 = pneg %p154
      %p301 = pneg %p151
      %p302 = pneg %p184
      %p303 = pneg %p181
      %p304 = scmp.lt.s32.totalorder %s21, 1
      %s305 = scalar_select %p304, %s21, 1
      %p306 = scmp.lt.s32.totalorder %s23, 0
      %s307 = scalar_select %p306, %s23, 0
      %p308 = scmp.lt.s32.totalorder %s22, 0
      %s309 = scalar_select %p308, %s22, 0
      %s310 = sadd.s32 %s309, %s307
      %s311 = sadd.s32 %s310, %s305
      %s312 = smul.addr %s311, 4
      %s313 = scalar_lea.vmem %s4, %s312
      %p314 = scmp.lt.s32.totalorder %s21, 1
      %s315 = scalar_select %p314, %s21, 1
      %p316 = scmp.lt.s32.totalorder %s24, 0
      %s317 = scalar_select %p316, %s24, 0
      %s318 = sadd.s32 %s317, %s315
      %s319 = scalar_lea.vmem %s0, %s318
      %p320 = scmp.lt.s32.totalorder %s21, 1
      %s321 = scalar_select %p320, %s21, 1
      %p322 = scmp.lt.s32.totalorder %s23, 0
      %s323 = scalar_select %p322, %s23, 0
      %p324 = scmp.lt.s32.totalorder %s22, 0
      %s325 = scalar_select %p324, %s22, 0
      %s326 = sadd.s32 %s325, %s323
      %s327 = sadd.s32 %s326, %s321
      %s328 = smul.addr %s327, 4
      %s329 = scalar_lea.vmem %s1, %s328
      %p330 = scmp.lt.s32.totalorder %s21, 1
      %s331 = scalar_select %p330, %s21, 1
      %p332 = scmp.lt.s32.totalorder %s24, 0
      %s333 = scalar_select %p332, %s24, 0
      %p334 = scmp.lt.s32.totalorder %s22, 0
      %s335 = scalar_select %p334, %s22, 0
      %s336 = sadd.s32 %s335, %s333
      %s337 = sadd.s32 %s336, %s331
      %s338 = smul.addr %s337, 4
      %s339 = scalar_lea.vmem %s2, %s338
      %p340 = scmp.lt.s32.totalorder %s21, 1
      %s341 = scalar_select %p340, %s21, 1
      %p342 = scmp.lt.s32.totalorder %s24, 0
      %s343 = scalar_select %p342, %s24, 0
      %p344 = scmp.lt.s32.totalorder %s22, 0
      %s345 = scalar_select %p344, %s22, 0
      %s346 = sadd.s32 %s345, %s343
      %s347 = sadd.s32 %s346, %s341
      %s348 = smul.addr %s347, 4
      %s349 = scalar_lea.vmem %s3, %s348
      %p350 = scmp.lt.s32.totalorder %s21, 1
      %s351 = scalar_select %p350, %s21, 1
      %p352 = scmp.lt.s32.totalorder %s23, 0
      %s353 = scalar_select %p352, %s23, 0
      %p354 = scmp.lt.s32.totalorder %s22, 0
      %s355 = scalar_select %p354, %s22, 0
      %s356 = sadd.s32 %s355, %s353
      %s357 = sadd.s32 %s356, %s351
      %s358 = smul.addr %s357, 4
      %s359 = scalar_lea.vmem %s4, %s358
      %p361 = scmp.eq.s32.totalorder %s24, 0
      // Predicated region
      $region37: #{transformer_forward.36} parent=35 // pred_check
        %p362 = pneg %p361
      $region38: #{transformer_forward.36} parent=35 // pred_check_branch
        %364 = sbr.rel (%p362) target = $region40
      $region39: #{transformer_forward.36} parent=35 // pred_region
        %vm365 = vcmask 31744
        %366 = vst.msk [vmem:[#allocation2] sm:$0xff] %vm365, -1e+30
        %367 = vst.msk [vmem:[#allocation3] sm:$0xff] %vm365, 0.0
        %vm368 = vcmask 261120
        %369 = vst.msk [vmem:[#allocation4] sm:$0xff] %vm368, 0.0
      $region40: #{transformer_forward.36} parent=35 // pred_fallthru
        _
      %v370 = vld [vmem:[%s329] sm:$0xf]
      %v371 = vld [vmem:[%s339] sm:$0xf]
      %v372 = vld [vmem:[%s349] sm:$0xf]
      %v373 = vld [vmem:[%s319] sm:$0x1]
      %v375 = vlaneseq
      %v376 = vshrl.u32 %v375, 7
      %v377 = vsub.s32 0, %v376
      %v378 = vrot.slane %v373, %v377
      %vm380 = vcmask 64512
      %v382 = vsel %vm380, %v370, 0
      %v385 = vsel %vm380, %v371, 0
      %387 = vmatprep.subr.bf16.mxu0 0
      %388 = vmatpush1.bf16.xpose.msra.mxu0 0
      %389 = vmatprep.subr.bf16.mxu0 0
      %390 = vmatpush1.bf16.xpose.msra.mxu0 0
      %391 = vmatprep.subr.bf16.mxu0 0
      %392 = vmatpush1.bf16.xpose.msra.mxu0 0
      %393 = vmatprep.subr.bf16.mxu0 0
      %394 = vmatpush1.bf16.xpose.msra.mxu0 0
      %395 = vmatprep.subr.bf16.mxu0 0
      %396 = vmatpush1.bf16.xpose.msra.mxu0 0
      %397 = vmatprep.subr.bf16.mxu0 0
      %398 = vmatpush1.bf16.xpose.msra.mxu0 0
      %399 = vmatprep.subr.bf16.mxu0 0
      %400 = vmatpush1.bf16.xpose.msra.mxu0 0
      %401 = vmatprep.subr.bf16.mxu0 0
      %402 = vmatpush1.bf16.xpose.msra.mxu0 %v385
      %403 = vmatprep.subr.bf16.mxu0 0
      %404 = vmatpush2.bf16.xpose.msra.mxu0 0
      %405 = vmatprep.subr.bf16.mxu0 0
      %406 = vmatpush2.bf16.xpose.msra.mxu0 0
      %407 = vmatprep.subr.bf16.mxu0 0
      %408 = vmatpush2.bf16.xpose.msra.mxu0 0
      %409 = vmatprep.subr.bf16.mxu0 0
      %410 = vmatpush2.bf16.xpose.msra.mxu0 0
      %411 = vmatprep.subr.bf16.mxu0 0
      %412 = vmatpush2.bf16.xpose.msra.mxu0 0
      %413 = vmatprep.subr.bf16.mxu0 0
      %414 = vmatpush2.bf16.xpose.msra.mxu0 0
      %415 = vmatprep.subr.bf16.mxu0 0
      %416 = vmatpush2.bf16.xpose.msra.mxu0 0
      %417 = vmatprep.subr.bf16.mxu0 0
      %418 = vmatpush2.bf16.xpose.msra.mxu0 0
      %419 = vmatprep.mubr.bf16.mxu0 0
      %420 = vmatmul.mubr.bf16.gmra.mxu0 %v382
      %v421 = vpop.f32.mrf.mxu0
      %v422 = vadd.f32 %v378, %v421
      %v423 = vpop.f32.mrf.mxu0
      %v424 = vpop.f32.mrf.mxu0
      %v425 = vpop.f32.mrf.mxu0
      %426 = vdwg.mxu0
      %v427 = vld [vmem:[#allocation2] sm:$0xff]
      %v428 = vsel %vm380, %v422, -inf
      %429 = vmax.xlane.f32.xlu0 %v428
      %v430 = vpop.xlane.xlu0 %429
      %v431 = vmax.f32 %v427, %v430
      %v432 = vsub.f32 %v427, %v431
      %v433 = vmul.f32 %v432, 1.442695
      %v434 = vpow.pop %v433
      %436 = vset.pattern.permute.xlu0 0
      %437 = vperm.xlu0 %436, %v431
      %v438 = vpop.permute.xlu0 %437
      %v440 = vsub.f32 %v422, %v438
      %v441 = vmul.f32 %v440, 1.442695
      %v442 = vpow.pop %v441
      %v443 = vld [vmem:[#allocation3] sm:$0xff]
      %v444 = vmul.f32 %v434, %v443
      %v445 = vsel %vm380, %v442, 0.0
      %446 = vadd.xlane.f32.xlu0 %v445
      %v447 = vpop.xlane.xlu0 %446
      %v448 = vadd.f32 %v444, %v447
      %vm449 = vcmask 7168
      %450 = vst.msk [vmem:[#allocation3] sm:$0xff] %vm449, %v448
      %v451 = vld [vmem:[#allocation4] sm:$0xff]
      %453 = vset.pattern.permute.xlu0 0
      %454 = vperm.xlu0 %453, %v434
      %v455 = vpop.permute.xlu0 %454
      %v457 = vmul.f32 %v455, %v451
      %v458 = vpack.c.bf16 %v442, %v442
      %v460 = vsel %vm380, %v458, 0
      %vm462 = vcmask 1043456
      %v464 = vsel %vm462, %v372, 0
      %466 = vmatprep.subr.bf16.mxu0 0
      %467 = vmatpush1.bf16.msra.mxu0 0
      %468 = vmatprep.subr.bf16.mxu0 0
      %469 = vmatpush1.bf16.msra.mxu0 0
      %470 = vmatprep.subr.bf16.mxu0 0
      %471 = vmatpush1.bf16.msra.mxu0 0
      %472 = vmatprep.subr.bf16.mxu0 0
      %473 = vmatpush1.bf16.msra.mxu0 0
      %474 = vmatprep.subr.bf16.mxu0 0
      %475 = vmatpush1.bf16.msra.mxu0 0
      %476 = vmatprep.subr.bf16.mxu0 0
      %477 = vmatpush1.bf16.msra.mxu0 0
      %478 = vmatprep.subr.bf16.mxu0 0
      %479 = vmatpush1.bf16.msra.mxu0 0
      %480 = vmatprep.subr.bf16.mxu0 0
      %481 = vmatpush1.bf16.msra.mxu0 %v464
      %482 = vmatprep.subr.bf16.mxu0 0
      %483 = vmatpush2.bf16.msra.mxu0 0
      %484 = vmatprep.subr.bf16.mxu0 0
      %485 = vmatpush2.bf16.msra.mxu0 0
      %486 = vmatprep.subr.bf16.mxu0 0
      %487 = vmatpush2.bf16.msra.mxu0 0
      %488 = vmatprep.subr.bf16.mxu0 0
      %489 = vmatpush2.bf16.msra.mxu0 0
      %490 = vmatprep.subr.bf16.mxu0 0
      %491 = vmatpush2.bf16.msra.mxu0 0
      %492 = vmatprep.subr.bf16.mxu0 0
      %493 = vmatpush2.bf16.msra.mxu0 0
      %494 = vmatprep.subr.bf16.mxu0 0
      %495 = vmatpush2.bf16.msra.mxu0 0
      %496 = vmatprep.subr.bf16.mxu0 0
      %497 = vmatpush2.bf16.msra.mxu0 0
      %498 = vmatprep.mubr.bf16.mxu0 0
      %499 = vmatmul.mubr.bf16.gmra.mxu0 %v460
      %v500 = vpop.f32.mrf.mxu0
      %v501 = vadd.f32 0.0, %v500
      %v502 = vpop.f32.mrf.mxu0
      %v503 = vpop.f32.mrf.mxu0
      %v504 = vpop.f32.mrf.mxu0
      %505 = vdwg.mxu0
      %v506 = vadd.f32 %v457, %v501
      %507 = vst.msk [vmem:[#allocation4] sm:$0xff] %vm380, %v506
      %508 = vst.msk [vmem:[#allocation2] sm:$0xff] %vm449, %v431
      %v510 = vunpack.c.l.b16 %v370
      %v511 = vpack.c.b16 %v510, %v510
      %512 = vrot.lane.b32.xlu0 %v511, 120
      %v513 = vpop.permute.xlu0 %512
      %v515 = vunpack.c.l.b16 %v371
      %v516 = vpack.c.b16 %v515, %v515
      %517 = vrot.lane.b32.xlu0 %v516, 120
      %v518 = vpop.permute.xlu0 %517
      %v520 = vsel %vm380, %v513, 0
      %v523 = vsel %vm380, %v518, 0
      %525 = vmatprep.subr.bf16.mxu0 0
      %526 = vmatpush1.bf16.xpose.msra.mxu0 0
      %527 = vmatprep.subr.bf16.mxu0 0
      %528 = vmatpush1.bf16.xpose.msra.mxu0 0
      %529 = vmatprep.subr.bf16.mxu0 0
      %530 = vmatpush1.bf16.xpose.msra.mxu0 0
      %531 = vmatprep.subr.bf16.mxu0 0
      %532 = vmatpush1.bf16.xpose.msra.mxu0 0
      %533 = vmatprep.subr.bf16.mxu0 0
      %534 = vmatpush1.bf16.xpose.msra.mxu0 0
      %535 = vmatprep.subr.bf16.mxu0 0
      %536 = vmatpush1.bf16.xpose.msra.mxu0 0
      %537 = vmatprep.subr.bf16.mxu0 0
      %538 = vmatpush1.bf16.xpose.msra.mxu0 0
      %539 = vmatprep.subr.bf16.mxu0 0
      %540 = vmatpush1.bf16.xpose.msra.mxu0 %v523
      %541 = vmatprep.subr.bf16.mxu0 0
      %542 = vmatpush2.bf16.xpose.msra.mxu0 0
      %543 = vmatprep.subr.bf16.mxu0 0
      %544 = vmatpush2.bf16.xpose.msra.mxu0 0
      %545 = vmatprep.subr.bf16.mxu0 0
      %546 = vmatpush2.bf16.xpose.msra.mxu0 0
      %547 = vmatprep.subr.bf16.mxu0 0
      %548 = vmatpush2.bf16.xpose.msra.mxu0 0
      %549 = vmatprep.subr.bf16.mxu0 0
      %550 = vmatpush2.bf16.xpose.msra.mxu0 0
      %551 = vmatprep.subr.bf16.mxu0 0
      %552 = vmatpush2.bf16.xpose.msra.mxu0 0
      %553 = vmatprep.subr.bf16.mxu0 0
      %554 = vmatpush2.bf16.xpose.msra.mxu0 0
      %555 = vmatprep.subr.bf16.mxu0 0
      %556 = vmatpush2.bf16.xpose.msra.mxu0 0
      %557 = vmatprep.mubr.bf16.mxu0 0
      %558 = vmatmul.mubr.bf16.gmra.mxu0 %v520
      %v559 = vpop.f32.mrf.mxu0
      %v560 = vadd.f32 %v378, %v559
      %v561 = vpop.f32.mrf.mxu0
      %v562 = vpop.f32.mrf.mxu0
      %v563 = vpop.f32.mrf.mxu0
      %564 = vdwg.mxu0
      %v565 = vld [vmem:[#allocation2] sm:$0xff]
      %v566 = vsel %vm380, %v560, -inf
      %567 = vmax.xlane.f32.xlu0 %v566
      %v568 = vpop.xlane.xlu0 %567
      %v569 = vmax.f32 %v565, %v568
      %v570 = vsub.f32 %v565, %v569
      %v571 = vmul.f32 %v570, 1.442695
      %v572 = vpow.pop %v571
      %574 = vset.pattern.permute.xlu0 1
      %575 = vperm.xlu0 %574, %v569
      %v576 = vpop.permute.xlu0 %575
      %v578 = vsub.f32 %v560, %v576
      %v579 = vmul.f32 %v578, 1.442695
      %v580 = vpow.pop %v579
      %v581 = vld [vmem:[#allocation3] sm:$0xff]
      %v582 = vmul.f32 %v572, %v581
      %v583 = vsel %vm380, %v580, 0.0
      %584 = vadd.xlane.f32.xlu0 %v583
      %v585 = vpop.xlane.xlu0 %584
      %v586 = vadd.f32 %v582, %v585
      %vm587 = vcmask 15368
      %588 = vst.msk [vmem:[#allocation3] sm:$0xff] %vm587, %v586
      %v589 = vld [vmem:[#allocation4] sm:$0xff]
      %591 = vset.pattern.permute.xlu0 1
      %592 = vperm.xlu0 %591, %v572
      %v593 = vpop.permute.xlu0 %592
      %v595 = vmul.f32 %v593, %v589
      %v596 = vpack.c.bf16 %v580, %v580
      %v598 = vunpack.c.l.b16 %v372
      %v599 = vpack.c.b16 %v598, %v598
      %600 = vrot.lane.b32.xlu0 %v599, 120
      %v601 = vpop.permute.xlu0 %600
      %v603 = vsel %vm380, %v596, 0
      %v606 = vsel %vm462, %v601, 0
      %608 = vmatprep.subr.bf16.mxu0 0
      %609 = vmatpush1.bf16.msra.mxu0 0
      %610 = vmatprep.subr.bf16.mxu0 0
      %611 = vmatpush1.bf16.msra.mxu0 0
      %612 = vmatprep.subr.bf16.mxu0 0
      %613 = vmatpush1.bf16.msra.mxu0 0
      %614 = vmatprep.subr.bf16.mxu0 0
      %615 = vmatpush1.bf16.msra.mxu0 0
      %616 = vmatprep.subr.bf16.mxu0 0
      %617 = vmatpush1.bf16.msra.mxu0 0
      %618 = vmatprep.subr.bf16.mxu0 0
      %619 = vmatpush1.bf16.msra.mxu0 0
      %620 = vmatprep.subr.bf16.mxu0 0
      %621 = vmatpush1.bf16.msra.mxu0 0
      %622 = vmatprep.subr.bf16.mxu0 0
      %623 = vmatpush1.bf16.msra.mxu0 %v606
      %624 = vmatprep.subr.bf16.mxu0 0
      %625 = vmatpush2.bf16.msra.mxu0 0
      %626 = vmatprep.subr.bf16.mxu0 0
      %627 = vmatpush2.bf16.msra.mxu0 0
      %628 = vmatprep.subr.bf16.mxu0 0
      %629 = vmatpush2.bf16.msra.mxu0 0
      %630 = vmatprep.subr.bf16.mxu0 0
      %631 = vmatpush2.bf16.msra.mxu0 0
      %632 = vmatprep.subr.bf16.mxu0 0
      %633 = vmatpush2.bf16.msra.mxu0 0
      %634 = vmatprep.subr.bf16.mxu0 0
      %635 = vmatpush2.bf16.msra.mxu0 0
      %636 = vmatprep.subr.bf16.mxu0 0
      %637 = vmatpush2.bf16.msra.mxu0 0
      %638 = vmatprep.subr.bf16.mxu0 0
      %639 = vmatpush2.bf16.msra.mxu0 0
      %640 = vmatprep.mubr.bf16.mxu0 0
      %641 = vmatmul.mubr.bf16.gmra.mxu0 %v603
      %v642 = vpop.f32.mrf.mxu0
      %v643 = vadd.f32 0.0, %v642
      %v644 = vpop.f32.mrf.mxu0
      %v645 = vpop.f32.mrf.mxu0
      %v646 = vpop.f32.mrf.mxu0
      %647 = vdwg.mxu0
      %649 = vrot.lane.b32.xlu0 %v643, 8
      %v650 = vpop.permute.xlu0 %649
      %v652 = vadd.f32 %v595, %v650
      %vm653 = vcmask 130112
      %654 = vst.msk [vmem:[#allocation4] sm:$0xff] %vm653, %v652
      %655 = vst.msk [vmem:[#allocation2] sm:$0xff] %vm587, %v569
      %656 = vrot.lane.b32.xlu0 %v511, 112
      %v657 = vpop.permute.xlu0 %656
      %658 = vrot.lane.b32.xlu0 %v516, 112
      %v659 = vpop.permute.xlu0 %658
      %v661 = vsel %vm380, %v657, 0
      %v664 = vsel %vm380, %v659, 0
      %666 = vmatprep.subr.bf16.mxu0 0
      %667 = vmatpush1.bf16.xpose.msra.mxu0 0
      %668 = vmatprep.subr.bf16.mxu0 0
      %669 = vmatpush1.bf16.xpose.msra.mxu0 0
      %670 = vmatprep.subr.bf16.mxu0 0
      %671 = vmatpush1.bf16.xpose.msra.mxu0 0
      %672 = vmatprep.subr.bf16.mxu0 0
      %673 = vmatpush1.bf16.xpose.msra.mxu0 0
      %674 = vmatprep.subr.bf16.mxu0 0
      %675 = vmatpush1.bf16.xpose.msra.mxu0 0
      %676 = vmatprep.subr.bf16.mxu0 0
      %677 = vmatpush1.bf16.xpose.msra.mxu0 0
      %678 = vmatprep.subr.bf16.mxu0 0
      %679 = vmatpush1.bf16.xpose.msra.mxu0 0
      %680 = vmatprep.subr.bf16.mxu0 0
      %681 = vmatpush1.bf16.xpose.msra.mxu0 %v664
      %682 = vmatprep.subr.bf16.mxu0 0
      %683 = vmatpush2.bf16.xpose.msra.mxu0 0
      %684 = vmatprep.subr.bf16.mxu0 0
      %685 = vmatpush2.bf16.xpose.msra.mxu0 0
      %686 = vmatprep.subr.bf16.mxu0 0
      %687 = vmatpush2.bf16.xpose.msra.mxu0 0
      %688 = vmatprep.subr.bf16.mxu0 0
      %689 = vmatpush2.bf16.xpose.msra.mxu0 0
      %690 = vmatprep.subr.bf16.mxu0 0
      %691 = vmatpush2.bf16.xpose.msra.mxu0 0
      %692 = vmatprep.subr.bf16.mxu0 0
      %693 = vmatpush2.bf16.xpose.msra.mxu0 0
      %694 = vmatprep.subr.bf16.mxu0 0
      %695 = vmatpush2.bf16.xpose.msra.mxu0 0
      %696 = vmatprep.subr.bf16.mxu0 0
      %697 = vmatpush2.bf16.xpose.msra.mxu0 0
      %698 = vmatprep.mubr.bf16.mxu0 0
      %699 = vmatmul.mubr.bf16.gmra.mxu0 %v661
      %v700 = vpop.f32.mrf.mxu0
      %v701 = vadd.f32 %v378, %v700
      %v702 = vpop.f32.mrf.mxu0
      %v703 = vpop.f32.mrf.mxu0
      %v704 = vpop.f32.mrf.mxu0
      %705 = vdwg.mxu0
      %v706 = vld [vmem:[#allocation2] sm:$0xff]
      %v707 = vsel %vm380, %v701, -inf
      %708 = vmax.xlane.f32.xlu0 %v707
      %v709 = vpop.xlane.xlu0 %708
      %v710 = vmax.f32 %v706, %v709
      %v711 = vsub.f32 %v706, %v710
      %v712 = vmul.f32 %v711, 1.442695
      %v713 = vpow.pop %v712
      %715 = vset.pattern.permute.xlu0 2
      %716 = vperm.xlu0 %715, %v710
      %v717 = vpop.permute.xlu0 %716
      %v719 = vsub.f32 %v701, %v717
      %v720 = vmul.f32 %v719, 1.442695
      %v721 = vpow.pop %v720
      %v722 = vld [vmem:[#allocation3] sm:$0xff]
      %v723 = vmul.f32 %v713, %v722
      %v724 = vsel %vm380, %v721, 0.0
      %725 = vadd.xlane.f32.xlu0 %v724
      %v726 = vpop.xlane.xlu0 %725
      %v727 = vadd.f32 %v723, %v726
      %vm728 = vcmask 23568
      %729 = vst.msk [vmem:[#allocation3] sm:$0xff] %vm728, %v727
      %v730 = vld [vmem:[#allocation4] sm:$0xff]
      %732 = vset.pattern.permute.xlu0 2
      %733 = vperm.xlu0 %732, %v713
      %v734 = vpop.permute.xlu0 %733
      %v736 = vmul.f32 %v734, %v730
      %v737 = vpack.c.bf16 %v721, %v721
      %738 = vrot.lane.b32.xlu0 %v599, 112
      %v739 = vpop.permute.xlu0 %738
      %v741 = vsel %vm380, %v737, 0
      %v744 = vsel %vm462, %v739, 0
      %746 = vmatprep.subr.bf16.mxu0 0
      %747 = vmatpush1.bf16.msra.mxu0 0
      %748 = vmatprep.subr.bf16.mxu0 0
      %749 = vmatpush1.bf16.msra.mxu0 0
      %750 = vmatprep.subr.bf16.mxu0 0
      %751 = vmatpush1.bf16.msra.mxu0 0
      %752 = vmatprep.subr.bf16.mxu0 0
      %753 = vmatpush1.bf16.msra.mxu0 0
      %754 = vmatprep.subr.bf16.mxu0 0
      %755 = vmatpush1.bf16.msra.mxu0 0
      %756 = vmatprep.subr.bf16.mxu0 0
      %757 = vmatpush1.bf16.msra.mxu0 0
      %758 = vmatprep.subr.bf16.mxu0 0
      %759 = vmatpush1.bf16.msra.mxu0 0
      %760 = vmatprep.subr.bf16.mxu0 0
      %761 = vmatpush1.bf16.msra.mxu0 %v744
      %762 = vmatprep.subr.bf16.mxu0 0
      %763 = vmatpush2.bf16.msra.mxu0 0
      %764 = vmatprep.subr.bf16.mxu0 0
      %765 = vmatpush2.bf16.msra.mxu0 0
      %766 = vmatprep.subr.bf16.mxu0 0
      %767 = vmatpush2.bf16.msra.mxu0 0
      %768 = vmatprep.subr.bf16.mxu0 0
      %769 = vmatpush2.bf16.msra.mxu0 0
      %770 = vmatprep.subr.bf16.mxu0 0
      %771 = vmatpush2.bf16.msra.mxu0 0
      %772 = vmatprep.subr.bf16.mxu0 0
      %773 = vmatpush2.bf16.msra.mxu0 0
      %774 = vmatprep.subr.bf16.mxu0 0
      %775 = vmatpush2.bf16.msra.mxu0 0
      %776 = vmatprep.subr.bf16.mxu0 0
      %777 = vmatpush2.bf16.msra.mxu0 0
      %778 = vmatprep.mubr.bf16.mxu0 0
      %779 = vmatmul.mubr.bf16.gmra.mxu0 %v741
      %v780 = vpop.f32.mrf.mxu0
      %v781 = vadd.f32 0.0, %v780
      %v782 = vpop.f32.mrf.mxu0
      %v783 = vpop.f32.mrf.mxu0
      %v784 = vpop.f32.mrf.mxu0
      %785 = vdwg.mxu0
      %787 = vrot.lane.b32.xlu0 %v781, 16
      %v788 = vpop.permute.xlu0 %787
      %v790 = vadd.f32 %v736, %v788
      %vm791 = vcmask 195712
      %792 = vst.msk [vmem:[#allocation4] sm:$0xff] %vm791, %v790
      %793 = vst.msk [vmem:[#allocation2] sm:$0xff] %vm728, %v710
      %794 = vrot.lane.b32.xlu0 %v511, 104
      %v795 = vpop.permute.xlu0 %794
      %796 = vrot.lane.b32.xlu0 %v516, 104
      %v797 = vpop.permute.xlu0 %796
      %v799 = vsel %vm380, %v795, 0
      %v802 = vsel %vm380, %v797, 0
      %804 = vmatprep.subr.bf16.mxu0 0
      %805 = vmatpush1.bf16.xpose.msra.mxu0 0
      %806 = vmatprep.subr.bf16.mxu0 0
      %807 = vmatpush1.bf16.xpose.msra.mxu0 0
      %808 = vmatprep.subr.bf16.mxu0 0
      %809 = vmatpush1.bf16.xpose.msra.mxu0 0
      %810 = vmatprep.subr.bf16.mxu0 0
      %811 = vmatpush1.bf16.xpose.msra.mxu0 0
      %812 = vmatprep.subr.bf16.mxu0 0
      %813 = vmatpush1.bf16.xpose.msra.mxu0 0
      %814 = vmatprep.subr.bf16.mxu0 0
      %815 = vmatpush1.bf16.xpose.msra.mxu0 0
      %816 = vmatprep.subr.bf16.mxu0 0
      %817 = vmatpush1.bf16.xpose.msra.mxu0 0
      %818 = vmatprep.subr.bf16.mxu0 0
      %819 = vmatpush1.bf16.xpose.msra.mxu0 %v802
      %820 = vmatprep.subr.bf16.mxu0 0
      %821 = vmatpush2.bf16.xpose.msra.mxu0 0
      %822 = vmatprep.subr.bf16.mxu0 0
      %823 = vmatpush2.bf16.xpose.msra.mxu0 0
      %824 = vmatprep.subr.bf16.mxu0 0
      %825 = vmatpush2.bf16.xpose.msra.mxu0 0
      %826 = vmatprep.subr.bf16.mxu0 0
      %827 = vmatpush2.bf16.xpose.msra.mxu0 0
      %828 = vmatprep.subr.bf16.mxu0 0
      %829 = vmatpush2.bf16.xpose.msra.mxu0 0
      %830 = vmatprep.subr.bf16.mxu0 0
      %831 = vmatpush2.bf16.xpose.msra.mxu0 0
      %832 = vmatprep.subr.bf16.mxu0 0
      %833 = vmatpush2.bf16.xpose.msra.mxu0 0
      %834 = vmatprep.subr.bf16.mxu0 0
      %835 = vmatpush2.bf16.xpose.msra.mxu0 0
      %836 = vmatprep.mubr.bf16.mxu0 0
      %837 = vmatmul.mubr.bf16.gmra.mxu0 %v799
      %v838 = vpop.f32.mrf.mxu0
      %v839 = vadd.f32 %v378, %v838
      %v840 = vpop.f32.mrf.mxu0
      %v841 = vpop.f32.mrf.mxu0
      %v842 = vpop.f32.mrf.mxu0
      %843 = vdwg.mxu0
      %v844 = vld [vmem:[#allocation2] sm:$0xff]
      %v845 = vsel %vm380, %v839, -inf
      %846 = vmax.xlane.f32.xlu0 %v845
      %v847 = vpop.xlane.xlu0 %846
      %v848 = vmax.f32 %v844, %v847
      %v849 = vsub.f32 %v844, %v848
      %v850 = vmul.f32 %v849, 1.442695
      %v851 = vpow.pop %v850
      %853 = vset.pattern.permute.xlu0 3
      %854 = vperm.xlu0 %853, %v848
      %v855 = vpop.permute.xlu0 %854
      %v857 = vsub.f32 %v839, %v855
      %v858 = vmul.f32 %v857, 1.442695
      %v859 = vpow.pop %v858
      %v860 = vld [vmem:[#allocation3] sm:$0xff]
      %v861 = vmul.f32 %v851, %v860
      %v862 = vsel %vm380, %v859, 0.0
      %863 = vadd.xlane.f32.xlu0 %v862
      %v864 = vpop.xlane.xlu0 %863
      %v865 = vadd.f32 %v861, %v864
      %vm866 = vcmask 31768
      %867 = vst.msk [vmem:[#allocation3] sm:$0xff] %vm866, %v865
      %v868 = vld [vmem:[#allocation4] sm:$0xff]
      %870 = vset.pattern.permute.xlu0 3
      %871 = vperm.xlu0 %870, %v851
      %v872 = vpop.permute.xlu0 %871
      %v874 = vmul.f32 %v872, %v868
      %v875 = vpack.c.bf16 %v859, %v859
      %876 = vrot.lane.b32.xlu0 %v599, 104
      %v877 = vpop.permute.xlu0 %876
      %v879 = vsel %vm380, %v875, 0
      %v882 = vsel %vm462, %v877, 0
      %884 = vmatprep.subr.bf16.mxu0 0
      %885 = vmatpush1.bf16.msra.mxu0 0
      %886 = vmatprep.subr.bf16.mxu0 0
      %887 = vmatpush1.bf16.msra.mxu0 0
      %888 = vmatprep.subr.bf16.mxu0 0
      %889 = vmatpush1.bf16.msra.mxu0 0
      %890 = vmatprep.subr.bf16.mxu0 0
      %891 = vmatpush1.bf16.msra.mxu0 0
      %892 = vmatprep.subr.bf16.mxu0 0
      %893 = vmatpush1.bf16.msra.mxu0 0
      %894 = vmatprep.subr.bf16.mxu0 0
      %895 = vmatpush1.bf16.msra.mxu0 0
      %896 = vmatprep.subr.bf16.mxu0 0
      %897 = vmatpush1.bf16.msra.mxu0 0
      %898 = vmatprep.subr.bf16.mxu0 0
      %899 = vmatpush1.bf16.msra.mxu0 %v882
      %900 = vmatprep.subr.bf16.mxu0 0
      %901 = vmatpush2.bf16.msra.mxu0 0
      %902 = vmatprep.subr.bf16.mxu0 0
      %903 = vmatpush2.bf16.msra.mxu0 0
      %904 = vmatprep.subr.bf16.mxu0 0
      %905 = vmatpush2.bf16.msra.mxu0 0
      %906 = vmatprep.subr.bf16.mxu0 0
      %907 = vmatpush2.bf16.msra.mxu0 0
      %908 = vmatprep.subr.bf16.mxu0 0
      %909 = vmatpush2.bf16.msra.mxu0 0
      %910 = vmatprep.subr.bf16.mxu0 0
      %911 = vmatpush2.bf16.msra.mxu0 0
      %912 = vmatprep.subr.bf16.mxu0 0
      %913 = vmatpush2.bf16.msra.mxu0 0
      %914 = vmatprep.subr.bf16.mxu0 0
      %915 = vmatpush2.bf16.msra.mxu0 0
      %916 = vmatprep.mubr.bf16.mxu0 0
      %917 = vmatmul.mubr.bf16.gmra.mxu0 %v879
      %v918 = vpop.f32.mrf.mxu0
      %v919 = vadd.f32 0.0, %v918
      %v920 = vpop.f32.mrf.mxu0
      %v921 = vpop.f32.mrf.mxu0
      %v922 = vpop.f32.mrf.mxu0
      %923 = vdwg.mxu0
      %925 = vrot.lane.b32.xlu0 %v919, 24
      %v926 = vpop.permute.xlu0 %925
      %v928 = vadd.f32 %v874, %v926
      %vm929 = vcmask 261312
      %930 = vst.msk [vmem:[#allocation4] sm:$0xff] %vm929, %v928
      %931 = vst.msk [vmem:[#allocation2] sm:$0xff] %vm866, %v848
      // Predicated region
      $region41: #{transformer_forward.36} parent=35 // pred_check
        %p932 = pneg %p361
      $region42: #{transformer_forward.36} parent=35 // pred_check_branch
        %934 = sbr.rel (%p932) target = $region44
      $region43: #{transformer_forward.36} parent=35 // pred_region
        %v935 = vld [vmem:[#allocation4] sm:$0xff]
        %v936 = vld [vmem:[#allocation3] sm:$0xff]
        %v937 = vrcp.pop %v936
        %939 = vset.pattern.permute.xlu0 0
        %940 = vperm.xlu0 %939, %v937
        %v941 = vpop.permute.xlu0 %940
        %v943 = vmul.f32 %v935, %v941
        %944 = vst.msk [vmem:[#allocation4] sm:$0xff] %vm380, %v943
        %v945 = vld [vmem:[#allocation4] sm:$0xff]
        %v946 = vld [vmem:[#allocation3] sm:$0xff]
        %v947 = vrcp.pop %v946
        %949 = vset.pattern.permute.xlu0 1
        %950 = vperm.xlu0 %949, %v947
        %v951 = vpop.permute.xlu0 %950
        %v953 = vmul.f32 %v945, %v951
        %954 = vst.msk [vmem:[#allocation4] sm:$0xff] %vm653, %v953
        %v955 = vld [vmem:[#allocation4] sm:$0xff]
        %v956 = vld [vmem:[#allocation3] sm:$0xff]
        %v957 = vrcp.pop %v956
        %959 = vset.pattern.permute.xlu0 2
        %960 = vperm.xlu0 %959, %v957
        %v961 = vpop.permute.xlu0 %960
        %v963 = vmul.f32 %v955, %v961
        %964 = vst.msk [vmem:[#allocation4] sm:$0xff] %vm791, %v963
        %v965 = vld [vmem:[#allocation4] sm:$0xff]
        %v966 = vld [vmem:[#allocation3] sm:$0xff]
        %v967 = vrcp.pop %v966
        %969 = vset.pattern.permute.xlu0 3
        %970 = vperm.xlu0 %969, %v967
        %v971 = vpop.permute.xlu0 %970
        %v973 = vmul.f32 %v965, %v971
        %974 = vst.msk [vmem:[#allocation4] sm:$0xff] %vm929, %v973
        %v975 = vld [vmem:[#allocation4] sm:$0xff]
        %v976 = vpack.c.bf16 %v975, %v975
        %vm977 = vcmask 257024
        %978 = vst.msk [vmem:[%s359] sm:$0xf] %vm977, %v976
      $region44: #{transformer_forward.36} parent=35 // pred_fallthru
        _
      %p979 = scmp.lt.s32.totalorder %s21, 1
      %s980 = scalar_select %p979, %s21, 1
      %p981 = scmp.lt.s32.totalorder %s23, 0
      %s982 = scalar_select %p981, %s23, 0
      %p983 = scmp.lt.s32.totalorder %s22, 0
      %s984 = scalar_select %p983, %s22, 0
      %s985 = sadd.s32 %s984, %s982
      %s986 = sadd.s32 %s985, %s980
      %s987 = smul.addr %s986, 4
      %s988 = scalar_lea.vmem %s4, %s987
      // Predicated region
      $region45: #{transformer_forward.36} parent=35 // pred_check
        %p989 = pneg %p181
      $region46: #{transformer_forward.36} parent=35 // pred_check_branch
        %991 = sbr.rel (%p989) target = $region48
      $region47: #{transformer_forward.36} parent=35 // pred_region
        _
      $region48: #{transformer_forward.36} parent=35 // pred_fallthru
        _
    $region36: #{transformer_forward.36} parent=5 // pred_fallthru
      _
    %p992 = scmp.le.s32.totalorder 2, %s10
    // Predicated region
    $region49: #{transformer_forward.36} parent=5 // pred_check
      %p993 = pneg %p992
    $region50: #{transformer_forward.36} parent=5 // pred_check_branch
      %995 = sbr.rel (%p993) target = $region52
    $region51: #{transformer_forward.36} parent=5 // pred_region
      %s996 = ssub.s32 %s10, 2
      // Predicated region
      $region53: #{transformer_forward.36} parent=51 // pred_check
        %p997 = pneg %p187
      $region54: #{transformer_forward.36} parent=51 // pred_check_branch
        %999 = sbr.rel (%p997) target = $region56
      $region55: #{transformer_forward.36} parent=51 // pred_region
        %p1000 = scmp.lt.s32.totalorder %s25, 1
        %s1001 = scalar_select %p1000, %s25, 1
        %p1002 = scmp.lt.s32.totalorder %s27, 0
        %s1003 = scalar_select %p1002, %s27, 0
        %p1004 = scmp.lt.s32.totalorder %s26, 0
        %s1005 = scalar_select %p1004, %s26, 0
        %s1006 = sadd.s32 %s1005, %s1003
        %s1007 = sadd.s32 %s1006, %s1001
        %s1008 = smul.addr %s1007, 4
        %s1009 = scalar_lea.vmem %s4, %s1008
      $region56: #{transformer_forward.36} parent=51 // pred_fallthru
        _
    $region52: #{transformer_forward.36} parent=5 // pred_fallthru
      _
  $region6: #{transformer_forward.36} parent=0 // loop_footer
    %s14 = sadd.s32 1, %s10
  $region7: #{transformer_forward.36} parent=0 // loop_footer_branch
    %9 = sbr.rel target = $region3
  $region8: #{transformer_forward.36} parent=0 // loop_exit
    _

// kernel: transformer_forward.39
$region0: #{transformer_forward.39}
  #allocation0 [shape = 'u32[]', space=smem, size = 0x4, offset = 0x4, fixed_abs, tag = 'smem constant byte address 0x4 - core index']
  #allocation1 [shape = 'u32[144,128]{1,0:T(1,128)}', space=vmem, size = 0x12000, scoped, tag = 'internal scratch']
  #allocation2 [shape = 'f32[16,32]{1,0:T(8,128)}', space=vmem, size = 0x2000, scoped, tag = 'scratch operand']
  %s0 = inlined_call_operand.vmem [shape: f32[16,32], index: 0, kind: input, shape index: {}]
  %s1 = inlined_call_operand.vmem [shape: bf16[32,128], index: 1, kind: input, shape index: {}]
  %s2 = inlined_call_operand.vmem [shape: f32[1,128], index: 2, kind: input, shape index: {}]
  %s3 = inlined_call_operand.vmem [shape: bf16[128,32], index: 3, kind: input, shape index: {}]
  %s4 = inlined_call_operand.vmem [shape: f32[1,32], index: 4, kind: input, shape index: {}]
  %s5 = inlined_call_operand.vmem [shape: bf16[16,32], index: 5, kind: output, shape index: {}]
  %s6 = sld [smem:[#allocation0]]
  $region38: #{transformer_forward.39} parent=0
    _
  %s8 = ssub.s32 1, %s6
  %s9 = scalar_select 0, %s8, %s6
  // Predicated region
  $region2: #{transformer_forward.39} parent=0 // pred_check
    _
  $region3: #{transformer_forward.39} parent=0 // pred_check_branch
    %11 = sbr.rel (0) target = $region5
  $region4: #{transformer_forward.39} parent=0 // pred_region
    _
  $region5: #{transformer_forward.39} parent=0 // pred_fallthru
    _
  // Predicated region
  $region6: #{transformer_forward.39} parent=0 // pred_check
    _
  $region7: #{transformer_forward.39} parent=0 // pred_check_branch
    %13 = sbr.rel (0) target = $region9
  $region8: #{transformer_forward.39} parent=0 // pred_region
    _
  $region9: #{transformer_forward.39} parent=0 // pred_fallthru
    _
  // Predicated region
  $region10: #{transformer_forward.39} parent=0 // pred_check
    _
  $region11: #{transformer_forward.39} parent=0 // pred_check_branch
    %15 = sbr.rel (0) target = $region13
  $region12: #{transformer_forward.39} parent=0 // pred_region
    _
  $region13: #{transformer_forward.39} parent=0 // pred_fallthru
    _
  // Predicated region
  $region14: #{transformer_forward.39} parent=0 // pred_check
    _
  $region15: #{transformer_forward.39} parent=0 // pred_check_branch
    %17 = sbr.rel (0) target = $region17
  $region16: #{transformer_forward.39} parent=0 // pred_region
    _
  $region17: #{transformer_forward.39} parent=0 // pred_fallthru
    _
  // Predicated region
  $region18: #{transformer_forward.39} parent=0 // pred_check
    _
  $region19: #{transformer_forward.39} parent=0 // pred_check_branch
    %19 = sbr.rel (0) target = $region21
  $region20: #{transformer_forward.39} parent=0 // pred_region
    _
  $region21: #{transformer_forward.39} parent=0 // pred_fallthru
    _
  %p21 = scmp.eq.s32.totalorder 0, 0
  // Predicated region
  $region22: #{transformer_forward.39} parent=0 // pred_check
    %p22 = pneg %p21
  $region23: #{transformer_forward.39} parent=0 // pred_check_branch
    %24 = sbr.rel (%p22) target = $region25
  $region24: #{transformer_forward.39} parent=0 // pred_region
    %vm25 = vcmask 261120
    %26 = vst.msk [vmem:[#allocation2] sm:$0xff] %vm25, 0.0
    %27 = vst.msk [vmem:[#allocation2 + $0x8] sm:$0xff] %vm25, 0.0
  $region25: #{transformer_forward.39} parent=0 // pred_fallthru
    _
  %v28 = vld [vmem:[%s0] sm:$0xff]
  %v29 = vld [vmem:[%s0 + $0x8] sm:$0xff]
  %v30 = vpack.c.bf16 %v29, %v28
  %v31 = vld [vmem:[%s1] sm:$0xf]
  %v32 = vld [vmem:[%s1 + $0x4] sm:$0xf]
  %v33 = vld [vmem:[%s1 + $0x8] sm:$0xf]
  %v34 = vld [vmem:[%s1 + $0xc] sm:$0xf]
  %v35 = vld [vmem:[%s2] sm:$0x1]
  %v37 = vlaneseq
  %v38 = vshrl.u32 %v37, 7
  %v39 = vsub.s32 0, %v38
  %v40 = vrot.slane %v35, %v39
  %v46 = vunpack.c.l.b16 %v31
  %v47 = vunpack.c.l.b16 %v32
  %v48 = vunpack.c.l.b16 %v33
  %v49 = vunpack.c.l.b16 %v34
  %v50 = vpack.c.b16 %v47, %v46
  %v51 = vpack.c.b16 %v49, %v48
  %vm54 = vcmask 261120
  %v56 = vsel %vm54, %v30, 0
  %58 = vmatprep.subr.bf16.mxu0 0
  %59 = vmatpush1.bf16.msra.mxu0 0
  %60 = vmatprep.subr.bf16.mxu0 0
  %61 = vmatpush1.bf16.msra.mxu0 0
  %62 = vmatprep.subr.bf16.mxu0 0
  %63 = vmatpush1.bf16.msra.mxu0 0
  %64 = vmatprep.subr.bf16.mxu0 0
  %65 = vmatpush1.bf16.msra.mxu0 0
  %66 = vmatprep.subr.bf16.mxu0 0
  %67 = vmatpush1.bf16.msra.mxu0 0
  %68 = vmatprep.subr.bf16.mxu0 0
  %69 = vmatpush1.bf16.msra.mxu0 0
  %70 = vmatprep.subr.bf16.mxu0 0
  %71 = vmatpush1.bf16.msra.mxu0 %v51
  %72 = vmatprep.subr.bf16.mxu0 0
  %73 = vmatpush1.bf16.msra.mxu0 %v50
  %74 = vmatprep.subr.bf16.mxu0 0
  %75 = vmatpush2.bf16.msra.mxu0 0
  %76 = vmatprep.subr.bf16.mxu0 0
  %77 = vmatpush2.bf16.msra.mxu0 0
  %78 = vmatprep.subr.bf16.mxu0 0
  %79 = vmatpush2.bf16.msra.mxu0 0
  %80 = vmatprep.subr.bf16.mxu0 0
  %81 = vmatpush2.bf16.msra.mxu0 0
  %82 = vmatprep.subr.bf16.mxu0 0
  %83 = vmatpush2.bf16.msra.mxu0 0
  %84 = vmatprep.subr.bf16.mxu0 0
  %85 = vmatpush2.bf16.msra.mxu0 0
  %86 = vmatprep.subr.bf16.mxu0 0
  %87 = vmatpush2.bf16.msra.mxu0 0
  %88 = vmatprep.subr.bf16.mxu0 0
  %89 = vmatpush2.bf16.msra.mxu0 0
  %90 = vmatprep.mubr.bf16.mxu0 0
  %91 = vmatmul.mubr.bf16.gmra.mxu0 %v56
  %v92 = vpop.f32.mrf.mxu0
  %v93 = vadd.f32 %v40, %v92
  %v94 = vpop.f32.mrf.mxu0
  %v95 = vpop.f32.mrf.mxu0
  %v96 = vadd.f32 %v40, %v95
  %v97 = vpop.f32.mrf.mxu0
  %98 = vdwg.mxu0
  %v99 = vmax.f32 %v93, 0.0
  %v100 = vmax.f32 %v96, 0.0
  %v101 = vpack.c.bf16 %v100, %v99
  %v102 = vld [vmem:[#allocation2] sm:$0xff]
  %v103 = vld [vmem:[#allocation2 + $0x8] sm:$0xff]
  %v104 = vld [vmem:[%s3] sm:$0xf]
  %v105 = vld [vmem:[%s3 + $0x4] sm:$0xf]
  %v106 = vld [vmem:[%s3 + $0x8] sm:$0xf]
  %v107 = vld [vmem:[%s3 + $0xc] sm:$0xf]
  %v108 = vld [vmem:[%s3 + $0x10] sm:$0xf]
  %v109 = vld [vmem:[%s3 + $0x14] sm:$0xf]
  %v110 = vld [vmem:[%s3 + $0x18] sm:$0xf]
  %v111 = vld [vmem:[%s3 + $0x1c] sm:$0xf]
  %v112 = vld [vmem:[%s3 + $0x20] sm:$0xf]
  %v113 = vld [vmem:[%s3 + $0x24] sm:$0xf]
  %v114 = vld [vmem:[%s3 + $0x28] sm:$0xf]
  %v115 = vld [vmem:[%s3 + $0x2c] sm:$0xf]
  %v116 = vld [vmem:[%s3 + $0x30] sm:$0xf]
  %v117 = vld [vmem:[%s3 + $0x34] sm:$0xf]
  %v118 = vld [vmem:[%s3 + $0x38] sm:$0xf]
  %v119 = vld [vmem:[%s3 + $0x3c] sm:$0xf]
  %v136 = vunpack.c.l.b16 %v104
  %v137 = vunpack.c.l.b16 %v105
  %v138 = vunpack.c.l.b16 %v106
  %v139 = vunpack.c.l.b16 %v107
  %v140 = vunpack.c.l.b16 %v108
  %v141 = vunpack.c.l.b16 %v109
  %v142 = vunpack.c.l.b16 %v110
  %v143 = vunpack.c.l.b16 %v111
  %v144 = vunpack.c.l.b16 %v112
  %v145 = vunpack.c.l.b16 %v113
  %v146 = vunpack.c.l.b16 %v114
  %v147 = vunpack.c.l.b16 %v115
  %v148 = vunpack.c.l.b16 %v116
  %v149 = vunpack.c.l.b16 %v117
  %v150 = vunpack.c.l.b16 %v118
  %v151 = vunpack.c.l.b16 %v119
  %v152 = vpack.c.b16 %v137, %v136
  %v153 = vpack.c.b16 %v139, %v138
  %v154 = vpack.c.b16 %v141, %v140
  %v155 = vpack.c.b16 %v143, %v142
  %v156 = vpack.c.b16 %v145, %v144
  %v157 = vpack.c.b16 %v147, %v146
  %v158 = vpack.c.b16 %v149, %v148
  %v159 = vpack.c.b16 %v151, %v150
  %168 = vmatprep.subr.bf16.mxu0 0
  %169 = vmatpush1.bf16.msra.mxu0 %v159
  %170 = vmatprep.subr.bf16.mxu0 0
  %171 = vmatpush1.bf16.msra.mxu0 %v158
  %172 = vmatprep.subr.bf16.mxu0 0
  %173 = vmatpush1.bf16.msra.mxu0 %v157
  %174 = vmatprep.subr.bf16.mxu0 0
  %175 = vmatpush1.bf16.msra.mxu0 %v156
  %176 = vmatprep.subr.bf16.mxu0 0
  %177 = vmatpush1.bf16.msra.mxu0 %v155
  %178 = vmatprep.subr.bf16.mxu0 0
  %179 = vmatpush1.bf16.msra.mxu0 %v154
  %180 = vmatprep.subr.bf16.mxu0 0
  %181 = vmatpush1.bf16.msra.mxu0 %v153
  %182 = vmatprep.subr.bf16.mxu0 0
  %183 = vmatpush1.bf16.msra.mxu0 %v152
  %184 = vmatprep.subr.bf16.mxu0 0
  %185 = vmatpush2.bf16.msra.mxu0 0
  %186 = vmatprep.subr.bf16.mxu0 0
  %187 = vmatpush2.bf16.msra.mxu0 0
  %188 = vmatprep.subr.bf16.mxu0 0
  %189 = vmatpush2.bf16.msra.mxu0 0
  %190 = vmatprep.subr.bf16.mxu0 0
  %191 = vmatpush2.bf16.msra.mxu0 0
  %192 = vmatprep.subr.bf16.mxu0 0
  %193 = vmatpush2.bf16.msra.mxu0 0
  %194 = vmatprep.subr.bf16.mxu0 0
  %195 = vmatpush2.bf16.msra.mxu0 0
  %196 = vmatprep.subr.bf16.mxu0 0
  %197 = vmatpush2.bf16.msra.mxu0 0
  %198 = vmatprep.subr.bf16.mxu0 0
  %199 = vmatpush2.bf16.msra.mxu0 0
  %200 = vmatprep.mubr.bf16.mxu0 0
  %201 = vmatmul.mubr.bf16.gmra.mxu0 %v101
  %v202 = vpop.f32.mrf.mxu0
  %v203 = vadd.f32 0.0, %v202
  %v204 = vpop.f32.mrf.mxu0
  %v205 = vpop.f32.mrf.mxu0
  %v206 = vadd.f32 0.0, %v205
  %v207 = vpop.f32.mrf.mxu0
  %208 = vdwg.mxu0
  %v209 = vadd.f32 %v102, %v203
  %v210 = vadd.f32 %v103, %v206
  %211 = vst.msk [vmem:[#allocation2] sm:$0xff] %vm54, %v209
  %212 = vst.msk [vmem:[#allocation2 + $0x8] sm:$0xff] %vm54, %v210
  // Predicated region
  $region26: #{transformer_forward.39} parent=0 // pred_check
    %p213 = pneg %p21
  $region27: #{transformer_forward.39} parent=0 // pred_check_branch
    %215 = sbr.rel (%p213) target = $region29
  $region28: #{transformer_forward.39} parent=0 // pred_region
    %v216 = vld [vmem:[#allocation2] sm:$0xff]
    %v217 = vld [vmem:[#allocation2 + $0x8] sm:$0xff]
    %v218 = vld [vmem:[%s4] sm:$0x1]
    %v220 = vlaneseq
    %v221 = vshrl.u32 %v220, 7
    %v222 = vsub.s32 0, %v221
    %v223 = vrot.slane %v218, %v222
    %v225 = vadd.f32 %v216, %v223
    %v226 = vadd.f32 %v217, %v223
    %v227 = vpack.c.bf16 %v226, %v225
    %v229 = vunpack.c.l.b16 %v227
    %v230 = vunpack.c.h.b16 %v227
    %v231 = vpack.c.b16 %v229, %v229
    %v232 = vpack.c.b16 %v230, %v230
    %vm235 = vcmask 257024
    %236 = vst.msk [vmem:[%s5] sm:$0xf] %vm235, %v231
    %237 = vst.msk [vmem:[%s5 + $0x4] sm:$0xf] %vm235, %v232
  $region29: #{transformer_forward.39} parent=0 // pred_fallthru
    _
  // Predicated region
  $region30: #{transformer_forward.39} parent=0 // pred_check
    _
  $region31: #{transformer_forward.39} parent=0 // pred_check_branch
    %239 = sbr.rel (0) target = $region33
  $region32: #{transformer_forward.39} parent=0 // pred_region
    _
  $region33: #{transformer_forward.39} parent=0 // pred_fallthru
    _
  // Predicated region
  $region34: #{transformer_forward.39} parent=0 // pred_check
    _
  $region35: #{transformer_forward.39} parent=0 // pred_check_branch
    %241 = sbr.rel (0) target = $region37
  $region36: #{transformer_forward.39} parent=0 // pred_region
    _
  $region37: #{transformer_forward.39} parent=0 // pred_fallthru
    _

// kernel: transformer_forward.52
$region0: #{transformer_forward.52}
  #allocation0 [shape = 'u32[]', space=smem, size = 0x4, offset = 0x4, fixed_abs, tag = 'smem constant byte address 0x4 - core index']
  #allocation1 [shape = 'u32[144,128]{1,0:T(1,128)}', space=vmem, size = 0x12000, scoped, tag = 'internal scratch']
  #allocation2 [shape = 'f32[16,64]{1,0:T(8,128)}', space=vmem, size = 0x2000, scoped, tag = 'scratch operand']
  %s0 = inlined_call_operand.vmem [shape: f32[16,32], index: 0, kind: input, shape index: {}]
  %s1 = inlined_call_operand.vmem [shape: bf16[32,64], index: 1, kind: input, shape index: {}]
  %s2 = inlined_call_operand.vmem [shape: f32[1,64], index: 2, kind: input, shape index: {}]
  %s3 = inlined_call_operand.vmem [shape: bf16[16,64], index: 3, kind: output, shape index: {}]
  %s4 = sld [smem:[#allocation0]]
  $region30: #{transformer_forward.52} parent=0
    _
  %s6 = ssub.s32 1, %s4
  %s7 = scalar_select 0, %s6, %s4
  // Predicated region
  $region2: #{transformer_forward.52} parent=0 // pred_check
    _
  $region3: #{transformer_forward.52} parent=0 // pred_check_branch
    %9 = sbr.rel (0) target = $region5
  $region4: #{transformer_forward.52} parent=0 // pred_region
    _
  $region5: #{transformer_forward.52} parent=0 // pred_fallthru
    _
  // Predicated region
  $region6: #{transformer_forward.52} parent=0 // pred_check
    _
  $region7: #{transformer_forward.52} parent=0 // pred_check_branch
    %11 = sbr.rel (0) target = $region9
  $region8: #{transformer_forward.52} parent=0 // pred_region
    _
  $region9: #{transformer_forward.52} parent=0 // pred_fallthru
    _
  // Predicated region
  $region10: #{transformer_forward.52} parent=0 // pred_check
    _
  $region11: #{transformer_forward.52} parent=0 // pred_check_branch
    %13 = sbr.rel (0) target = $region13
  $region12: #{transformer_forward.52} parent=0 // pred_region
    _
  $region13: #{transformer_forward.52} parent=0 // pred_fallthru
    _
  %p15 = scmp.eq.s32.totalorder 0, 0
  // Predicated region
  $region14: #{transformer_forward.52} parent=0 // pred_check
    %p16 = pneg %p15
  $region15: #{transformer_forward.52} parent=0 // pred_check_branch
    %18 = sbr.rel (%p16) target = $region17
  $region16: #{transformer_forward.52} parent=0 // pred_region
    %vm19 = vcmask 523264
    %20 = vst.msk [vmem:[#allocation2] sm:$0xff] %vm19, 0.0
    %21 = vst.msk [vmem:[#allocation2 + $0x8] sm:$0xff] %vm19, 0.0
  $region17: #{transformer_forward.52} parent=0 // pred_fallthru
    _
  %v22 = vld [vmem:[#allocation2] sm:$0xff]
  %v23 = vld [vmem:[#allocation2 + $0x8] sm:$0xff]
  %v24 = vld [vmem:[%s0] sm:$0xff]
  %v25 = vld [vmem:[%s0 + $0x8] sm:$0xff]
  %v26 = vpack.c.bf16 %v25, %v24
  %v27 = vld [vmem:[%s1] sm:$0xf]
  %v28 = vld [vmem:[%s1 + $0x4] sm:$0xf]
  %v29 = vld [vmem:[%s1 + $0x8] sm:$0xf]
  %v30 = vld [vmem:[%s1 + $0xc] sm:$0xf]
  %v35 = vunpack.c.l.b16 %v27
  %v36 = vunpack.c.l.b16 %v28
  %v37 = vunpack.c.l.b16 %v29
  %v38 = vunpack.c.l.b16 %v30
  %v39 = vpack.c.b16 %v36, %v35
  %v40 = vpack.c.b16 %v38, %v37
  %vm43 = vcmask 261120
  %v45 = vsel %vm43, %v26, 0
  %47 = vmatprep.subr.bf16.mxu0 0
  %48 = vmatpush1.bf16.msra.mxu0 0
  %49 = vmatprep.subr.bf16.mxu0 0
  %50 = vmatpush1.bf16.msra.mxu0 0
  %51 = vmatprep.subr.bf16.mxu0 0
  %52 = vmatpush1.bf16.msra.mxu0 0
  %53 = vmatprep.subr.bf16.mxu0 0
  %54 = vmatpush1.bf16.msra.mxu0 0
  %55 = vmatprep.subr.bf16.mxu0 0
  %56 = vmatpush1.bf16.msra.mxu0 0
  %57 = vmatprep.subr.bf16.mxu0 0
  %58 = vmatpush1.bf16.msra.mxu0 0
  %59 = vmatprep.subr.bf16.mxu0 0
  %60 = vmatpush1.bf16.msra.mxu0 %v40
  %61 = vmatprep.subr.bf16.mxu0 0
  %62 = vmatpush1.bf16.msra.mxu0 %v39
  %63 = vmatprep.subr.bf16.mxu0 0
  %64 = vmatpush2.bf16.msra.mxu0 0
  %65 = vmatprep.subr.bf16.mxu0 0
  %66 = vmatpush2.bf16.msra.mxu0 0
  %67 = vmatprep.subr.bf16.mxu0 0
  %68 = vmatpush2.bf16.msra.mxu0 0
  %69 = vmatprep.subr.bf16.mxu0 0
  %70 = vmatpush2.bf16.msra.mxu0 0
  %71 = vmatprep.subr.bf16.mxu0 0
  %72 = vmatpush2.bf16.msra.mxu0 0
  %73 = vmatprep.subr.bf16.mxu0 0
  %74 = vmatpush2.bf16.msra.mxu0 0
  %75 = vmatprep.subr.bf16.mxu0 0
  %76 = vmatpush2.bf16.msra.mxu0 0
  %77 = vmatprep.subr.bf16.mxu0 0
  %78 = vmatpush2.bf16.msra.mxu0 0
  %79 = vmatprep.mubr.bf16.mxu0 0
  %80 = vmatmul.mubr.bf16.gmra.mxu0 %v45
  %v81 = vpop.f32.mrf.mxu0
  %v82 = vadd.f32 0.0, %v81
  %v83 = vpop.f32.mrf.mxu0
  %v84 = vpop.f32.mrf.mxu0
  %v85 = vadd.f32 0.0, %v84
  %v86 = vpop.f32.mrf.mxu0
  %87 = vdwg.mxu0
  %v88 = vadd.f32 %v22, %v82
  %v89 = vadd.f32 %v23, %v85
  %vm90 = vcmask 523264
  %91 = vst.msk [vmem:[#allocation2] sm:$0xff] %vm90, %v88
  %92 = vst.msk [vmem:[#allocation2 + $0x8] sm:$0xff] %vm90, %v89
  // Predicated region
  $region18: #{transformer_forward.52} parent=0 // pred_check
    %p93 = pneg %p15
  $region19: #{transformer_forward.52} parent=0 // pred_check_branch
    %95 = sbr.rel (%p93) target = $region21
  $region20: #{transformer_forward.52} parent=0 // pred_region
    %v96 = vld [vmem:[#allocation2] sm:$0xff]
    %v97 = vld [vmem:[#allocation2 + $0x8] sm:$0xff]
    %v98 = vld [vmem:[%s2] sm:$0x1]
    %v100 = vlaneseq
    %v101 = vshrl.u32 %v100, 7
    %v102 = vsub.s32 0, %v101
    %v103 = vrot.slane %v98, %v102
    %v105 = vadd.f32 %v96, %v103
    %v106 = vadd.f32 %v97, %v103
    %v107 = vpack.c.bf16 %v106, %v105
    %v109 = vunpack.c.l.b16 %v107
    %v110 = vunpack.c.h.b16 %v107
    %v111 = vpack.c.b16 %v109, %v109
    %v112 = vpack.c.b16 %v110, %v110
    %vm115 = vcmask 519168
    %116 = vst.msk [vmem:[%s3] sm:$0xf] %vm115, %v111
    %117 = vst.msk [vmem:[%s3 + $0x4] sm:$0xf] %vm115, %v112
  $region21: #{transformer_forward.52} parent=0 // pred_fallthru
    _
  // Predicated region
  $region22: #{transformer_forward.52} parent=0 // pred_check
    _
  $region23: #{transformer_forward.52} parent=0 // pred_check_branch
    %119 = sbr.rel (0) target = $region25
  $region24: #{transformer_forward.52} parent=0 // pred_region
    _
  $region25: #{transformer_forward.52} parent=0 // pred_fallthru
    _
  // Predicated region
  $region26: #{transformer_forward.52} parent=0 // pred_check
    _
  $region27: #{transformer_forward.52} parent=0 // pred_check_branch
    %121 = sbr.rel (0) target = $region29
  $region28: #{transformer_forward.52} parent=0 // pred_region
    _
  $region29: #{transformer_forward.52} parent=0 // pred_fallthru
    _

// kernel: transformer_forward.51
$region0: #{transformer_forward.51}
  #allocation0 [shape = 'u32[]', space=smem, size = 0x4, offset = 0x4, fixed_abs, tag = 'smem constant byte address 0x4 - core index']
  #allocation1 [shape = 'u32[144,128]{1,0:T(1,128)}', space=vmem, size = 0x12000, scoped, tag = 'internal scratch']
  #allocation2 [shape = 'f32[16,32]{1,0:T(8,128)}', space=vmem, size = 0x2000, scoped, tag = 'scratch operand']
  %s0 = inlined_call_operand.vmem [shape: f32[16,32], index: 0, kind: input, shape index: {}]
  %s1 = inlined_call_operand.vmem [shape: bf16[32,32], index: 1, kind: input, shape index: {}]
  %s2 = inlined_call_operand.vmem [shape: f32[1,32], index: 2, kind: input, shape index: {}]
  %s3 = inlined_call_operand.vmem [shape: bf16[16,32], index: 3, kind: output, shape index: {}]
  %s4 = sld [smem:[#allocation0]]
  $region30: #{transformer_forward.51} parent=0
    _
  %s6 = ssub.s32 1, %s4
  %s7 = scalar_select 0, %s6, %s4
  // Predicated region
  $region2: #{transformer_forward.51} parent=0 // pred_check
    _
  $region3: #{transformer_forward.51} parent=0 // pred_check_branch
    %9 = sbr.rel (0) target = $region5
  $region4: #{transformer_forward.51} parent=0 // pred_region
    _
  $region5: #{transformer_forward.51} parent=0 // pred_fallthru
    _
  // Predicated region
  $region6: #{transformer_forward.51} parent=0 // pred_check
    _
  $region7: #{transformer_forward.51} parent=0 // pred_check_branch
    %11 = sbr.rel (0) target = $region9
  $region8: #{transformer_forward.51} parent=0 // pred_region
    _
  $region9: #{transformer_forward.51} parent=0 // pred_fallthru
    _
  // Predicated region
  $region10: #{transformer_forward.51} parent=0 // pred_check
    _
  $region11: #{transformer_forward.51} parent=0 // pred_check_branch
    %13 = sbr.rel (0) target = $region13
  $region12: #{transformer_forward.51} parent=0 // pred_region
    _
  $region13: #{transformer_forward.51} parent=0 // pred_fallthru
    _
  %p15 = scmp.eq.s32.totalorder 0, 0
  // Predicated region
  $region14: #{transformer_forward.51} parent=0 // pred_check
    %p16 = pneg %p15
  $region15: #{transformer_forward.51} parent=0 // pred_check_branch
    %18 = sbr.rel (%p16) target = $region17
  $region16: #{transformer_forward.51} parent=0 // pred_region
    %vm19 = vcmask 261120
    %20 = vst.msk [vmem:[#allocation2] sm:$0xff] %vm19, 0.0
    %21 = vst.msk [vmem:[#allocation2 + $0x8] sm:$0xff] %vm19, 0.0
  $region17: #{transformer_forward.51} parent=0 // pred_fallthru
    _
  %v22 = vld [vmem:[#allocation2] sm:$0xff]
  %v23 = vld [vmem:[#allocation2 + $0x8] sm:$0xff]
  %v24 = vld [vmem:[%s0] sm:$0xff]
  %v25 = vld [vmem:[%s0 + $0x8] sm:$0xff]
  %v26 = vpack.c.bf16 %v25, %v24
  %v27 = vld [vmem:[%s1] sm:$0xf]
  %v28 = vld [vmem:[%s1 + $0x4] sm:$0xf]
  %v29 = vld [vmem:[%s1 + $0x8] sm:$0xf]
  %v30 = vld [vmem:[%s1 + $0xc] sm:$0xf]
  %v35 = vunpack.c.l.b16 %v27
  %v36 = vunpack.c.l.b16 %v28
  %v37 = vunpack.c.l.b16 %v29
  %v38 = vunpack.c.l.b16 %v30
  %v39 = vpack.c.b16 %v36, %v35
  %v40 = vpack.c.b16 %v38, %v37
  %vm43 = vcmask 261120
  %v45 = vsel %vm43, %v26, 0
  %47 = vmatprep.subr.bf16.mxu0 0
  %48 = vmatpush1.bf16.msra.mxu0 0
  %49 = vmatprep.subr.bf16.mxu0 0
  %50 = vmatpush1.bf16.msra.mxu0 0
  %51 = vmatprep.subr.bf16.mxu0 0
  %52 = vmatpush1.bf16.msra.mxu0 0
  %53 = vmatprep.subr.bf16.mxu0 0
  %54 = vmatpush1.bf16.msra.mxu0 0
  %55 = vmatprep.subr.bf16.mxu0 0
  %56 = vmatpush1.bf16.msra.mxu0 0
  %57 = vmatprep.subr.bf16.mxu0 0
  %58 = vmatpush1.bf16.msra.mxu0 0
  %59 = vmatprep.subr.bf16.mxu0 0
  %60 = vmatpush1.bf16.msra.mxu0 %v40
  %61 = vmatprep.subr.bf16.mxu0 0
  %62 = vmatpush1.bf16.msra.mxu0 %v39
  %63 = vmatprep.subr.bf16.mxu0 0
  %64 = vmatpush2.bf16.msra.mxu0 0
  %65 = vmatprep.subr.bf16.mxu0 0
  %66 = vmatpush2.bf16.msra.mxu0 0
  %67 = vmatprep.subr.bf16.mxu0 0
  %68 = vmatpush2.bf16.msra.mxu0 0
  %69 = vmatprep.subr.bf16.mxu0 0
  %70 = vmatpush2.bf16.msra.mxu0 0
  %71 = vmatprep.subr.bf16.mxu0 0
  %72 = vmatpush2.bf16.msra.mxu0 0
  %73 = vmatprep.subr.bf16.mxu0 0
  %74 = vmatpush2.bf16.msra.mxu0 0
  %75 = vmatprep.subr.bf16.mxu0 0
  %76 = vmatpush2.bf16.msra.mxu0 0
  %77 = vmatprep.subr.bf16.mxu0 0
  %78 = vmatpush2.bf16.msra.mxu0 0
  %79 = vmatprep.mubr.bf16.mxu0 0
  %80 = vmatmul.mubr.bf16.gmra.mxu0 %v45
  %v81 = vpop.f32.mrf.mxu0
  %v82 = vadd.f32 0.0, %v81
  %v83 = vpop.f32.mrf.mxu0
  %v84 = vpop.f32.mrf.mxu0
  %v85 = vadd.f32 0.0, %v84
  %v86 = vpop.f32.mrf.mxu0
  %87 = vdwg.mxu0
  %v88 = vadd.f32 %v22, %v82
  %v89 = vadd.f32 %v23, %v85
  %90 = vst.msk [vmem:[#allocation2] sm:$0xff] %vm43, %v88
  %91 = vst.msk [vmem:[#allocation2 + $0x8] sm:$0xff] %vm43, %v89
  // Predicated region
  $region18: #{transformer_forward.51} parent=0 // pred_check
    %p92 = pneg %p15
  $region19: #{transformer_forward.51} parent=0 // pred_check_branch
    %94 = sbr.rel (%p92) target = $region21
  $region20: #{transformer_forward.51} parent=0 // pred_region
    %v95 = vld [vmem:[#allocation2] sm:$0xff]
    %v96 = vld [vmem:[#allocation2 + $0x8] sm:$0xff]
    %v97 = vld [vmem:[%s2] sm:$0x1]
    %v99 = vlaneseq
    %v100 = vshrl.u32 %v99, 7
    %v101 = vsub.s32 0, %v100
    %v102 = vrot.slane %v97, %v101
    %v104 = vadd.f32 %v95, %v102
    %v105 = vadd.f32 %v96, %v102
    %v106 = vpack.c.bf16 %v105, %v104
    %v108 = vunpack.c.l.b16 %v106
    %v109 = vunpack.c.h.b16 %v106
    %v110 = vpack.c.b16 %v108, %v108
    %v111 = vpack.c.b16 %v109, %v109
    %vm114 = vcmask 257024
    %115 = vst.msk [vmem:[%s3] sm:$0xf] %vm114, %v110
    %116 = vst.msk [vmem:[%s3 + $0x4] sm:$0xf] %vm114, %v111
  $region21: #{transformer_forward.51} parent=0 // pred_fallthru
    _
  // Predicated region
  $region22: #{transformer_forward.51} parent=0 // pred_check
    _
  $region23: #{transformer_forward.51} parent=0 // pred_check_branch
    %118 = sbr.rel (0) target = $region25
  $region24: #{transformer_forward.51} parent=0 // pred_region
    _
  $region25: #{transformer_forward.51} parent=0 // pred_fallthru
    _
  // Predicated region
  $region26: #{transformer_forward.51} parent=0 // pred_check
    _
  $region27: #{transformer_forward.51} parent=0 // pred_check_branch
    %120 = sbr.rel (0) target = $region29
  $region28: #{transformer_forward.51} parent=0 // pred_region
    _
  $region29: #{transformer_forward.51} parent=0 // pred_fallthru
    _

// kernel: transformer_forward.69
$region0: #{transformer_forward.69}
  #allocation0 [shape = 'u32[]', space=smem, size = 0x4, offset = 0x4, fixed_abs, tag = 'smem constant byte address 0x4 - core index']
  #allocation1 [shape = 'u32[144,128]{1,0:T(1,128)}', space=vmem, size = 0x12000, scoped, tag = 'internal scratch']
  #allocation2 [shape = 'f32[16,128]{1,0:T(8,128)}', space=vmem, size = 0x2000, scoped, tag = 'scratch operand']
  %s0 = inlined_call_operand.vmem [shape: f32[16,32], index: 0, kind: input, shape index: {}]
  %s1 = inlined_call_operand.vmem [shape: bf16[32,128], index: 1, kind: input, shape index: {}]
  %s2 = inlined_call_operand.vmem [shape: f32[1,128], index: 2, kind: input, shape index: {}]
  %s3 = inlined_call_operand.vmem [shape: f32[16,128], index: 3, kind: output, shape index: {}]
  %s4 = sld [smem:[#allocation0]]
  $region30: #{transformer_forward.69} parent=0
    _
  %s6 = ssub.s32 1, %s4
  %s7 = scalar_select 0, %s6, %s4
  // Predicated region
  $region2: #{transformer_forward.69} parent=0 // pred_check
    _
  $region3: #{transformer_forward.69} parent=0 // pred_check_branch
    %9 = sbr.rel (0) target = $region5
  $region4: #{transformer_forward.69} parent=0 // pred_region
    _
  $region5: #{transformer_forward.69} parent=0 // pred_fallthru
    _
  // Predicated region
  $region6: #{transformer_forward.69} parent=0 // pred_check
    _
  $region7: #{transformer_forward.69} parent=0 // pred_check_branch
    %11 = sbr.rel (0) target = $region9
  $region8: #{transformer_forward.69} parent=0 // pred_region
    _
  $region9: #{transformer_forward.69} parent=0 // pred_fallthru
    _
  // Predicated region
  $region10: #{transformer_forward.69} parent=0 // pred_check
    _
  $region11: #{transformer_forward.69} parent=0 // pred_check_branch
    %13 = sbr.rel (0) target = $region13
  $region12: #{transformer_forward.69} parent=0 // pred_region
    _
  $region13: #{transformer_forward.69} parent=0 // pred_fallthru
    _
  %p15 = scmp.eq.s32.totalorder 0, 0
  // Predicated region
  $region14: #{transformer_forward.69} parent=0 // pred_check
    %p16 = pneg %p15
  $region15: #{transformer_forward.69} parent=0 // pred_check_branch
    %18 = sbr.rel (%p16) target = $region17
  $region16: #{transformer_forward.69} parent=0 // pred_region
    %19 = vst [vmem:[#allocation2] sm:$0xff] 0.0
    %20 = vst [vmem:[#allocation2 + $0x8] sm:$0xff] 0.0
  $region17: #{transformer_forward.69} parent=0 // pred_fallthru
    _
  %v21 = vld [vmem:[#allocation2] sm:$0xff]
  %v22 = vld [vmem:[#allocation2 + $0x8] sm:$0xff]
  %v23 = vld [vmem:[%s0] sm:$0xff]
  %v24 = vld [vmem:[%s0 + $0x8] sm:$0xff]
  %v25 = vpack.c.bf16 %v24, %v23
  %v26 = vld [vmem:[%s1] sm:$0xf]
  %v27 = vld [vmem:[%s1 + $0x4] sm:$0xf]
  %v28 = vld [vmem:[%s1 + $0x8] sm:$0xf]
  %v29 = vld [vmem:[%s1 + $0xc] sm:$0xf]
  %v34 = vunpack.c.l.b16 %v26
  %v35 = vunpack.c.l.b16 %v27
  %v36 = vunpack.c.l.b16 %v28
  %v37 = vunpack.c.l.b16 %v29
  %v38 = vpack.c.b16 %v35, %v34
  %v39 = vpack.c.b16 %v37, %v36
  %vm42 = vcmask 261120
  %v44 = vsel %vm42, %v25, 0
  %46 = vmatprep.subr.bf16.mxu0 0
  %47 = vmatpush1.bf16.msra.mxu0 0
  %48 = vmatprep.subr.bf16.mxu0 0
  %49 = vmatpush1.bf16.msra.mxu0 0
  %50 = vmatprep.subr.bf16.mxu0 0
  %51 = vmatpush1.bf16.msra.mxu0 0
  %52 = vmatprep.subr.bf16.mxu0 0
  %53 = vmatpush1.bf16.msra.mxu0 0
  %54 = vmatprep.subr.bf16.mxu0 0
  %55 = vmatpush1.bf16.msra.mxu0 0
  %56 = vmatprep.subr.bf16.mxu0 0
  %57 = vmatpush1.bf16.msra.mxu0 0
  %58 = vmatprep.subr.bf16.mxu0 0
  %59 = vmatpush1.bf16.msra.mxu0 %v39
  %60 = vmatprep.subr.bf16.mxu0 0
  %61 = vmatpush1.bf16.msra.mxu0 %v38
  %62 = vmatprep.subr.bf16.mxu0 0
  %63 = vmatpush2.bf16.msra.mxu0 0
  %64 = vmatprep.subr.bf16.mxu0 0
  %65 = vmatpush2.bf16.msra.mxu0 0
  %66 = vmatprep.subr.bf16.mxu0 0
  %67 = vmatpush2.bf16.msra.mxu0 0
  %68 = vmatprep.subr.bf16.mxu0 0
  %69 = vmatpush2.bf16.msra.mxu0 0
  %70 = vmatprep.subr.bf16.mxu0 0
  %71 = vmatpush2.bf16.msra.mxu0 0
  %72 = vmatprep.subr.bf16.mxu0 0
  %73 = vmatpush2.bf16.msra.mxu0 0
  %74 = vmatprep.subr.bf16.mxu0 0
  %75 = vmatpush2.bf16.msra.mxu0 0
  %76 = vmatprep.subr.bf16.mxu0 0
  %77 = vmatpush2.bf16.msra.mxu0 0
  %78 = vmatprep.mubr.bf16.mxu0 0
  %79 = vmatmul.mubr.bf16.gmra.mxu0 %v44
  %v80 = vpop.f32.mrf.mxu0
  %v81 = vadd.f32 0.0, %v80
  %v82 = vpop.f32.mrf.mxu0
  %v83 = vpop.f32.mrf.mxu0
  %v84 = vadd.f32 0.0, %v83
  %v85 = vpop.f32.mrf.mxu0
  %86 = vdwg.mxu0
  %v87 = vadd.f32 %v21, %v81
  %v88 = vadd.f32 %v22, %v84
  %89 = vst [vmem:[#allocation2] sm:$0xff] %v87
  %90 = vst [vmem:[#allocation2 + $0x8] sm:$0xff] %v88
  // Predicated region
  $region18: #{transformer_forward.69} parent=0 // pred_check
    %p91 = pneg %p15
  $region19: #{transformer_forward.69} parent=0 // pred_check_branch
    %93 = sbr.rel (%p91) target = $region21
  $region20: #{transformer_forward.69} parent=0 // pred_region
    %v94 = vld [vmem:[#allocation2] sm:$0xff]
    %v95 = vld [vmem:[#allocation2 + $0x8] sm:$0xff]
    %v96 = vld [vmem:[%s2] sm:$0x1]
    %v98 = vlaneseq
    %v99 = vshrl.u32 %v98, 7
    %v100 = vsub.s32 0, %v99
    %v101 = vrot.slane %v96, %v100
    %v103 = vadd.f32 %v94, %v101
    %v104 = vadd.f32 %v95, %v101
    %105 = vst [vmem:[%s3] sm:$0xff] %v103
    %106 = vst [vmem:[%s3 + $0x8] sm:$0xff] %v104
  $region21: #{transformer_forward.69} parent=0 // pred_fallthru
    _
  // Predicated region
  $region22: #{transformer_forward.69} parent=0 // pred_check
    _
  $region23: #{transformer_forward.69} parent=0 // pred_check_branch
    %108 = sbr.rel (0) target = $region25
  $region24: #{transformer_forward.69} parent=0 // pred_region
    _
  $region25: #{transformer_forward.69} parent=0 // pred_fallthru
    _
  // Predicated region
  $region26: #{transformer_forward.69} parent=0 // pred_check
    _
  $region27: #{transformer_forward.69} parent=0 // pred_check_branch
    %110 = sbr.rel (0) target = $region29
  $region28: #{transformer_forward.69} parent=0 // pred_region
    _
  $region29: #{transformer_forward.69} parent=0 // pred_fallthru
    _

// kernel: transformer_forward.48
$region0: #{transformer_forward.48}
  #allocation0 [shape = 'u32[]', space=smem, size = 0x4, offset = 0x4, fixed_abs, tag = 'smem constant byte address 0x4 - core index']
  #allocation1 [shape = 'u32[144,128]{1,0:T(1,128)}', space=vmem, size = 0x12000, scoped, tag = 'internal scratch']
  #allocation2 [shape = 'f32[8,4]{1,0:T(8,128)}', space=vmem, size = 0x1000, scoped, tag = 'scratch operand']
  #allocation3 [shape = 'f32[8,4]{1,0:T(8,128)}', space=vmem, size = 0x1000, scoped, tag = 'scratch operand']
  #allocation4 [shape = 'f32[8,32]{1,0:T(8,128)}', space=vmem, size = 0x1000, scoped, tag = 'scratch operand']
  %s0 = inlined_call_operand.vmem [shape: f32[2,1,8], index: 0, kind: input, shape index: {}]
  %s1 = inlined_call_operand.vmem [shape: bf16[2,8,32], index: 1, kind: input, shape index: {}]
  %s2 = inlined_call_operand.vmem [shape: bf16[2,8,32], index: 2, kind: input, shape index: {}]
  %s3 = inlined_call_operand.vmem [shape: bf16[2,8,32], index: 3, kind: input, shape index: {}]
  %s4 = inlined_call_operand.vmem [shape: bf16[2,8,32], index: 4, kind: output, shape index: {}]
  %s5 = sld [smem:[#allocation0]]
  $region57: #{transformer_forward.48} parent=0
    _
  %s7 = ssub.s32 1, %s5
  %s8 = scalar_select 0, %s7, %s5
  loop: start=0, step=1, limit=4
  $region2: #{transformer_forward.48} parent=0 // loop_pre_header
    _
  $region3: #{transformer_forward.48} parent=0 // loop_header
    %s10 = sphi 0, %s14
    %p11 = scmp.ge.s32.totalorder %s10, 4
    %s17 = sphi 0, %s43
    %s18 = sphi 0, %s39
    %s19 = sphi 0, %s35
    %s20 = sphi 0, %s31
    %s21 = sphi 0, %s17
    %s22 = sphi 0, %s18
    %s23 = sphi 0, %s19
    %s24 = sphi 0, %s20
    %s25 = sphi 0, %s21
    %s26 = sphi 0, %s22
    %s27 = sphi 0, %s23
    %s28 = sphi 0, %s24
    %s48 = sphi 0, %s50
    %s51 = sphi 0, %s48
    %s52 = sphi 0, %s51
    %s68 = sphi 0, %s52
    %s78 = sphi 0, %s80
    %s81 = sphi 0, %s78
    %s82 = sphi 0, %s81
    %s98 = sphi 0, %s82
    %s108 = sphi 0, %s110
    %s111 = sphi 0, %s108
    %s112 = sphi 0, %s111
    %s128 = sphi 0, %s112
    %s138 = sphi 0, %s140
    %s141 = sphi 0, %s138
    %s142 = sphi 0, %s141
    %s158 = sphi 0, %s142
    %s168 = sphi 0, %s170
    %s171 = sphi 0, %s168
    %s172 = sphi 0, %s171
    %s188 = sphi 0, %s172
  $region4: #{transformer_forward.48} parent=0 // loop_header_branch
    %13 = sbr.rel (%p11) target = $region8
  $region5: #{transformer_forward.48} parent=0 // loop_body
    %s15 = ssub.s32 %s10, 1
    %s16 = ssub.s32 %s10, 2
    %s29 = sadd.s32 1, %s20
    %p30 = scmp.ge.s32.totalorder %s29, 1
    %s31 = scalar_select %p30, 0, %s29
    %s32 = sadd.s32 1, %s19
    %s33 = scalar_select %p30, %s32, %s19
    %p34 = scmp.ge.s32.totalorder %s33, 1
    %s35 = scalar_select %p34, 0, %s33
    %s36 = sadd.s32 1, %s18
    %s37 = scalar_select %p34, %s36, %s18
    %p38 = scmp.ge.s32.totalorder %s37, 1
    %s39 = scalar_select %p38, 0, %s37
    %s40 = sadd.s32 1, %s17
    %s41 = scalar_select %p38, %s40, %s17
    %p42 = scmp.ge.s32.totalorder %s41, 2
    %s43 = scalar_select %p42, 0, %s41
    %s44 = ssub.s32 %s17, %s43
    %s45 = ssub.s32 %s20, %s31
    %s46 = sor.u32 %s44, %s45
    %p47 = scmp.eq.s32.totalorder %s46, 0
    %s49 = sadd.s32 %s48, 1
    %s50 = scalar_select %p47, %s48, %s49
    %p53 = pneg %p47
    %p54 = scmp.eq.s32.totalorder %s10, 1
    %p55 = por %p53, %p54
    %p56 = scmp.ne.s32.totalorder %s48, %s51
    %p57 = scmp.eq.s32.totalorder %s10, 0
    %p58 = por %p56, %p57
    %p59 = scmp.ne.s32.totalorder %s48, %s51
    %p60 = scmp.eq.s32.totalorder %s15, 1
    %p61 = por %p59, %p60
    %p62 = scmp.ne.s32.totalorder %s51, %s52
    %p63 = scmp.eq.s32.totalorder %s15, 0
    %p64 = por %p62, %p63
    %p65 = scmp.ne.s32.totalorder %s51, %s52
    %p66 = scmp.eq.s32.totalorder %s16, 1
    %p67 = por %p65, %p66
    %p69 = scmp.ne.s32.totalorder %s52, %s68
    %p70 = scmp.eq.s32.totalorder %s16, 0
    %p71 = por %p69, %p70
    %s72 = ssub.s32 %s17, %s43
    %s73 = ssub.s32 %s19, %s35
    %s74 = sor.u32 %s72, %s73
    %s75 = ssub.s32 %s18, %s39
    %s76 = sor.u32 %s74, %s75
    %p77 = scmp.eq.s32.totalorder %s76, 0
    %s79 = sadd.s32 %s78, 1
    %s80 = scalar_select %p77, %s78, %s79
    %p83 = pneg %p77
    %p84 = scmp.eq.s32.totalorder %s10, 1
    %p85 = por %p83, %p84
    %p86 = scmp.ne.s32.totalorder %s78, %s81
    %p87 = scmp.eq.s32.totalorder %s10, 0
    %p88 = por %p86, %p87
    %p89 = scmp.ne.s32.totalorder %s78, %s81
    %p90 = scmp.eq.s32.totalorder %s15, 1
    %p91 = por %p89, %p90
    %p92 = scmp.ne.s32.totalorder %s81, %s82
    %p93 = scmp.eq.s32.totalorder %s15, 0
    %p94 = por %p92, %p93
    %p95 = scmp.ne.s32.totalorder %s81, %s82
    %p96 = scmp.eq.s32.totalorder %s16, 1
    %p97 = por %p95, %p96
    %p99 = scmp.ne.s32.totalorder %s82, %s98
    %p100 = scmp.eq.s32.totalorder %s16, 0
    %p101 = por %p99, %p100
    %s102 = ssub.s32 %s17, %s43
    %s103 = ssub.s32 %s20, %s31
    %s104 = sor.u32 %s102, %s103
    %s105 = ssub.s32 %s18, %s39
    %s106 = sor.u32 %s104, %s105
    %p107 = scmp.eq.s32.totalorder %s106, 0
    %s109 = sadd.s32 %s108, 1
    %s110 = scalar_select %p107, %s108, %s109
    %p113 = pneg %p107
    %p114 = scmp.eq.s32.totalorder %s10, 1
    %p115 = por %p113, %p114
    %p116 = scmp.ne.s32.totalorder %s108, %s111
    %p117 = scmp.eq.s32.totalorder %s10, 0
    %p118 = por %p116, %p117
    %p119 = scmp.ne.s32.totalorder %s108, %s111
    %p120 = scmp.eq.s32.totalorder %s15, 1
    %p121 = por %p119, %p120
    %p122 = scmp.ne.s32.totalorder %s111, %s112
    %p123 = scmp.eq.s32.totalorder %s15, 0
    %p124 = por %p122, %p123
    %p125 = scmp.ne.s32.totalorder %s111, %s112
    %p126 = scmp.eq.s32.totalorder %s16, 1
    %p127 = por %p125, %p126
    %p129 = scmp.ne.s32.totalorder %s112, %s128
    %p130 = scmp.eq.s32.totalorder %s16, 0
    %p131 = por %p129, %p130
    %s132 = ssub.s32 %s17, %s43
    %s133 = ssub.s32 %s20, %s31
    %s134 = sor.u32 %s132, %s133
    %s135 = ssub.s32 %s18, %s39
    %s136 = sor.u32 %s134, %s135
    %p137 = scmp.eq.s32.totalorder %s136, 0
    %s139 = sadd.s32 %s138, 1
    %s140 = scalar_select %p137, %s138, %s139
    %p143 = pneg %p137
    %p144 = scmp.eq.s32.totalorder %s10, 1
    %p145 = por %p143, %p144
    %p146 = scmp.ne.s32.totalorder %s138, %s141
    %p147 = scmp.eq.s32.totalorder %s10, 0
    %p148 = por %p146, %p147
    %p149 = scmp.ne.s32.totalorder %s138, %s141
    %p150 = scmp.eq.s32.totalorder %s15, 1
    %p151 = por %p149, %p150
    %p152 = scmp.ne.s32.totalorder %s141, %s142
    %p153 = scmp.eq.s32.totalorder %s15, 0
    %p154 = por %p152, %p153
    %p155 = scmp.ne.s32.totalorder %s141, %s142
    %p156 = scmp.eq.s32.totalorder %s16, 1
    %p157 = por %p155, %p156
    %p159 = scmp.ne.s32.totalorder %s142, %s158
    %p160 = scmp.eq.s32.totalorder %s16, 0
    %p161 = por %p159, %p160
    %s162 = ssub.s32 %s17, %s43
    %s163 = ssub.s32 %s19, %s35
    %s164 = sor.u32 %s162, %s163
    %s165 = ssub.s32 %s18, %s39
    %s166 = sor.u32 %s164, %s165
    %p167 = scmp.eq.s32.totalorder %s166, 0
    %s169 = sadd.s32 %s168, 1
    %s170 = scalar_select %p167, %s168, %s169
    %p173 = pneg %p167
    %p174 = scmp.eq.s32.totalorder %s10, 1
    %p175 = por %p173, %p174
    %p176 = scmp.ne.s32.totalorder %s168, %s171
    %p177 = scmp.eq.s32.totalorder %s10, 0
    %p178 = por %p176, %p177
    %p179 = scmp.ne.s32.totalorder %s168, %s171
    %p180 = scmp.eq.s32.totalorder %s15, 1
    %p181 = por %p179, %p180
    %p182 = scmp.ne.s32.totalorder %s171, %s172
    %p183 = scmp.eq.s32.totalorder %s15, 0
    %p184 = por %p182, %p183
    %p185 = scmp.ne.s32.totalorder %s171, %s172
    %p186 = scmp.eq.s32.totalorder %s16, 1
    %p187 = por %p185, %p186
    %p189 = scmp.ne.s32.totalorder %s172, %s188
    %p190 = scmp.eq.s32.totalorder %s16, 0
    %p191 = por %p189, %p190
    %p192 = scmp.le.s32.totalorder 1, %s10
    %p193 = scmp.lt.s32.totalorder %s10, 3
    %p194 = pnand %p192, %p193
    %p195 = pneg %p194
    // Predicated region
    $region9: #{transformer_forward.48} parent=5 // pred_check
      _
    $region10: #{transformer_forward.48} parent=5 // pred_check_branch
      %197 = sbr.rel (%p194) target = $region12
    $region11: #{transformer_forward.48} parent=5 // pred_region
      %s198 = ssub.s32 %s10, 1
    $region12: #{transformer_forward.48} parent=5 // pred_fallthru
      _
    %p199 = scmp.lt.s32.totalorder %s10, 2
    // Predicated region
    $region13: #{transformer_forward.48} parent=5 // pred_check
      %p200 = pneg %p199
    $region14: #{transformer_forward.48} parent=5 // pred_check_branch
      %202 = sbr.rel (%p200) target = $region16
    $region15: #{transformer_forward.48} parent=5 // pred_region
      // Predicated region
      $region17: #{transformer_forward.48} parent=15 // pred_check
        %p203 = pneg %p58
      $region18: #{transformer_forward.48} parent=15 // pred_check_branch
        %205 = sbr.rel (%p203) target = $region20
      $region19: #{transformer_forward.48} parent=15 // pred_region
        %p206 = scmp.lt.s32.totalorder %s17, 1
        %s207 = scalar_select %p206, %s17, 1
        %p208 = scmp.lt.s32.totalorder %s20, 0
        %s209 = scalar_select %p208, %s20, 0
        %s210 = sadd.s32 %s209, %s207
        %s211 = scalar_lea.vmem %s0, %s210
      $region20: #{transformer_forward.48} parent=15 // pred_fallthru
        _
      // Predicated region
      $region21: #{transformer_forward.48} parent=15 // pred_check
        %p212 = pneg %p88
      $region22: #{transformer_forward.48} parent=15 // pred_check_branch
        %214 = sbr.rel (%p212) target = $region24
      $region23: #{transformer_forward.48} parent=15 // pred_region
        %p215 = scmp.lt.s32.totalorder %s17, 1
        %s216 = scalar_select %p215, %s17, 1
        %p217 = scmp.lt.s32.totalorder %s19, 0
        %s218 = scalar_select %p217, %s19, 0
        %p219 = scmp.lt.s32.totalorder %s18, 0
        %s220 = scalar_select %p219, %s18, 0
        %s221 = sadd.s32 %s220, %s218
        %s222 = sadd.s32 %s221, %s216
        %s223 = smul.addr %s222, 4
        %s224 = scalar_lea.vmem %s1, %s223
      $region24: #{transformer_forward.48} parent=15 // pred_fallthru
        _
      // Predicated region
      $region25: #{transformer_forward.48} parent=15 // pred_check
        %p225 = pneg %p118
      $region26: #{transformer_forward.48} parent=15 // pred_check_branch
        %227 = sbr.rel (%p225) target = $region28
      $region27: #{transformer_forward.48} parent=15 // pred_region
        %p228 = scmp.lt.s32.totalorder %s17, 1
        %s229 = scalar_select %p228, %s17, 1
        %p230 = scmp.lt.s32.totalorder %s20, 0
        %s231 = scalar_select %p230, %s20, 0
        %p232 = scmp.lt.s32.totalorder %s18, 0
        %s233 = scalar_select %p232, %s18, 0
        %s234 = sadd.s32 %s233, %s231
        %s235 = sadd.s32 %s234, %s229
        %s236 = smul.addr %s235, 4
        %s237 = scalar_lea.vmem %s2, %s236
      $region28: #{transformer_forward.48} parent=15 // pred_fallthru
        _
      // Predicated region
      $region29: #{transformer_forward.48} parent=15 // pred_check
        %p238 = pneg %p148
      $region30: #{transformer_forward.48} parent=15 // pred_check_branch
        %240 = sbr.rel (%p238) target = $region32
      $region31: #{transformer_forward.48} parent=15 // pred_region
        %p241 = scmp.lt.s32.totalorder %s17, 1
        %s242 = scalar_select %p241, %s17, 1
        %p243 = scmp.lt.s32.totalorder %s20, 0
        %s244 = scalar_select %p243, %s20, 0
        %p245 = scmp.lt.s32.totalorder %s18, 0
        %s246 = scalar_select %p245, %s18, 0
        %s247 = sadd.s32 %s246, %s244
        %s248 = sadd.s32 %s247, %s242
        %s249 = smul.addr %s248, 4
        %s250 = scalar_lea.vmem %s3, %s249
      $region32: #{transformer_forward.48} parent=15 // pred_fallthru
        _
    $region16: #{transformer_forward.48} parent=5 // pred_fallthru
      _
    %p251 = scmp.le.s32.totalorder 1, %s10
    %p252 = scmp.lt.s32.totalorder %s10, 3
    %p253 = pnand %p251, %p252
    %p254 = pneg %p253
    // Predicated region
    $region33: #{transformer_forward.48} parent=5 // pred_check
      _
    $region34: #{transformer_forward.48} parent=5 // pred_check_branch
      %256 = sbr.rel (%p253) target = $region36
    $region35: #{transformer_forward.48} parent=5 // pred_region
      %s257 = ssub.s32 %s10, 1
      %p258 = scmp.lt.s32.totalorder %s21, 1
      %s259 = scalar_select %p258, %s21, 1
      %p260 = scmp.lt.s32.totalorder %s24, 0
      %s261 = scalar_select %p260, %s24, 0
      %s262 = sadd.s32 %s261, %s259
      %s263 = scalar_lea.vmem %s0, %s262
      %p264 = pneg %p64
      %p265 = pneg %p61
      %p266 = scmp.lt.s32.totalorder %s21, 1
      %s267 = scalar_select %p266, %s21, 1
      %p268 = scmp.lt.s32.totalorder %s23, 0
      %s269 = scalar_select %p268, %s23, 0
      %p270 = scmp.lt.s32.totalorder %s22, 0
      %s271 = scalar_select %p270, %s22, 0
      %s272 = sadd.s32 %s271, %s269
      %s273 = sadd.s32 %s272, %s267
      %s274 = smul.addr %s273, 4
      %s275 = scalar_lea.vmem %s1, %s274
      %p276 = pneg %p94
      %p277 = pneg %p91
      %p278 = scmp.lt.s32.totalorder %s21, 1
      %s279 = scalar_select %p278, %s21, 1
      %p280 = scmp.lt.s32.totalorder %s24, 0
      %s281 = scalar_select %p280, %s24, 0
      %p282 = scmp.lt.s32.totalorder %s22, 0
      %s283 = scalar_select %p282, %s22, 0
      %s284 = sadd.s32 %s283, %s281
      %s285 = sadd.s32 %s284, %s279
      %s286 = smul.addr %s285, 4
      %s287 = scalar_lea.vmem %s2, %s286
      %p288 = pneg %p124
      %p289 = pneg %p121
      %p290 = scmp.lt.s32.totalorder %s21, 1
      %s291 = scalar_select %p290, %s21, 1
      %p292 = scmp.lt.s32.totalorder %s24, 0
      %s293 = scalar_select %p292, %s24, 0
      %p294 = scmp.lt.s32.totalorder %s22, 0
      %s295 = scalar_select %p294, %s22, 0
      %s296 = sadd.s32 %s295, %s293
      %s297 = sadd.s32 %s296, %s291
      %s298 = smul.addr %s297, 4
      %s299 = scalar_lea.vmem %s3, %s298
      %p300 = pneg %p154
      %p301 = pneg %p151
      %p302 = pneg %p184
      %p303 = pneg %p181
      %p304 = scmp.lt.s32.totalorder %s21, 1
      %s305 = scalar_select %p304, %s21, 1
      %p306 = scmp.lt.s32.totalorder %s23, 0
      %s307 = scalar_select %p306, %s23, 0
      %p308 = scmp.lt.s32.totalorder %s22, 0
      %s309 = scalar_select %p308, %s22, 0
      %s310 = sadd.s32 %s309, %s307
      %s311 = sadd.s32 %s310, %s305
      %s312 = smul.addr %s311, 4
      %s313 = scalar_lea.vmem %s4, %s312
      %p314 = scmp.lt.s32.totalorder %s21, 1
      %s315 = scalar_select %p314, %s21, 1
      %p316 = scmp.lt.s32.totalorder %s24, 0
      %s317 = scalar_select %p316, %s24, 0
      %s318 = sadd.s32 %s317, %s315
      %s319 = scalar_lea.vmem %s0, %s318
      %p320 = scmp.lt.s32.totalorder %s21, 1
      %s321 = scalar_select %p320, %s21, 1
      %p322 = scmp.lt.s32.totalorder %s23, 0
      %s323 = scalar_select %p322, %s23, 0
      %p324 = scmp.lt.s32.totalorder %s22, 0
      %s325 = scalar_select %p324, %s22, 0
      %s326 = sadd.s32 %s325, %s323
      %s327 = sadd.s32 %s326, %s321
      %s328 = smul.addr %s327, 4
      %s329 = scalar_lea.vmem %s1, %s328
      %p330 = scmp.lt.s32.totalorder %s21, 1
      %s331 = scalar_select %p330, %s21, 1
      %p332 = scmp.lt.s32.totalorder %s24, 0
      %s333 = scalar_select %p332, %s24, 0
      %p334 = scmp.lt.s32.totalorder %s22, 0
      %s335 = scalar_select %p334, %s22, 0
      %s336 = sadd.s32 %s335, %s333
      %s337 = sadd.s32 %s336, %s331
      %s338 = smul.addr %s337, 4
      %s339 = scalar_lea.vmem %s2, %s338
      %p340 = scmp.lt.s32.totalorder %s21, 1
      %s341 = scalar_select %p340, %s21, 1
      %p342 = scmp.lt.s32.totalorder %s24, 0
      %s343 = scalar_select %p342, %s24, 0
      %p344 = scmp.lt.s32.totalorder %s22, 0
      %s345 = scalar_select %p344, %s22, 0
      %s346 = sadd.s32 %s345, %s343
      %s347 = sadd.s32 %s346, %s341
      %s348 = smul.addr %s347, 4
      %s349 = scalar_lea.vmem %s3, %s348
      %p350 = scmp.lt.s32.totalorder %s21, 1
      %s351 = scalar_select %p350, %s21, 1
      %p352 = scmp.lt.s32.totalorder %s23, 0
      %s353 = scalar_select %p352, %s23, 0
      %p354 = scmp.lt.s32.totalorder %s22, 0
      %s355 = scalar_select %p354, %s22, 0
      %s356 = sadd.s32 %s355, %s353
      %s357 = sadd.s32 %s356, %s351
      %s358 = smul.addr %s357, 4
      %s359 = scalar_lea.vmem %s4, %s358
      %p361 = scmp.eq.s32.totalorder %s24, 0
      // Predicated region
      $region37: #{transformer_forward.48} parent=35 // pred_check
        %p362 = pneg %p361
      $region38: #{transformer_forward.48} parent=35 // pred_check_branch
        %364 = sbr.rel (%p362) target = $region40
      $region39: #{transformer_forward.48} parent=35 // pred_region
        %vm365 = vcmask 31744
        %366 = vst.msk [vmem:[#allocation2] sm:$0xff] %vm365, -1e+30
        %367 = vst.msk [vmem:[#allocation3] sm:$0xff] %vm365, 0.0
        %vm368 = vcmask 261120
        %369 = vst.msk [vmem:[#allocation4] sm:$0xff] %vm368, 0.0
      $region40: #{transformer_forward.48} parent=35 // pred_fallthru
        _
      %v370 = vld [vmem:[%s329] sm:$0xf]
      %v371 = vld [vmem:[%s339] sm:$0xf]
      %v372 = vld [vmem:[%s349] sm:$0xf]
      %v373 = vld [vmem:[%s319] sm:$0x1]
      %v374 = vlaneseq
      %v375 = vshrl.u32 %v374, 7
      %s376 = smul.u32 %s23, 8
      %v377 = vstv %s376
      %v378 = vadd.s32 %v375, %v377
      %v379 = vlaneseq
      %v380 = vand.u32 %v379, 127
      %s381 = smul.u32 %s24, 8
      %v382 = vstv %s381
      %v383 = vadd.s32 %v380, %v382
      %vm384 = vcmp.le.s32.totalorder %v383, %v378
      %v386 = vlaneseq
      %v387 = vshrl.u32 %v386, 7
      %v388 = vsub.s32 0, %v387
      %v389 = vrot.slane %v373, %v388
      %vm391 = vcmask 64512
      %v393 = vsel %vm391, %v370, 0
      %v396 = vsel %vm391, %v371, 0
      %398 = vmatprep.subr.bf16.mxu0 0
      %399 = vmatpush1.bf16.xpose.msra.mxu0 0
      %400 = vmatprep.subr.bf16.mxu0 0
      %401 = vmatpush1.bf16.xpose.msra.mxu0 0
      %402 = vmatprep.subr.bf16.mxu0 0
      %403 = vmatpush1.bf16.xpose.msra.mxu0 0
      %404 = vmatprep.subr.bf16.mxu0 0
      %405 = vmatpush1.bf16.xpose.msra.mxu0 0
      %406 = vmatprep.subr.bf16.mxu0 0
      %407 = vmatpush1.bf16.xpose.msra.mxu0 0
      %408 = vmatprep.subr.bf16.mxu0 0
      %409 = vmatpush1.bf16.xpose.msra.mxu0 0
      %410 = vmatprep.subr.bf16.mxu0 0
      %411 = vmatpush1.bf16.xpose.msra.mxu0 0
      %412 = vmatprep.subr.bf16.mxu0 0
      %413 = vmatpush1.bf16.xpose.msra.mxu0 %v396
      %414 = vmatprep.subr.bf16.mxu0 0
      %415 = vmatpush2.bf16.xpose.msra.mxu0 0
      %416 = vmatprep.subr.bf16.mxu0 0
      %417 = vmatpush2.bf16.xpose.msra.mxu0 0
      %418 = vmatprep.subr.bf16.mxu0 0
      %419 = vmatpush2.bf16.xpose.msra.mxu0 0
      %420 = vmatprep.subr.bf16.mxu0 0
      %421 = vmatpush2.bf16.xpose.msra.mxu0 0
      %422 = vmatprep.subr.bf16.mxu0 0
      %423 = vmatpush2.bf16.xpose.msra.mxu0 0
      %424 = vmatprep.subr.bf16.mxu0 0
      %425 = vmatpush2.bf16.xpose.msra.mxu0 0
      %426 = vmatprep.subr.bf16.mxu0 0
      %427 = vmatpush2.bf16.xpose.msra.mxu0 0
      %428 = vmatprep.subr.bf16.mxu0 0
      %429 = vmatpush2.bf16.xpose.msra.mxu0 0
      %430 = vmatprep.mubr.bf16.mxu0 0
      %431 = vmatmul.mubr.bf16.gmra.mxu0 %v393
      %v432 = vpop.f32.mrf.mxu0
      %v433 = vadd.f32 %v389, %v432
      %v434 = vpop.f32.mrf.mxu0
      %v435 = vpop.f32.mrf.mxu0
      %v436 = vpop.f32.mrf.mxu0
      %437 = vdwg.mxu0
      %v438 = vsel %vm384, %v433, -1e+30
      %v439 = vld [vmem:[#allocation2] sm:$0xff]
      %v440 = vsel %vm391, %v438, -inf
      %441 = vmax.xlane.f32.xlu0 %v440
      %v442 = vpop.xlane.xlu0 %441
      %v443 = vmax.f32 %v439, %v442
      %v444 = vsub.f32 %v439, %v443
      %v445 = vmul.f32 %v444, 1.442695
      %v446 = vpow.pop %v445
      %448 = vset.pattern.permute.xlu0 0
      %449 = vperm.xlu0 %448, %v443
      %v450 = vpop.permute.xlu0 %449
      %v452 = vsub.f32 %v438, %v450
      %v453 = vmul.f32 %v452, 1.442695
      %v454 = vpow.pop %v453
      %v455 = vld [vmem:[#allocation3] sm:$0xff]
      %v456 = vmul.f32 %v446, %v455
      %v457 = vsel %vm391, %v454, 0.0
      %458 = vadd.xlane.f32.xlu0 %v457
      %v459 = vpop.xlane.xlu0 %458
      %v460 = vadd.f32 %v456, %v459
      %vm461 = vcmask 7168
      %462 = vst.msk [vmem:[#allocation3] sm:$0xff] %vm461, %v460
      %v463 = vld [vmem:[#allocation4] sm:$0xff]
      %465 = vset.pattern.permute.xlu0 0
      %466 = vperm.xlu0 %465, %v446
      %v467 = vpop.permute.xlu0 %466
      %v469 = vmul.f32 %v467, %v463
      %v470 = vpack.c.bf16 %v454, %v454
      %v472 = vsel %vm391, %v470, 0
      %vm474 = vcmask 1043456
      %v476 = vsel %vm474, %v372, 0
      %478 = vmatprep.subr.bf16.mxu0 0
      %479 = vmatpush1.bf16.msra.mxu0 0
      %480 = vmatprep.subr.bf16.mxu0 0
      %481 = vmatpush1.bf16.msra.mxu0 0
      %482 = vmatprep.subr.bf16.mxu0 0
      %483 = vmatpush1.bf16.msra.mxu0 0
      %484 = vmatprep.subr.bf16.mxu0 0
      %485 = vmatpush1.bf16.msra.mxu0 0
      %486 = vmatprep.subr.bf16.mxu0 0
      %487 = vmatpush1.bf16.msra.mxu0 0
      %488 = vmatprep.subr.bf16.mxu0 0
      %489 = vmatpush1.bf16.msra.mxu0 0
      %490 = vmatprep.subr.bf16.mxu0 0
      %491 = vmatpush1.bf16.msra.mxu0 0
      %492 = vmatprep.subr.bf16.mxu0 0
      %493 = vmatpush1.bf16.msra.mxu0 %v476
      %494 = vmatprep.subr.bf16.mxu0 0
      %495 = vmatpush2.bf16.msra.mxu0 0
      %496 = vmatprep.subr.bf16.mxu0 0
      %497 = vmatpush2.bf16.msra.mxu0 0
      %498 = vmatprep.subr.bf16.mxu0 0
      %499 = vmatpush2.bf16.msra.mxu0 0
      %500 = vmatprep.subr.bf16.mxu0 0
      %501 = vmatpush2.bf16.msra.mxu0 0
      %502 = vmatprep.subr.bf16.mxu0 0
      %503 = vmatpush2.bf16.msra.mxu0 0
      %504 = vmatprep.subr.bf16.mxu0 0
      %505 = vmatpush2.bf16.msra.mxu0 0
      %506 = vmatprep.subr.bf16.mxu0 0
      %507 = vmatpush2.bf16.msra.mxu0 0
      %508 = vmatprep.subr.bf16.mxu0 0
      %509 = vmatpush2.bf16.msra.mxu0 0
      %510 = vmatprep.mubr.bf16.mxu0 0
      %511 = vmatmul.mubr.bf16.gmra.mxu0 %v472
      %v512 = vpop.f32.mrf.mxu0
      %v513 = vadd.f32 0.0, %v512
      %v514 = vpop.f32.mrf.mxu0
      %v515 = vpop.f32.mrf.mxu0
      %v516 = vpop.f32.mrf.mxu0
      %517 = vdwg.mxu0
      %v518 = vadd.f32 %v469, %v513
      %519 = vst.msk [vmem:[#allocation4] sm:$0xff] %vm391, %v518
      %520 = vst.msk [vmem:[#allocation2] sm:$0xff] %vm461, %v443
      %v522 = vunpack.c.l.b16 %v370
      %v523 = vpack.c.b16 %v522, %v522
      %524 = vrot.lane.b32.xlu0 %v523, 120
      %v525 = vpop.permute.xlu0 %524
      %v527 = vunpack.c.l.b16 %v371
      %v528 = vpack.c.b16 %v527, %v527
      %529 = vrot.lane.b32.xlu0 %v528, 120
      %v530 = vpop.permute.xlu0 %529
      %v532 = vsel %vm391, %v525, 0
      %v535 = vsel %vm391, %v530, 0
      %537 = vmatprep.subr.bf16.mxu0 0
      %538 = vmatpush1.bf16.xpose.msra.mxu0 0
      %539 = vmatprep.subr.bf16.mxu0 0
      %540 = vmatpush1.bf16.xpose.msra.mxu0 0
      %541 = vmatprep.subr.bf16.mxu0 0
      %542 = vmatpush1.bf16.xpose.msra.mxu0 0
      %543 = vmatprep.subr.bf16.mxu0 0
      %544 = vmatpush1.bf16.xpose.msra.mxu0 0
      %545 = vmatprep.subr.bf16.mxu0 0
      %546 = vmatpush1.bf16.xpose.msra.mxu0 0
      %547 = vmatprep.subr.bf16.mxu0 0
      %548 = vmatpush1.bf16.xpose.msra.mxu0 0
      %549 = vmatprep.subr.bf16.mxu0 0
      %550 = vmatpush1.bf16.xpose.msra.mxu0 0
      %551 = vmatprep.subr.bf16.mxu0 0
      %552 = vmatpush1.bf16.xpose.msra.mxu0 %v535
      %553 = vmatprep.subr.bf16.mxu0 0
      %554 = vmatpush2.bf16.xpose.msra.mxu0 0
      %555 = vmatprep.subr.bf16.mxu0 0
      %556 = vmatpush2.bf16.xpose.msra.mxu0 0
      %557 = vmatprep.subr.bf16.mxu0 0
      %558 = vmatpush2.bf16.xpose.msra.mxu0 0
      %559 = vmatprep.subr.bf16.mxu0 0
      %560 = vmatpush2.bf16.xpose.msra.mxu0 0
      %561 = vmatprep.subr.bf16.mxu0 0
      %562 = vmatpush2.bf16.xpose.msra.mxu0 0
      %563 = vmatprep.subr.bf16.mxu0 0
      %564 = vmatpush2.bf16.xpose.msra.mxu0 0
      %565 = vmatprep.subr.bf16.mxu0 0
      %566 = vmatpush2.bf16.xpose.msra.mxu0 0
      %567 = vmatprep.subr.bf16.mxu0 0
      %568 = vmatpush2.bf16.xpose.msra.mxu0 0
      %569 = vmatprep.mubr.bf16.mxu0 0
      %570 = vmatmul.mubr.bf16.gmra.mxu0 %v532
      %v571 = vpop.f32.mrf.mxu0
      %v572 = vadd.f32 %v389, %v571
      %v573 = vpop.f32.mrf.mxu0
      %v574 = vpop.f32.mrf.mxu0
      %v575 = vpop.f32.mrf.mxu0
      %576 = vdwg.mxu0
      %v577 = vsel %vm384, %v572, -1e+30
      %v578 = vld [vmem:[#allocation2] sm:$0xff]
      %v579 = vsel %vm391, %v577, -inf
      %580 = vmax.xlane.f32.xlu0 %v579
      %v581 = vpop.xlane.xlu0 %580
      %v582 = vmax.f32 %v578, %v581
      %v583 = vsub.f32 %v578, %v582
      %v584 = vmul.f32 %v583, 1.442695
      %v585 = vpow.pop %v584
      %587 = vset.pattern.permute.xlu0 1
      %588 = vperm.xlu0 %587, %v582
      %v589 = vpop.permute.xlu0 %588
      %v591 = vsub.f32 %v577, %v589
      %v592 = vmul.f32 %v591, 1.442695
      %v593 = vpow.pop %v592
      %v594 = vld [vmem:[#allocation3] sm:$0xff]
      %v595 = vmul.f32 %v585, %v594
      %v596 = vsel %vm391, %v593, 0.0
      %597 = vadd.xlane.f32.xlu0 %v596
      %v598 = vpop.xlane.xlu0 %597
      %v599 = vadd.f32 %v595, %v598
      %vm600 = vcmask 15368
      %601 = vst.msk [vmem:[#allocation3] sm:$0xff] %vm600, %v599
      %v602 = vld [vmem:[#allocation4] sm:$0xff]
      %604 = vset.pattern.permute.xlu0 1
      %605 = vperm.xlu0 %604, %v585
      %v606 = vpop.permute.xlu0 %605
      %v608 = vmul.f32 %v606, %v602
      %v609 = vpack.c.bf16 %v593, %v593
      %v611 = vunpack.c.l.b16 %v372
      %v612 = vpack.c.b16 %v611, %v611
      %613 = vrot.lane.b32.xlu0 %v612, 120
      %v614 = vpop.permute.xlu0 %613
      %v616 = vsel %vm391, %v609, 0
      %v619 = vsel %vm474, %v614, 0
      %621 = vmatprep.subr.bf16.mxu0 0
      %622 = vmatpush1.bf16.msra.mxu0 0
      %623 = vmatprep.subr.bf16.mxu0 0
      %624 = vmatpush1.bf16.msra.mxu0 0
      %625 = vmatprep.subr.bf16.mxu0 0
      %626 = vmatpush1.bf16.msra.mxu0 0
      %627 = vmatprep.subr.bf16.mxu0 0
      %628 = vmatpush1.bf16.msra.mxu0 0
      %629 = vmatprep.subr.bf16.mxu0 0
      %630 = vmatpush1.bf16.msra.mxu0 0
      %631 = vmatprep.subr.bf16.mxu0 0
      %632 = vmatpush1.bf16.msra.mxu0 0
      %633 = vmatprep.subr.bf16.mxu0 0
      %634 = vmatpush1.bf16.msra.mxu0 0
      %635 = vmatprep.subr.bf16.mxu0 0
      %636 = vmatpush1.bf16.msra.mxu0 %v619
      %637 = vmatprep.subr.bf16.mxu0 0
      %638 = vmatpush2.bf16.msra.mxu0 0
      %639 = vmatprep.subr.bf16.mxu0 0
      %640 = vmatpush2.bf16.msra.mxu0 0
      %641 = vmatprep.subr.bf16.mxu0 0
      %642 = vmatpush2.bf16.msra.mxu0 0
      %643 = vmatprep.subr.bf16.mxu0 0
      %644 = vmatpush2.bf16.msra.mxu0 0
      %645 = vmatprep.subr.bf16.mxu0 0
      %646 = vmatpush2.bf16.msra.mxu0 0
      %647 = vmatprep.subr.bf16.mxu0 0
      %648 = vmatpush2.bf16.msra.mxu0 0
      %649 = vmatprep.subr.bf16.mxu0 0
      %650 = vmatpush2.bf16.msra.mxu0 0
      %651 = vmatprep.subr.bf16.mxu0 0
      %652 = vmatpush2.bf16.msra.mxu0 0
      %653 = vmatprep.mubr.bf16.mxu0 0
      %654 = vmatmul.mubr.bf16.gmra.mxu0 %v616
      %v655 = vpop.f32.mrf.mxu0
      %v656 = vadd.f32 0.0, %v655
      %v657 = vpop.f32.mrf.mxu0
      %v658 = vpop.f32.mrf.mxu0
      %v659 = vpop.f32.mrf.mxu0
      %660 = vdwg.mxu0
      %662 = vrot.lane.b32.xlu0 %v656, 8
      %v663 = vpop.permute.xlu0 %662
      %v665 = vadd.f32 %v608, %v663
      %vm666 = vcmask 130112
      %667 = vst.msk [vmem:[#allocation4] sm:$0xff] %vm666, %v665
      %668 = vst.msk [vmem:[#allocation2] sm:$0xff] %vm600, %v582
      %669 = vrot.lane.b32.xlu0 %v523, 112
      %v670 = vpop.permute.xlu0 %669
      %671 = vrot.lane.b32.xlu0 %v528, 112
      %v672 = vpop.permute.xlu0 %671
      %v674 = vsel %vm391, %v670, 0
      %v677 = vsel %vm391, %v672, 0
      %679 = vmatprep.subr.bf16.mxu0 0
      %680 = vmatpush1.bf16.xpose.msra.mxu0 0
      %681 = vmatprep.subr.bf16.mxu0 0
      %682 = vmatpush1.bf16.xpose.msra.mxu0 0
      %683 = vmatprep.subr.bf16.mxu0 0
      %684 = vmatpush1.bf16.xpose.msra.mxu0 0
      %685 = vmatprep.subr.bf16.mxu0 0
      %686 = vmatpush1.bf16.xpose.msra.mxu0 0
      %687 = vmatprep.subr.bf16.mxu0 0
      %688 = vmatpush1.bf16.xpose.msra.mxu0 0
      %689 = vmatprep.subr.bf16.mxu0 0
      %690 = vmatpush1.bf16.xpose.msra.mxu0 0
      %691 = vmatprep.subr.bf16.mxu0 0
      %692 = vmatpush1.bf16.xpose.msra.mxu0 0
      %693 = vmatprep.subr.bf16.mxu0 0
      %694 = vmatpush1.bf16.xpose.msra.mxu0 %v677
      %695 = vmatprep.subr.bf16.mxu0 0
      %696 = vmatpush2.bf16.xpose.msra.mxu0 0
      %697 = vmatprep.subr.bf16.mxu0 0
      %698 = vmatpush2.bf16.xpose.msra.mxu0 0
      %699 = vmatprep.subr.bf16.mxu0 0
      %700 = vmatpush2.bf16.xpose.msra.mxu0 0
      %701 = vmatprep.subr.bf16.mxu0 0
      %702 = vmatpush2.bf16.xpose.msra.mxu0 0
      %703 = vmatprep.subr.bf16.mxu0 0
      %704 = vmatpush2.bf16.xpose.msra.mxu0 0
      %705 = vmatprep.subr.bf16.mxu0 0
      %706 = vmatpush2.bf16.xpose.msra.mxu0 0
      %707 = vmatprep.subr.bf16.mxu0 0
      %708 = vmatpush2.bf16.xpose.msra.mxu0 0
      %709 = vmatprep.subr.bf16.mxu0 0
      %710 = vmatpush2.bf16.xpose.msra.mxu0 0
      %711 = vmatprep.mubr.bf16.mxu0 0
      %712 = vmatmul.mubr.bf16.gmra.mxu0 %v674
      %v713 = vpop.f32.mrf.mxu0
      %v714 = vadd.f32 %v389, %v713
      %v715 = vpop.f32.mrf.mxu0
      %v716 = vpop.f32.mrf.mxu0
      %v717 = vpop.f32.mrf.mxu0
      %718 = vdwg.mxu0
      %v719 = vsel %vm384, %v714, -1e+30
      %v720 = vld [vmem:[#allocation2] sm:$0xff]
      %v721 = vsel %vm391, %v719, -inf
      %722 = vmax.xlane.f32.xlu0 %v721
      %v723 = vpop.xlane.xlu0 %722
      %v724 = vmax.f32 %v720, %v723
      %v725 = vsub.f32 %v720, %v724
      %v726 = vmul.f32 %v725, 1.442695
      %v727 = vpow.pop %v726
      %729 = vset.pattern.permute.xlu0 2
      %730 = vperm.xlu0 %729, %v724
      %v731 = vpop.permute.xlu0 %730
      %v733 = vsub.f32 %v719, %v731
      %v734 = vmul.f32 %v733, 1.442695
      %v735 = vpow.pop %v734
      %v736 = vld [vmem:[#allocation3] sm:$0xff]
      %v737 = vmul.f32 %v727, %v736
      %v738 = vsel %vm391, %v735, 0.0
      %739 = vadd.xlane.f32.xlu0 %v738
      %v740 = vpop.xlane.xlu0 %739
      %v741 = vadd.f32 %v737, %v740
      %vm742 = vcmask 23568
      %743 = vst.msk [vmem:[#allocation3] sm:$0xff] %vm742, %v741
      %v744 = vld [vmem:[#allocation4] sm:$0xff]
      %746 = vset.pattern.permute.xlu0 2
      %747 = vperm.xlu0 %746, %v727
      %v748 = vpop.permute.xlu0 %747
      %v750 = vmul.f32 %v748, %v744
      %v751 = vpack.c.bf16 %v735, %v735
      %752 = vrot.lane.b32.xlu0 %v612, 112
      %v753 = vpop.permute.xlu0 %752
      %v755 = vsel %vm391, %v751, 0
      %v758 = vsel %vm474, %v753, 0
      %760 = vmatprep.subr.bf16.mxu0 0
      %761 = vmatpush1.bf16.msra.mxu0 0
      %762 = vmatprep.subr.bf16.mxu0 0
      %763 = vmatpush1.bf16.msra.mxu0 0
      %764 = vmatprep.subr.bf16.mxu0 0
      %765 = vmatpush1.bf16.msra.mxu0 0
      %766 = vmatprep.subr.bf16.mxu0 0
      %767 = vmatpush1.bf16.msra.mxu0 0
      %768 = vmatprep.subr.bf16.mxu0 0
      %769 = vmatpush1.bf16.msra.mxu0 0
      %770 = vmatprep.subr.bf16.mxu0 0
      %771 = vmatpush1.bf16.msra.mxu0 0
      %772 = vmatprep.subr.bf16.mxu0 0
      %773 = vmatpush1.bf16.msra.mxu0 0
      %774 = vmatprep.subr.bf16.mxu0 0
      %775 = vmatpush1.bf16.msra.mxu0 %v758
      %776 = vmatprep.subr.bf16.mxu0 0
      %777 = vmatpush2.bf16.msra.mxu0 0
      %778 = vmatprep.subr.bf16.mxu0 0
      %779 = vmatpush2.bf16.msra.mxu0 0
      %780 = vmatprep.subr.bf16.mxu0 0
      %781 = vmatpush2.bf16.msra.mxu0 0
      %782 = vmatprep.subr.bf16.mxu0 0
      %783 = vmatpush2.bf16.msra.mxu0 0
      %784 = vmatprep.subr.bf16.mxu0 0
      %785 = vmatpush2.bf16.msra.mxu0 0
      %786 = vmatprep.subr.bf16.mxu0 0
      %787 = vmatpush2.bf16.msra.mxu0 0
      %788 = vmatprep.subr.bf16.mxu0 0
      %789 = vmatpush2.bf16.msra.mxu0 0
      %790 = vmatprep.subr.bf16.mxu0 0
      %791 = vmatpush2.bf16.msra.mxu0 0
      %792 = vmatprep.mubr.bf16.mxu0 0
      %793 = vmatmul.mubr.bf16.gmra.mxu0 %v755
      %v794 = vpop.f32.mrf.mxu0
      %v795 = vadd.f32 0.0, %v794
      %v796 = vpop.f32.mrf.mxu0
      %v797 = vpop.f32.mrf.mxu0
      %v798 = vpop.f32.mrf.mxu0
      %799 = vdwg.mxu0
      %801 = vrot.lane.b32.xlu0 %v795, 16
      %v802 = vpop.permute.xlu0 %801
      %v804 = vadd.f32 %v750, %v802
      %vm805 = vcmask 195712
      %806 = vst.msk [vmem:[#allocation4] sm:$0xff] %vm805, %v804
      %807 = vst.msk [vmem:[#allocation2] sm:$0xff] %vm742, %v724
      %808 = vrot.lane.b32.xlu0 %v523, 104
      %v809 = vpop.permute.xlu0 %808
      %810 = vrot.lane.b32.xlu0 %v528, 104
      %v811 = vpop.permute.xlu0 %810
      %v813 = vsel %vm391, %v809, 0
      %v816 = vsel %vm391, %v811, 0
      %818 = vmatprep.subr.bf16.mxu0 0
      %819 = vmatpush1.bf16.xpose.msra.mxu0 0
      %820 = vmatprep.subr.bf16.mxu0 0
      %821 = vmatpush1.bf16.xpose.msra.mxu0 0
      %822 = vmatprep.subr.bf16.mxu0 0
      %823 = vmatpush1.bf16.xpose.msra.mxu0 0
      %824 = vmatprep.subr.bf16.mxu0 0
      %825 = vmatpush1.bf16.xpose.msra.mxu0 0
      %826 = vmatprep.subr.bf16.mxu0 0
      %827 = vmatpush1.bf16.xpose.msra.mxu0 0
      %828 = vmatprep.subr.bf16.mxu0 0
      %829 = vmatpush1.bf16.xpose.msra.mxu0 0
      %830 = vmatprep.subr.bf16.mxu0 0
      %831 = vmatpush1.bf16.xpose.msra.mxu0 0
      %832 = vmatprep.subr.bf16.mxu0 0
      %833 = vmatpush1.bf16.xpose.msra.mxu0 %v816
      %834 = vmatprep.subr.bf16.mxu0 0
      %835 = vmatpush2.bf16.xpose.msra.mxu0 0
      %836 = vmatprep.subr.bf16.mxu0 0
      %837 = vmatpush2.bf16.xpose.msra.mxu0 0
      %838 = vmatprep.subr.bf16.mxu0 0
      %839 = vmatpush2.bf16.xpose.msra.mxu0 0
      %840 = vmatprep.subr.bf16.mxu0 0
      %841 = vmatpush2.bf16.xpose.msra.mxu0 0
      %842 = vmatprep.subr.bf16.mxu0 0
      %843 = vmatpush2.bf16.xpose.msra.mxu0 0
      %844 = vmatprep.subr.bf16.mxu0 0
      %845 = vmatpush2.bf16.xpose.msra.mxu0 0
      %846 = vmatprep.subr.bf16.mxu0 0
      %847 = vmatpush2.bf16.xpose.msra.mxu0 0
      %848 = vmatprep.subr.bf16.mxu0 0
      %849 = vmatpush2.bf16.xpose.msra.mxu0 0
      %850 = vmatprep.mubr.bf16.mxu0 0
      %851 = vmatmul.mubr.bf16.gmra.mxu0 %v813
      %v852 = vpop.f32.mrf.mxu0
      %v853 = vadd.f32 %v389, %v852
      %v854 = vpop.f32.mrf.mxu0
      %v855 = vpop.f32.mrf.mxu0
      %v856 = vpop.f32.mrf.mxu0
      %857 = vdwg.mxu0
      %v858 = vsel %vm384, %v853, -1e+30
      %v859 = vld [vmem:[#allocation2] sm:$0xff]
      %v860 = vsel %vm391, %v858, -inf
      %861 = vmax.xlane.f32.xlu0 %v860
      %v862 = vpop.xlane.xlu0 %861
      %v863 = vmax.f32 %v859, %v862
      %v864 = vsub.f32 %v859, %v863
      %v865 = vmul.f32 %v864, 1.442695
      %v866 = vpow.pop %v865
      %868 = vset.pattern.permute.xlu0 3
      %869 = vperm.xlu0 %868, %v863
      %v870 = vpop.permute.xlu0 %869
      %v872 = vsub.f32 %v858, %v870
      %v873 = vmul.f32 %v872, 1.442695
      %v874 = vpow.pop %v873
      %v875 = vld [vmem:[#allocation3] sm:$0xff]
      %v876 = vmul.f32 %v866, %v875
      %v877 = vsel %vm391, %v874, 0.0
      %878 = vadd.xlane.f32.xlu0 %v877
      %v879 = vpop.xlane.xlu0 %878
      %v880 = vadd.f32 %v876, %v879
      %vm881 = vcmask 31768
      %882 = vst.msk [vmem:[#allocation3] sm:$0xff] %vm881, %v880
      %v883 = vld [vmem:[#allocation4] sm:$0xff]
      %885 = vset.pattern.permute.xlu0 3
      %886 = vperm.xlu0 %885, %v866
      %v887 = vpop.permute.xlu0 %886
      %v889 = vmul.f32 %v887, %v883
      %v890 = vpack.c.bf16 %v874, %v874
      %891 = vrot.lane.b32.xlu0 %v612, 104
      %v892 = vpop.permute.xlu0 %891
      %v894 = vsel %vm391, %v890, 0
      %v897 = vsel %vm474, %v892, 0
      %899 = vmatprep.subr.bf16.mxu0 0
      %900 = vmatpush1.bf16.msra.mxu0 0
      %901 = vmatprep.subr.bf16.mxu0 0
      %902 = vmatpush1.bf16.msra.mxu0 0
      %903 = vmatprep.subr.bf16.mxu0 0
      %904 = vmatpush1.bf16.msra.mxu0 0
      %905 = vmatprep.subr.bf16.mxu0 0
      %906 = vmatpush1.bf16.msra.mxu0 0
      %907 = vmatprep.subr.bf16.mxu0 0
      %908 = vmatpush1.bf16.msra.mxu0 0
      %909 = vmatprep.subr.bf16.mxu0 0
      %910 = vmatpush1.bf16.msra.mxu0 0
      %911 = vmatprep.subr.bf16.mxu0 0
      %912 = vmatpush1.bf16.msra.mxu0 0
      %913 = vmatprep.subr.bf16.mxu0 0
      %914 = vmatpush1.bf16.msra.mxu0 %v897
      %915 = vmatprep.subr.bf16.mxu0 0
      %916 = vmatpush2.bf16.msra.mxu0 0
      %917 = vmatprep.subr.bf16.mxu0 0
      %918 = vmatpush2.bf16.msra.mxu0 0
      %919 = vmatprep.subr.bf16.mxu0 0
      %920 = vmatpush2.bf16.msra.mxu0 0
      %921 = vmatprep.subr.bf16.mxu0 0
      %922 = vmatpush2.bf16.msra.mxu0 0
      %923 = vmatprep.subr.bf16.mxu0 0
      %924 = vmatpush2.bf16.msra.mxu0 0
      %925 = vmatprep.subr.bf16.mxu0 0
      %926 = vmatpush2.bf16.msra.mxu0 0
      %927 = vmatprep.subr.bf16.mxu0 0
      %928 = vmatpush2.bf16.msra.mxu0 0
      %929 = vmatprep.subr.bf16.mxu0 0
      %930 = vmatpush2.bf16.msra.mxu0 0
      %931 = vmatprep.mubr.bf16.mxu0 0
      %932 = vmatmul.mubr.bf16.gmra.mxu0 %v894
      %v933 = vpop.f32.mrf.mxu0
      %v934 = vadd.f32 0.0, %v933
      %v935 = vpop.f32.mrf.mxu0
      %v936 = vpop.f32.mrf.mxu0
      %v937 = vpop.f32.mrf.mxu0
      %938 = vdwg.mxu0
      %940 = vrot.lane.b32.xlu0 %v934, 24
      %v941 = vpop.permute.xlu0 %940
      %v943 = vadd.f32 %v889, %v941
      %vm944 = vcmask 261312
      %945 = vst.msk [vmem:[#allocation4] sm:$0xff] %vm944, %v943
      %946 = vst.msk [vmem:[#allocation2] sm:$0xff] %vm881, %v863
      // Predicated region
      $region41: #{transformer_forward.48} parent=35 // pred_check
        %p947 = pneg %p361
      $region42: #{transformer_forward.48} parent=35 // pred_check_branch
        %949 = sbr.rel (%p947) target = $region44
      $region43: #{transformer_forward.48} parent=35 // pred_region
        %v950 = vld [vmem:[#allocation4] sm:$0xff]
        %v951 = vld [vmem:[#allocation3] sm:$0xff]
        %v952 = vrcp.pop %v951
        %954 = vset.pattern.permute.xlu0 0
        %955 = vperm.xlu0 %954, %v952
        %v956 = vpop.permute.xlu0 %955
        %v958 = vmul.f32 %v950, %v956
        %959 = vst.msk [vmem:[#allocation4] sm:$0xff] %vm391, %v958
        %v960 = vld [vmem:[#allocation4] sm:$0xff]
        %v961 = vld [vmem:[#allocation3] sm:$0xff]
        %v962 = vrcp.pop %v961
        %964 = vset.pattern.permute.xlu0 1
        %965 = vperm.xlu0 %964, %v962
        %v966 = vpop.permute.xlu0 %965
        %v968 = vmul.f32 %v960, %v966
        %969 = vst.msk [vmem:[#allocation4] sm:$0xff] %vm666, %v968
        %v970 = vld [vmem:[#allocation4] sm:$0xff]
        %v971 = vld [vmem:[#allocation3] sm:$0xff]
        %v972 = vrcp.pop %v971
        %974 = vset.pattern.permute.xlu0 2
        %975 = vperm.xlu0 %974, %v972
        %v976 = vpop.permute.xlu0 %975
        %v978 = vmul.f32 %v970, %v976
        %979 = vst.msk [vmem:[#allocation4] sm:$0xff] %vm805, %v978
        %v980 = vld [vmem:[#allocation4] sm:$0xff]
        %v981 = vld [vmem:[#allocation3] sm:$0xff]
        %v982 = vrcp.pop %v981
        %984 = vset.pattern.permute.xlu0 3
        %985 = vperm.xlu0 %984, %v982
        %v986 = vpop.permute.xlu0 %985
        %v988 = vmul.f32 %v980, %v986
        %989 = vst.msk [vmem:[#allocation4] sm:$0xff] %vm944, %v988
        %v990 = vld [vmem:[#allocation4] sm:$0xff]
        %v991 = vpack.c.bf16 %v990, %v990
        %vm992 = vcmask 257024
        %993 = vst.msk [vmem:[%s359] sm:$0xf] %vm992, %v991
      $region44: #{transformer_forward.48} parent=35 // pred_fallthru
        _
      %p994 = scmp.lt.s32.totalorder %s21, 1
      %s995 = scalar_select %p994, %s21, 1
      %p996 = scmp.lt.s32.totalorder %s23, 0
      %s997 = scalar_select %p996, %s23, 0
      %p998 = scmp.lt.s32.totalorder %s22, 0
      %s999 = scalar_select %p998, %s22, 0
      %s1000 = sadd.s32 %s999, %s997
      %s1001 = sadd.s32 %s1000, %s995
      %s1002 = smul.addr %s1001, 4
      %s1003 = scalar_lea.vmem %s4, %s1002
      // Predicated region
      $region45: #{transformer_forward.48} parent=35 // pred_check
        %p1004 = pneg %p181
      $region46: #{transformer_forward.48} parent=35 // pred_check_branch
        %1006 = sbr.rel (%p1004) target = $region48
      $region47: #{transformer_forward.48} parent=35 // pred_region
        _
      $region48: #{transformer_forward.48} parent=35 // pred_fallthru
        _
    $region36: #{transformer_forward.48} parent=5 // pred_fallthru
      _
    %p1007 = scmp.le.s32.totalorder 2, %s10
    // Predicated region
    $region49: #{transformer_forward.48} parent=5 // pred_check
      %p1008 = pneg %p1007
    $region50: #{transformer_forward.48} parent=5 // pred_check_branch
      %1010 = sbr.rel (%p1008) target = $region52
    $region51: #{transformer_forward.48} parent=5 // pred_region
      %s1011 = ssub.s32 %s10, 2
      // Predicated region
      $region53: #{transformer_forward.48} parent=51 // pred_check
        %p1012 = pneg %p187
      $region54: #{transformer_forward.48} parent=51 // pred_check_branch
        %1014 = sbr.rel (%p1012) target = $region56
      $region55: #{transformer_forward.48} parent=51 // pred_region
        %p1015 = scmp.lt.s32.totalorder %s25, 1
        %s1016 = scalar_select %p1015, %s25, 1
        %p1017 = scmp.lt.s32.totalorder %s27, 0
        %s1018 = scalar_select %p1017, %s27, 0
        %p1019 = scmp.lt.s32.totalorder %s26, 0
        %s1020 = scalar_select %p1019, %s26, 0
        %s1021 = sadd.s32 %s1020, %s1018
        %s1022 = sadd.s32 %s1021, %s1016
        %s1023 = smul.addr %s1022, 4
        %s1024 = scalar_lea.vmem %s4, %s1023
      $region56: #{transformer_forward.48} parent=51 // pred_fallthru
        _
    $region52: #{transformer_forward.48} parent=5 // pred_fallthru
      _
  $region6: #{transformer_forward.48} parent=0 // loop_footer
    %s14 = sadd.s32 1, %s10
  $region7: #{transformer_forward.48} parent=0 // loop_footer_branch
    %9 = sbr.rel target = $region3
  $region8: #{transformer_forward.48} parent=0 // loop_exit
    _

</llo_original>
